<compile_context>
chip_gen: v6e
topology: v6e:2x2x1
jax: 0.10.0
libtpu: 0.0.40
codegen_flags: <defaults>
</compile_context>

<pallas_src>
import jax
import jax.numpy as jnp
from jax.experimental import pallas as pl
from jax.experimental.pallas import tpu as pltpu

IN_CH = 6          # Conv1d in_channels
WIN = 200          # window_length
FEAT = 12          # feature_channels
KSZ = 5            # conv kernel size
ZLEN = 100         # latent size
HID = 50 * FEAT    # 600 = flattened encoder features
POOL = 4           # MaxPool1d kernel/stride
NPOS = WIN // POOL # 50 pooled positions per channel


def vae2_kernel(xcol_ref, wconv_ref, bconv_ref, wenc_ref, benc_ref,
                wdec_ref, bdec_ref, eps_ref,
                recon_ref, mu_ref, sigma_ref):
    B = xcol_ref.shape[0]

    # Hoisted once; reused across the small static batch loop.
    wconv = wconv_ref[...]                 # (12, 30)
    bconv = bconv_ref[...]                 # (12, 1)
    benc = benc_ref[...]                   # (1, 200)  [bmu | bsigma]

    for b in range(B):                     # tiny static batch
        # --- Conv1d(6 -> 12, k=5, pad=2 replicate) as one im2col matmul ---
        # xcol lanes are phase-major: lane k*50 + l == conv output position 4l + k.
        conv = jnp.dot(wconv, xcol_ref[b],
                       preferred_element_type=jnp.float32) + bconv       # (12, 200)

        # --- MaxPool1d(4): max over the four contiguous 50-lane phase chunks ---
        pooled = jnp.maximum(
            jnp.maximum(conv[:, 0:NPOS], conv[:, NPOS:2 * NPOS]),
            jnp.maximum(conv[:, 2 * NPOS:3 * NPOS], conv[:, 3 * NPOS:4 * NPOS]),
        )                                                                  # (12, 50)

        # --- Fused hid2mu | hid2sigma with compact per-channel weights ---
        musig = benc                                                       # (1, 200)
        for c in range(FEAT):
            musig = musig + jnp.dot(pooled[c:c + 1, :], wenc_ref[c],
                                    preferred_element_type=jnp.float32)   # (1,50)@(50,200)
        mu_ref[pl.ds(b, 1), :] = musig[:, 0:ZLEN]
        sigma_ref[pl.ds(b, 1), :] = musig[:, ZLEN:2 * ZLEN]

    # --- Batched reparameterization + folded decoder (z2hid ∘ expand) ---
    mu = mu_ref[...]                                                       # (B, 100)
    sigma = sigma_ref[...]
    z = mu + sigma * eps_ref[...]                                          # (B, 100)
    recon_ref[...] = (jnp.dot(z, wdec_ref[...],
                              preferred_element_type=jnp.float32)
                      + bdec_ref[...])                                     # (B, 1200) slab


def init_params(key):
    """Deterministic PyTorch-default-style init (uniform +/- 1/sqrt(fan_in))."""
    ks = jax.random.split(key, 10)

    def u(k, shape, fan_in):
        bound = fan_in ** -0.5
        return jax.random.uniform(k, shape, jnp.float32, -bound, bound)

    return {
        "wconv": u(ks[0], (FEAT, IN_CH, KSZ), IN_CH * KSZ),
        "bconv": u(ks[1], (FEAT,), IN_CH * KSZ),
        "wmu":   u(ks[2], (ZLEN, HID), HID),
        "bmu":   u(ks[3], (ZLEN,), HID),
        "wsig":  u(ks[4], (ZLEN, HID), HID),
        "bsig":  u(ks[5], (ZLEN,), HID),
        "wz":    u(ks[6], (6 * ZLEN, ZLEN), ZLEN),
        "bz":    u(ks[7], (6 * ZLEN,), ZLEN),
        "wexp":  u(ks[8], (WIN, ZLEN), ZLEN),
        "bexp":  u(ks[9], (WIN,), ZLEN),
    }


def _prep_args(x, params, eps):
    """Host-side layout plumbing + weight folding (one-time, outside the kernel)."""
    B = x.shape[0]
    hi = jax.lax.Precision.HIGHEST  # only for one-time host-side weight folding

    # Replicate ("edge") padding for Conv1d(padding=2, padding_mode='replicate').
    xp = jnp.pad(x, ((0, 0), (0, 0), (2, 2)), mode="edge")            # (B, 6, 204)

    # Phase-major im2col: xcol[b, c*5+j, k*50+l] = xp[b, c, 4l + k + j].
    phase_chunks = []
    for k in range(POOL):
        taps = [xp[:, :, (k + j)::POOL][:, :, :NPOS] for j in range(KSZ)]  # (B,6,50) each
        phase_chunks.append(jnp.stack(taps, axis=2))                        # (B,6,5,50)
    xcol = jnp.stack(phase_chunks, axis=3)                                  # (B,6,5,4,50)
    xcol = xcol.reshape(B, IN_CH * KSZ, POOL * NPOS)                        # (B,30,200)

    wconv_flat = params["wconv"].reshape(FEAT, IN_CH * KSZ)                 # (12, 30)
    bconv = params["bconv"].reshape(FEAT, 1)                                # (12, 1)

    # Fused encoder head: [hid2mu | hid2sigma] as compact per-channel weights.
    wcat = jnp.concatenate([params["wmu"], params["wsig"]], axis=0)         # (200, 600)
    wenc = wcat.T.reshape(FEAT, NPOS, 2 * ZLEN)                             # (12, 50, 200)
    benc = jnp.concatenate([params["bmu"], params["bsig"]]).reshape(1, 2 * ZLEN)

    # Folded decoder: out[b, c, p] = sum_k z[b,k] * Wdec[k, c*200+p] + bdec[c*200+p].
    wz3 = params["wz"].reshape(IN_CH, ZLEN, ZLEN)                           # [c, j, k]
    wdec = jnp.einsum("cjk,pj->kcp", wz3, params["wexp"],
                      precision=hi).reshape(ZLEN, IN_CH * WIN)              # (100, 1200)
    bz3 = params["bz"].reshape(IN_CH, ZLEN)
    bdec = (jnp.einsum("cj,pj->cp", bz3, params["wexp"], precision=hi)
            + params["bexp"][None, :]).reshape(1, IN_CH * WIN)              # (1, 1200)

    return (xcol, wconv_flat, bconv, wenc, benc, wdec, bdec, eps)


def vae2_forward(x, params, eps):
    B = x.shape[0]
    args = _prep_args(x, params, eps)

    def vmem():
        return pl.BlockSpec(memory_space=pltpu.MemorySpace.VMEM)

    recon_flat, mu, sigma = pl.pallas_call(
        vae2_kernel,
        out_shape=(
            jax.ShapeDtypeStruct((B, IN_CH * WIN), jnp.float32),
            jax.ShapeDtypeStruct((B, ZLEN), jnp.float32),
            jax.ShapeDtypeStruct((B, ZLEN), jnp.float32),
        ),
        in_specs=[vmem() for _ in range(len(args))],
        out_specs=(vmem(), vmem(), vmem()),
    )(*args)
    return recon_flat.reshape(B, IN_CH, WIN), mu, sigma


def vae2_reference(x, params, eps):
    """Pure-JAX reference of the PyTorch forward (for validation)."""
    B = x.shape[0]
    xp = jnp.pad(x, ((0, 0), (0, 0), (2, 2)), mode="edge")
    conv = sum(jnp.einsum("oc,bcl->bol", params["wconv"][:, :, k], xp[:, :, k:k + WIN])
               for k in range(KSZ)) + params["bconv"][None, :, None]
    pooled = conv.reshape(B, FEAT, NPOS, POOL).max(-1)
    flat = pooled.reshape(B, HID)
    mu = flat @ params["wmu"].T + params["bmu"]
    sigma = flat @ params["wsig"].T + params["bsig"]
    z = mu + sigma * eps
    h = z @ params["wz"].T + params["bz"]
    h3 = h.reshape(B, 6, ZLEN)
    out = jnp.einsum("bcj,lj->bcl", h3, params["wexp"]) + params["bexp"][None, None, :]
    return out, mu, sigma


if __name__ == "__main__":
    key = jax.random.PRNGKey(0)
    kp, kx, ke = jax.random.split(key, 3)
    params = init_params(kp)

    B = 2
    x = jax.random.normal(kx, (B, IN_CH, WIN), jnp.float32)
    # torch.randn_like(sigma) is modeled as an explicit noise input (deterministic here)
    eps = jax.random.normal(ke, (B, ZLEN), jnp.float32)

    recon, mu, sigma = jax.jit(vae2_forward)(x, params, eps)
    jax.block_until_ready((recon, mu, sigma))

    r_recon, r_mu, r_sigma = vae2_reference(x, params, eps)
    assert recon.shape == (B, IN_CH, WIN)
    assert mu.shape == (B, ZLEN) and sigma.shape == (B, ZLEN)
    # Both kernel and reference run default (bf16-input, f32-accumulate) matmuls;
    # the folded decoder changes associativity slightly -> allow 2e-2 abs drift.
    for got, want in ((recon, r_recon), (mu, r_mu), (sigma, r_sigma)):
        err = float(jnp.max(jnp.abs(got - want)))
        if not err < 2e-2:
            raise AssertionError(f"kernel/reference mismatch: max abs err {err}")

    print("KERNEL_OK")
</pallas_src>

<mosaic_0001>
module attributes {stable_mosaic.version = 11 : i64} {
  func.func @vae2_kernel(%arg0: memref<2x30x200xf32, #tpu.memory_space<vmem>>, %arg1: memref<12x30xf32, #tpu.memory_space<vmem>>, %arg2: memref<12x1xf32, #tpu.memory_space<vmem>>, %arg3: memref<12x50x200xf32, #tpu.memory_space<vmem>>, %arg4: memref<1x200xf32, #tpu.memory_space<vmem>>, %arg5: memref<100x1200xf32, #tpu.memory_space<vmem>>, %arg6: memref<1x1200xf32, #tpu.memory_space<vmem>>, %arg7: memref<2x100xf32, #tpu.memory_space<vmem>>, %arg8: memref<2x1200xf32, #tpu.memory_space<vmem>>, %arg9: memref<2x100xf32, #tpu.memory_space<vmem>>, %arg10: memref<2x100xf32, #tpu.memory_space<vmem>>) attributes {dimension_semantics = [], scalar_prefetch = 0 : i64, scratch_operands = 0 : i64, tpu.core_type = #tpu.core_type<tc>} {
    %c0 = arith.constant 0 : index
    %c0_0 = arith.constant 0 : index
    %0 = vector.load %arg1[%c0, %c0_0] : memref<12x30xf32, #tpu.memory_space<vmem>>, vector<12x30xf32>
    %c0_1 = arith.constant 0 : index
    %c0_2 = arith.constant 0 : index
    %1 = vector.load %arg2[%c0_1, %c0_2] : memref<12x1xf32, #tpu.memory_space<vmem>>, vector<12x1xf32>
    %c0_3 = arith.constant 0 : index
    %c0_4 = arith.constant 0 : index
    %2 = vector.load %arg4[%c0_3, %c0_4] : memref<1x200xf32, #tpu.memory_space<vmem>>, vector<1x200xf32>
    %c0_5 = arith.constant 0 : index
    %c0_6 = arith.constant 0 : index
    %c0_7 = arith.constant 0 : index
    %3 = vector.load %arg0[%c0_5, %c0_6, %c0_7] : memref<2x30x200xf32, #tpu.memory_space<vmem>>, vector<1x30x200xf32>
    %4 = vector.shape_cast %3 : vector<1x30x200xf32> to vector<30x200xf32>
    %cst = arith.constant dense<0.000000e+00> : vector<12x200xf32>
    %5 = tpu.matmul %0, %4, %cst {dimension_numbers = #tpu.dot_dimension_numbers<[1], [0], [0], [1], [0, 0, 1, 1], [], []>} : vector<12x30xf32>, vector<30x200xf32>, vector<12x200xf32> -> vector<12x200xf32>
    %6 = vector.broadcast %1 : vector<12x1xf32> to vector<12x200xf32>
    %7 = arith.addf %5, %6 : vector<12x200xf32>
    %8 = vector.extract_strided_slice %7 {offsets = [0, 0], sizes = [12, 50], strides = [1, 1]} : vector<12x200xf32> to vector<12x50xf32>
    %9 = vector.extract_strided_slice %7 {offsets = [0, 50], sizes = [12, 50], strides = [1, 1]} : vector<12x200xf32> to vector<12x50xf32>
    %10 = arith.maximumf %8, %9 : vector<12x50xf32>
    %11 = vector.extract_strided_slice %7 {offsets = [0, 100], sizes = [12, 50], strides = [1, 1]} : vector<12x200xf32> to vector<12x50xf32>
    %12 = vector.extract_strided_slice %7 {offsets = [0, 150], sizes = [12, 50], strides = [1, 1]} : vector<12x200xf32> to vector<12x50xf32>
    %13 = arith.maximumf %11, %12 : vector<12x50xf32>
    %14 = arith.maximumf %10, %13 : vector<12x50xf32>
    %15 = vector.extract_strided_slice %14 {offsets = [0, 0], sizes = [1, 50], strides = [1, 1]} : vector<12x50xf32> to vector<1x50xf32>
    %c0_8 = arith.constant 0 : index
    %c0_9 = arith.constant 0 : index
    %c0_10 = arith.constant 0 : index
    %16 = vector.load %arg3[%c0_8, %c0_9, %c0_10] : memref<12x50x200xf32, #tpu.memory_space<vmem>>, vector<1x50x200xf32>
    %17 = vector.shape_cast %16 : vector<1x50x200xf32> to vector<50x200xf32>
    %cst_11 = arith.constant dense<0.000000e+00> : vector<1x200xf32>
    %18 = tpu.matmul %15, %17, %cst_11 {dimension_numbers = #tpu.dot_dimension_numbers<[1], [0], [0], [1], [0, 0, 1, 1], [], []>} : vector<1x50xf32>, vector<50x200xf32>, vector<1x200xf32> -> vector<1x200xf32>
    %19 = arith.addf %2, %18 : vector<1x200xf32>
    %20 = vector.extract_strided_slice %14 {offsets = [1, 0], sizes = [1, 50], strides = [1, 1]} : vector<12x50xf32> to vector<1x50xf32>
    %c1 = arith.constant 1 : index
    %c0_12 = arith.constant 0 : index
    %c0_13 = arith.constant 0 : index
    %21 = vector.load %arg3[%c1, %c0_12, %c0_13] : memref<12x50x200xf32, #tpu.memory_space<vmem>>, vector<1x50x200xf32>
    %22 = vector.shape_cast %21 : vector<1x50x200xf32> to vector<50x200xf32>
    %cst_14 = arith.constant dense<0.000000e+00> : vector<1x200xf32>
    %23 = tpu.matmul %20, %22, %cst_14 {dimension_numbers = #tpu.dot_dimension_numbers<[1], [0], [0], [1], [0, 0, 1, 1], [], []>} : vector<1x50xf32>, vector<50x200xf32>, vector<1x200xf32> -> vector<1x200xf32>
    %24 = arith.addf %19, %23 : vector<1x200xf32>
    %25 = vector.extract_strided_slice %14 {offsets = [2, 0], sizes = [1, 50], strides = [1, 1]} : vector<12x50xf32> to vector<1x50xf32>
    %c2 = arith.constant 2 : index
    %c0_15 = arith.constant 0 : index
    %c0_16 = arith.constant 0 : index
    %26 = vector.load %arg3[%c2, %c0_15, %c0_16] : memref<12x50x200xf32, #tpu.memory_space<vmem>>, vector<1x50x200xf32>
    %27 = vector.shape_cast %26 : vector<1x50x200xf32> to vector<50x200xf32>
    %cst_17 = arith.constant dense<0.000000e+00> : vector<1x200xf32>
    %28 = tpu.matmul %25, %27, %cst_17 {dimension_numbers = #tpu.dot_dimension_numbers<[1], [0], [0], [1], [0, 0, 1, 1], [], []>} : vector<1x50xf32>, vector<50x200xf32>, vector<1x200xf32> -> vector<1x200xf32>
    %29 = arith.addf %24, %28 : vector<1x200xf32>
    %30 = vector.extract_strided_slice %14 {offsets = [3, 0], sizes = [1, 50], strides = [1, 1]} : vector<12x50xf32> to vector<1x50xf32>
    %c3 = arith.constant 3 : index
    %c0_18 = arith.constant 0 : index
    %c0_19 = arith.constant 0 : index
    %31 = vector.load %arg3[%c3, %c0_18, %c0_19] : memref<12x50x200xf32, #tpu.memory_space<vmem>>, vector<1x50x200xf32>
    %32 = vector.shape_cast %31 : vector<1x50x200xf32> to vector<50x200xf32>
    %cst_20 = arith.constant dense<0.000000e+00> : vector<1x200xf32>
    %33 = tpu.matmul %30, %32, %cst_20 {dimension_numbers = #tpu.dot_dimension_numbers<[1], [0], [0], [1], [0, 0, 1, 1], [], []>} : vector<1x50xf32>, vector<50x200xf32>, vector<1x200xf32> -> vector<1x200xf32>
    %34 = arith.addf %29, %33 : vector<1x200xf32>
    %35 = vector.extract_strided_slice %14 {offsets = [4, 0], sizes = [1, 50], strides = [1, 1]} : vector<12x50xf32> to vector<1x50xf32>
    %c4 = arith.constant 4 : index
    %c0_21 = arith.constant 0 : index
    %c0_22 = arith.constant 0 : index
    %36 = vector.load %arg3[%c4, %c0_21, %c0_22] : memref<12x50x200xf32, #tpu.memory_space<vmem>>, vector<1x50x200xf32>
    %37 = vector.shape_cast %36 : vector<1x50x200xf32> to vector<50x200xf32>
    %cst_23 = arith.constant dense<0.000000e+00> : vector<1x200xf32>
    %38 = tpu.matmul %35, %37, %cst_23 {dimension_numbers = #tpu.dot_dimension_numbers<[1], [0], [0], [1], [0, 0, 1, 1], [], []>} : vector<1x50xf32>, vector<50x200xf32>, vector<1x200xf32> -> vector<1x200xf32>
    %39 = arith.addf %34, %38 : vector<1x200xf32>
    %40 = vector.extract_strided_slice %14 {offsets = [5, 0], sizes = [1, 50], strides = [1, 1]} : vector<12x50xf32> to vector<1x50xf32>
    %c5 = arith.constant 5 : index
    %c0_24 = arith.constant 0 : index
    %c0_25 = arith.constant 0 : index
    %41 = vector.load %arg3[%c5, %c0_24, %c0_25] : memref<12x50x200xf32, #tpu.memory_space<vmem>>, vector<1x50x200xf32>
    %42 = vector.shape_cast %41 : vector<1x50x200xf32> to vector<50x200xf32>
    %cst_26 = arith.constant dense<0.000000e+00> : vector<1x200xf32>
    %43 = tpu.matmul %40, %42, %cst_26 {dimension_numbers = #tpu.dot_dimension_numbers<[1], [0], [0], [1], [0, 0, 1, 1], [], []>} : vector<1x50xf32>, vector<50x200xf32>, vector<1x200xf32> -> vector<1x200xf32>
    %44 = arith.addf %39, %43 : vector<1x200xf32>
    %45 = vector.extract_strided_slice %14 {offsets = [6, 0], sizes = [1, 50], strides = [1, 1]} : vector<12x50xf32> to vector<1x50xf32>
    %c6 = arith.constant 6 : index
    %c0_27 = arith.constant 0 : index
    %c0_28 = arith.constant 0 : index
    %46 = vector.load %arg3[%c6, %c0_27, %c0_28] : memref<12x50x200xf32, #tpu.memory_space<vmem>>, vector<1x50x200xf32>
    %47 = vector.shape_cast %46 : vector<1x50x200xf32> to vector<50x200xf32>
    %cst_29 = arith.constant dense<0.000000e+00> : vector<1x200xf32>
    %48 = tpu.matmul %45, %47, %cst_29 {dimension_numbers = #tpu.dot_dimension_numbers<[1], [0], [0], [1], [0, 0, 1, 1], [], []>} : vector<1x50xf32>, vector<50x200xf32>, vector<1x200xf32> -> vector<1x200xf32>
    %49 = arith.addf %44, %48 : vector<1x200xf32>
    %50 = vector.extract_strided_slice %14 {offsets = [7, 0], sizes = [1, 50], strides = [1, 1]} : vector<12x50xf32> to vector<1x50xf32>
    %c7 = arith.constant 7 : index
    %c0_30 = arith.constant 0 : index
    %c0_31 = arith.constant 0 : index
    %51 = vector.load %arg3[%c7, %c0_30, %c0_31] : memref<12x50x200xf32, #tpu.memory_space<vmem>>, vector<1x50x200xf32>
    %52 = vector.shape_cast %51 : vector<1x50x200xf32> to vector<50x200xf32>
    %cst_32 = arith.constant dense<0.000000e+00> : vector<1x200xf32>
    %53 = tpu.matmul %50, %52, %cst_32 {dimension_numbers = #tpu.dot_dimension_numbers<[1], [0], [0], [1], [0, 0, 1, 1], [], []>} : vector<1x50xf32>, vector<50x200xf32>, vector<1x200xf32> -> vector<1x200xf32>
    %54 = arith.addf %49, %53 : vector<1x200xf32>
    %55 = vector.extract_strided_slice %14 {offsets = [8, 0], sizes = [1, 50], strides = [1, 1]} : vector<12x50xf32> to vector<1x50xf32>
    %c8 = arith.constant 8 : index
    %c0_33 = arith.constant 0 : index
    %c0_34 = arith.constant 0 : index
    %56 = vector.load %arg3[%c8, %c0_33, %c0_34] : memref<12x50x200xf32, #tpu.memory_space<vmem>>, vector<1x50x200xf32>
    %57 = vector.shape_cast %56 : vector<1x50x200xf32> to vector<50x200xf32>
    %cst_35 = arith.constant dense<0.000000e+00> : vector<1x200xf32>
    %58 = tpu.matmul %55, %57, %cst_35 {dimension_numbers = #tpu.dot_dimension_numbers<[1], [0], [0], [1], [0, 0, 1, 1], [], []>} : vector<1x50xf32>, vector<50x200xf32>, vector<1x200xf32> -> vector<1x200xf32>
    %59 = arith.addf %54, %58 : vector<1x200xf32>
    %60 = vector.extract_strided_slice %14 {offsets = [9, 0], sizes = [1, 50], strides = [1, 1]} : vector<12x50xf32> to vector<1x50xf32>
    %c9 = arith.constant 9 : index
    %c0_36 = arith.constant 0 : index
    %c0_37 = arith.constant 0 : index
    %61 = vector.load %arg3[%c9, %c0_36, %c0_37] : memref<12x50x200xf32, #tpu.memory_space<vmem>>, vector<1x50x200xf32>
    %62 = vector.shape_cast %61 : vector<1x50x200xf32> to vector<50x200xf32>
    %cst_38 = arith.constant dense<0.000000e+00> : vector<1x200xf32>
    %63 = tpu.matmul %60, %62, %cst_38 {dimension_numbers = #tpu.dot_dimension_numbers<[1], [0], [0], [1], [0, 0, 1, 1], [], []>} : vector<1x50xf32>, vector<50x200xf32>, vector<1x200xf32> -> vector<1x200xf32>
    %64 = arith.addf %59, %63 : vector<1x200xf32>
    %65 = vector.extract_strided_slice %14 {offsets = [10, 0], sizes = [1, 50], strides = [1, 1]} : vector<12x50xf32> to vector<1x50xf32>
    %c10 = arith.constant 10 : index
    %c0_39 = arith.constant 0 : index
    %c0_40 = arith.constant 0 : index
    %66 = vector.load %arg3[%c10, %c0_39, %c0_40] : memref<12x50x200xf32, #tpu.memory_space<vmem>>, vector<1x50x200xf32>
    %67 = vector.shape_cast %66 : vector<1x50x200xf32> to vector<50x200xf32>
    %cst_41 = arith.constant dense<0.000000e+00> : vector<1x200xf32>
    %68 = tpu.matmul %65, %67, %cst_41 {dimension_numbers = #tpu.dot_dimension_numbers<[1], [0], [0], [1], [0, 0, 1, 1], [], []>} : vector<1x50xf32>, vector<50x200xf32>, vector<1x200xf32> -> vector<1x200xf32>
    %69 = arith.addf %64, %68 : vector<1x200xf32>
    %70 = vector.extract_strided_slice %14 {offsets = [11, 0], sizes = [1, 50], strides = [1, 1]} : vector<12x50xf32> to vector<1x50xf32>
    %c11 = arith.constant 11 : index
    %c0_42 = arith.constant 0 : index
    %c0_43 = arith.constant 0 : index
    %71 = vector.load %arg3[%c11, %c0_42, %c0_43] : memref<12x50x200xf32, #tpu.memory_space<vmem>>, vector<1x50x200xf32>
    %72 = vector.shape_cast %71 : vector<1x50x200xf32> to vector<50x200xf32>
    %cst_44 = arith.constant dense<0.000000e+00> : vector<1x200xf32>
    %73 = tpu.matmul %70, %72, %cst_44 {dimension_numbers = #tpu.dot_dimension_numbers<[1], [0], [0], [1], [0, 0, 1, 1], [], []>} : vector<1x50xf32>, vector<50x200xf32>, vector<1x200xf32> -> vector<1x200xf32>
    %74 = arith.addf %69, %73 : vector<1x200xf32>
    %75 = vector.extract_strided_slice %74 {offsets = [0, 0], sizes = [1, 100], strides = [1, 1]} : vector<1x200xf32> to vector<1x100xf32>
    %c0_45 = arith.constant 0 : index
    %c0_46 = arith.constant 0 : index
    %76 = vector.load %arg9[%c0_45, %c0_46] : memref<2x100xf32, #tpu.memory_space<vmem>>, vector<1x100xf32>
    tpu.vector_store %arg9[%c0_45, %c0_46], %75 {strides = array<i32>} : memref<2x100xf32, #tpu.memory_space<vmem>>, vector<1x100xf32>,
    %77 = vector.extract_strided_slice %74 {offsets = [0, 100], sizes = [1, 100], strides = [1, 1]} : vector<1x200xf32> to vector<1x100xf32>
    %c0_47 = arith.constant 0 : index
    %c0_48 = arith.constant 0 : index
    %78 = vector.load %arg10[%c0_47, %c0_48] : memref<2x100xf32, #tpu.memory_space<vmem>>, vector<1x100xf32>
    tpu.vector_store %arg10[%c0_47, %c0_48], %77 {strides = array<i32>} : memref<2x100xf32, #tpu.memory_space<vmem>>, vector<1x100xf32>,
    %c1_49 = arith.constant 1 : index
    %c0_50 = arith.constant 0 : index
    %c0_51 = arith.constant 0 : index
    %79 = vector.load %arg0[%c1_49, %c0_50, %c0_51] : memref<2x30x200xf32, #tpu.memory_space<vmem>>, vector<1x30x200xf32>
    %80 = vector.shape_cast %79 : vector<1x30x200xf32> to vector<30x200xf32>
    %cst_52 = arith.constant dense<0.000000e+00> : vector<12x200xf32>
    %81 = tpu.matmul %0, %80, %cst_52 {dimension_numbers = #tpu.dot_dimension_numbers<[1], [0], [0], [1], [0, 0, 1, 1], [], []>} : vector<12x30xf32>, vector<30x200xf32>, vector<12x200xf32> -> vector<12x200xf32>
    %82 = vector.broadcast %1 : vector<12x1xf32> to vector<12x200xf32>
    %83 = arith.addf %81, %82 : vector<12x200xf32>
    %84 = vector.extract_strided_slice %83 {offsets = [0, 0], sizes = [12, 50], strides = [1, 1]} : vector<12x200xf32> to vector<12x50xf32>
    %85 = vector.extract_strided_slice %83 {offsets = [0, 50], sizes = [12, 50], strides = [1, 1]} : vector<12x200xf32> to vector<12x50xf32>
    %86 = arith.maximumf %84, %85 : vector<12x50xf32>
    %87 = vector.extract_strided_slice %83 {offsets = [0, 100], sizes = [12, 50], strides = [1, 1]} : vector<12x200xf32> to vector<12x50xf32>
    %88 = vector.extract_strided_slice %83 {offsets = [0, 150], sizes = [12, 50], strides = [1, 1]} : vector<12x200xf32> to vector<12x50xf32>
    %89 = arith.maximumf %87, %88 : vector<12x50xf32>
    %90 = arith.maximumf %86, %89 : vector<12x50xf32>
    %91 = vector.extract_strided_slice %90 {offsets = [0, 0], sizes = [1, 50], strides = [1, 1]} : vector<12x50xf32> to vector<1x50xf32>
    %c0_53 = arith.constant 0 : index
    %c0_54 = arith.constant 0 : index
    %c0_55 = arith.constant 0 : index
    %92 = vector.load %arg3[%c0_53, %c0_54, %c0_55] : memref<12x50x200xf32, #tpu.memory_space<vmem>>, vector<1x50x200xf32>
    %93 = vector.shape_cast %92 : vector<1x50x200xf32> to vector<50x200xf32>
    %cst_56 = arith.constant dense<0.000000e+00> : vector<1x200xf32>
    %94 = tpu.matmul %91, %93, %cst_56 {dimension_numbers = #tpu.dot_dimension_numbers<[1], [0], [0], [1], [0, 0, 1, 1], [], []>} : vector<1x50xf32>, vector<50x200xf32>, vector<1x200xf32> -> vector<1x200xf32>
    %95 = arith.addf %2, %94 : vector<1x200xf32>
    %96 = vector.extract_strided_slice %90 {offsets = [1, 0], sizes = [1, 50], strides = [1, 1]} : vector<12x50xf32> to vector<1x50xf32>
    %c1_57 = arith.constant 1 : index
    %c0_58 = arith.constant 0 : index
    %c0_59 = arith.constant 0 : index
    %97 = vector.load %arg3[%c1_57, %c0_58, %c0_59] : memref<12x50x200xf32, #tpu.memory_space<vmem>>, vector<1x50x200xf32>
    %98 = vector.shape_cast %97 : vector<1x50x200xf32> to vector<50x200xf32>
    %cst_60 = arith.constant dense<0.000000e+00> : vector<1x200xf32>
    %99 = tpu.matmul %96, %98, %cst_60 {dimension_numbers = #tpu.dot_dimension_numbers<[1], [0], [0], [1], [0, 0, 1, 1], [], []>} : vector<1x50xf32>, vector<50x200xf32>, vector<1x200xf32> -> vector<1x200xf32>
    %100 = arith.addf %95, %99 : vector<1x200xf32>
    %101 = vector.extract_strided_slice %90 {offsets = [2, 0], sizes = [1, 50], strides = [1, 1]} : vector<12x50xf32> to vector<1x50xf32>
    %c2_61 = arith.constant 2 : index
    %c0_62 = arith.constant 0 : index
    %c0_63 = arith.constant 0 : index
    %102 = vector.load %arg3[%c2_61, %c0_62, %c0_63] : memref<12x50x200xf32, #tpu.memory_space<vmem>>, vector<1x50x200xf32>
    %103 = vector.shape_cast %102 : vector<1x50x200xf32> to vector<50x200xf32>
    %cst_64 = arith.constant dense<0.000000e+00> : vector<1x200xf32>
    %104 = tpu.matmul %101, %103, %cst_64 {dimension_numbers = #tpu.dot_dimension_numbers<[1], [0], [0], [1], [0, 0, 1, 1], [], []>} : vector<1x50xf32>, vector<50x200xf32>, vector<1x200xf32> -> vector<1x200xf32>
    %105 = arith.addf %100, %104 : vector<1x200xf32>
    %106 = vector.extract_strided_slice %90 {offsets = [3, 0], sizes = [1, 50], strides = [1, 1]} : vector<12x50xf32> to vector<1x50xf32>
    %c3_65 = arith.constant 3 : index
    %c0_66 = arith.constant 0 : index
    %c0_67 = arith.constant 0 : index
    %107 = vector.load %arg3[%c3_65, %c0_66, %c0_67] : memref<12x50x200xf32, #tpu.memory_space<vmem>>, vector<1x50x200xf32>
    %108 = vector.shape_cast %107 : vector<1x50x200xf32> to vector<50x200xf32>
    %cst_68 = arith.constant dense<0.000000e+00> : vector<1x200xf32>
    %109 = tpu.matmul %106, %108, %cst_68 {dimension_numbers = #tpu.dot_dimension_numbers<[1], [0], [0], [1], [0, 0, 1, 1], [], []>} : vector<1x50xf32>, vector<50x200xf32>, vector<1x200xf32> -> vector<1x200xf32>
    %110 = arith.addf %105, %109 : vector<1x200xf32>
    %111 = vector.extract_strided_slice %90 {offsets = [4, 0], sizes = [1, 50], strides = [1, 1]} : vector<12x50xf32> to vector<1x50xf32>
    %c4_69 = arith.constant 4 : index
    %c0_70 = arith.constant 0 : index
    %c0_71 = arith.constant 0 : index
    %112 = vector.load %arg3[%c4_69, %c0_70, %c0_71] : memref<12x50x200xf32, #tpu.memory_space<vmem>>, vector<1x50x200xf32>
    %113 = vector.shape_cast %112 : vector<1x50x200xf32> to vector<50x200xf32>
    %cst_72 = arith.constant dense<0.000000e+00> : vector<1x200xf32>
    %114 = tpu.matmul %111, %113, %cst_72 {dimension_numbers = #tpu.dot_dimension_numbers<[1], [0], [0], [1], [0, 0, 1, 1], [], []>} : vector<1x50xf32>, vector<50x200xf32>, vector<1x200xf32> -> vector<1x200xf32>
    %115 = arith.addf %110, %114 : vector<1x200xf32>
    %116 = vector.extract_strided_slice %90 {offsets = [5, 0], sizes = [1, 50], strides = [1, 1]} : vector<12x50xf32> to vector<1x50xf32>
    %c5_73 = arith.constant 5 : index
    %c0_74 = arith.constant 0 : index
    %c0_75 = arith.constant 0 : index
    %117 = vector.load %arg3[%c5_73, %c0_74, %c0_75] : memref<12x50x200xf32, #tpu.memory_space<vmem>>, vector<1x50x200xf32>
    %118 = vector.shape_cast %117 : vector<1x50x200xf32> to vector<50x200xf32>
    %cst_76 = arith.constant dense<0.000000e+00> : vector<1x200xf32>
    %119 = tpu.matmul %116, %118, %cst_76 {dimension_numbers = #tpu.dot_dimension_numbers<[1], [0], [0], [1], [0, 0, 1, 1], [], []>} : vector<1x50xf32>, vector<50x200xf32>, vector<1x200xf32> -> vector<1x200xf32>
    %120 = arith.addf %115, %119 : vector<1x200xf32>
    %121 = vector.extract_strided_slice %90 {offsets = [6, 0], sizes = [1, 50], strides = [1, 1]} : vector<12x50xf32> to vector<1x50xf32>
    %c6_77 = arith.constant 6 : index
    %c0_78 = arith.constant 0 : index
    %c0_79 = arith.constant 0 : index
    %122 = vector.load %arg3[%c6_77, %c0_78, %c0_79] : memref<12x50x200xf32, #tpu.memory_space<vmem>>, vector<1x50x200xf32>
    %123 = vector.shape_cast %122 : vector<1x50x200xf32> to vector<50x200xf32>
    %cst_80 = arith.constant dense<0.000000e+00> : vector<1x200xf32>
    %124 = tpu.matmul %121, %123, %cst_80 {dimension_numbers = #tpu.dot_dimension_numbers<[1], [0], [0], [1], [0, 0, 1, 1], [], []>} : vector<1x50xf32>, vector<50x200xf32>, vector<1x200xf32> -> vector<1x200xf32>
    %125 = arith.addf %120, %124 : vector<1x200xf32>
    %126 = vector.extract_strided_slice %90 {offsets = [7, 0], sizes = [1, 50], strides = [1, 1]} : vector<12x50xf32> to vector<1x50xf32>
    %c7_81 = arith.constant 7 : index
    %c0_82 = arith.constant 0 : index
    %c0_83 = arith.constant 0 : index
    %127 = vector.load %arg3[%c7_81, %c0_82, %c0_83] : memref<12x50x200xf32, #tpu.memory_space<vmem>>, vector<1x50x200xf32>
    %128 = vector.shape_cast %127 : vector<1x50x200xf32> to vector<50x200xf32>
    %cst_84 = arith.constant dense<0.000000e+00> : vector<1x200xf32>
    %129 = tpu.matmul %126, %128, %cst_84 {dimension_numbers = #tpu.dot_dimension_numbers<[1], [0], [0], [1], [0, 0, 1, 1], [], []>} : vector<1x50xf32>, vector<50x200xf32>, vector<1x200xf32> -> vector<1x200xf32>
    %130 = arith.addf %125, %129 : vector<1x200xf32>
    %131 = vector.extract_strided_slice %90 {offsets = [8, 0], sizes = [1, 50], strides = [1, 1]} : vector<12x50xf32> to vector<1x50xf32>
    %c8_85 = arith.constant 8 : index
    %c0_86 = arith.constant 0 : index
    %c0_87 = arith.constant 0 : index
    %132 = vector.load %arg3[%c8_85, %c0_86, %c0_87] : memref<12x50x200xf32, #tpu.memory_space<vmem>>, vector<1x50x200xf32>
    %133 = vector.shape_cast %132 : vector<1x50x200xf32> to vector<50x200xf32>
    %cst_88 = arith.constant dense<0.000000e+00> : vector<1x200xf32>
    %134 = tpu.matmul %131, %133, %cst_88 {dimension_numbers = #tpu.dot_dimension_numbers<[1], [0], [0], [1], [0, 0, 1, 1], [], []>} : vector<1x50xf32>, vector<50x200xf32>, vector<1x200xf32> -> vector<1x200xf32>
    %135 = arith.addf %130, %134 : vector<1x200xf32>
    %136 = vector.extract_strided_slice %90 {offsets = [9, 0], sizes = [1, 50], strides = [1, 1]} : vector<12x50xf32> to vector<1x50xf32>
    %c9_89 = arith.constant 9 : index
    %c0_90 = arith.constant 0 : index
    %c0_91 = arith.constant 0 : index
    %137 = vector.load %arg3[%c9_89, %c0_90, %c0_91] : memref<12x50x200xf32, #tpu.memory_space<vmem>>, vector<1x50x200xf32>
    %138 = vector.shape_cast %137 : vector<1x50x200xf32> to vector<50x200xf32>
    %cst_92 = arith.constant dense<0.000000e+00> : vector<1x200xf32>
    %139 = tpu.matmul %136, %138, %cst_92 {dimension_numbers = #tpu.dot_dimension_numbers<[1], [0], [0], [1], [0, 0, 1, 1], [], []>} : vector<1x50xf32>, vector<50x200xf32>, vector<1x200xf32> -> vector<1x200xf32>
    %140 = arith.addf %135, %139 : vector<1x200xf32>
    %141 = vector.extract_strided_slice %90 {offsets = [10, 0], sizes = [1, 50], strides = [1, 1]} : vector<12x50xf32> to vector<1x50xf32>
    %c10_93 = arith.constant 10 : index
    %c0_94 = arith.constant 0 : index
    %c0_95 = arith.constant 0 : index
    %142 = vector.load %arg3[%c10_93, %c0_94, %c0_95] : memref<12x50x200xf32, #tpu.memory_space<vmem>>, vector<1x50x200xf32>
    %143 = vector.shape_cast %142 : vector<1x50x200xf32> to vector<50x200xf32>
    %cst_96 = arith.constant dense<0.000000e+00> : vector<1x200xf32>
    %144 = tpu.matmul %141, %143, %cst_96 {dimension_numbers = #tpu.dot_dimension_numbers<[1], [0], [0], [1], [0, 0, 1, 1], [], []>} : vector<1x50xf32>, vector<50x200xf32>, vector<1x200xf32> -> vector<1x200xf32>
    %145 = arith.addf %140, %144 : vector<1x200xf32>
    %146 = vector.extract_strided_slice %90 {offsets = [11, 0], sizes = [1, 50], strides = [1, 1]} : vector<12x50xf32> to vector<1x50xf32>
    %c11_97 = arith.constant 11 : index
    %c0_98 = arith.constant 0 : index
    %c0_99 = arith.constant 0 : index
    %147 = vector.load %arg3[%c11_97, %c0_98, %c0_99] : memref<12x50x200xf32, #tpu.memory_space<vmem>>, vector<1x50x200xf32>
    %148 = vector.shape_cast %147 : vector<1x50x200xf32> to vector<50x200xf32>
    %cst_100 = arith.constant dense<0.000000e+00> : vector<1x200xf32>
    %149 = tpu.matmul %146, %148, %cst_100 {dimension_numbers = #tpu.dot_dimension_numbers<[1], [0], [0], [1], [0, 0, 1, 1], [], []>} : vector<1x50xf32>, vector<50x200xf32>, vector<1x200xf32> -> vector<1x200xf32>
    %150 = arith.addf %145, %149 : vector<1x200xf32>
    %151 = vector.extract_strided_slice %150 {offsets = [0, 0], sizes = [1, 100], strides = [1, 1]} : vector<1x200xf32> to vector<1x100xf32>
    %c1_101 = arith.constant 1 : index
    %c0_102 = arith.constant 0 : index
    %152 = vector.load %arg9[%c1_101, %c0_102] : memref<2x100xf32, #tpu.memory_space<vmem>>, vector<1x100xf32>
    tpu.vector_store %arg9[%c1_101, %c0_102], %151 {strides = array<i32>} : memref<2x100xf32, #tpu.memory_space<vmem>>, vector<1x100xf32>,
    %153 = vector.extract_strided_slice %150 {offsets = [0, 100], sizes = [1, 100], strides = [1, 1]} : vector<1x200xf32> to vector<1x100xf32>
    %c1_103 = arith.constant 1 : index
    %c0_104 = arith.constant 0 : index
    %154 = vector.load %arg10[%c1_103, %c0_104] : memref<2x100xf32, #tpu.memory_space<vmem>>, vector<1x100xf32>
    tpu.vector_store %arg10[%c1_103, %c0_104], %153 {strides = array<i32>} : memref<2x100xf32, #tpu.memory_space<vmem>>, vector<1x100xf32>,
    %c0_105 = arith.constant 0 : index
    %c0_106 = arith.constant 0 : index
    %155 = vector.load %arg9[%c0_105, %c0_106] : memref<2x100xf32, #tpu.memory_space<vmem>>, vector<2x100xf32>
    %c0_107 = arith.constant 0 : index
    %c0_108 = arith.constant 0 : index
    %156 = vector.load %arg10[%c0_107, %c0_108] : memref<2x100xf32, #tpu.memory_space<vmem>>, vector<2x100xf32>
    %c0_109 = arith.constant 0 : index
    %c0_110 = arith.constant 0 : index
    %157 = vector.load %arg7[%c0_109, %c0_110] : memref<2x100xf32, #tpu.memory_space<vmem>>, vector<2x100xf32>
    %158 = arith.mulf %156, %157 : vector<2x100xf32>
    %159 = arith.addf %155, %158 : vector<2x100xf32>
    %c0_111 = arith.constant 0 : index
    %c0_112 = arith.constant 0 : index
    %160 = vector.load %arg5[%c0_111, %c0_112] : memref<100x1200xf32, #tpu.memory_space<vmem>>, vector<100x1200xf32>
    %cst_113 = arith.constant dense<0.000000e+00> : vector<2x1200xf32>
    %161 = tpu.matmul %159, %160, %cst_113 {dimension_numbers = #tpu.dot_dimension_numbers<[1], [0], [0], [1], [0, 0, 1, 1], [], []>} : vector<2x100xf32>, vector<100x1200xf32>, vector<2x1200xf32> -> vector<2x1200xf32>
    %c0_114 = arith.constant 0 : index
    %c0_115 = arith.constant 0 : index
    %162 = vector.load %arg6[%c0_114, %c0_115] : memref<1x1200xf32, #tpu.memory_space<vmem>>, vector<1x1200xf32>
    %163 = vector.broadcast %162 : vector<1x1200xf32> to vector<2x1200xf32>
    %164 = arith.addf %161, %163 : vector<2x1200xf32>
    %c0_116 = arith.constant 0 : index
    %c0_117 = arith.constant 0 : index
    %165 = vector.load %arg8[%c0_116, %c0_117] : memref<2x1200xf32, #tpu.memory_space<vmem>>, vector<2x1200xf32>
    tpu.vector_store %arg8[%c0_116, %c0_117], %164 {strides = array<i32>} : memref<2x1200xf32, #tpu.memory_space<vmem>>, vector<2x1200xf32>,
    return
  }
}

</mosaic_0001>

<llo_original>
// kernel: vae2_forward.1
$region0: #{vae2_forward.1}
  #allocation0 [shape = 'u32[]', space=smem, size = 0x4, offset = 0x4, fixed_abs, tag = 'smem constant byte address 0x4 - core index']
  #allocation1 [shape = 'u32[144,128]{1,0:T(1,128)}', space=vmem, size = 0x12000, scoped, tag = 'internal scratch']
  %s0 = inlined_call_operand.vmem [shape: f32[2,30,200], index: 0, kind: input, shape index: {}]
  %s1 = inlined_call_operand.vmem [shape: f32[12,30], index: 1, kind: input, shape index: {}]
  %s2 = inlined_call_operand.vmem [shape: f32[12,1], index: 2, kind: input, shape index: {}]
  %s3 = inlined_call_operand.vmem [shape: f32[12,50,200], index: 3, kind: input, shape index: {}]
  %s4 = inlined_call_operand.vmem [shape: f32[1,200], index: 4, kind: input, shape index: {}]
  %s5 = inlined_call_operand.vmem [shape: f32[100,1200], index: 5, kind: input, shape index: {}]
  %s6 = inlined_call_operand.vmem [shape: f32[1,1200], index: 6, kind: input, shape index: {}]
  %s7 = inlined_call_operand.vmem [shape: f32[2,100], index: 7, kind: input, shape index: {}]
  %s8 = inlined_call_operand.vmem [shape: f32[2,1200], index: 8, kind: output, shape index: {0}]
  %s9 = inlined_call_operand.hbm [shape: f32[2,100], index: 9, kind: output, shape index: {1}]
  %s10 = inlined_call_operand.hbm [shape: f32[2,100], index: 10, kind: output, shape index: {2}]
  %11 = xla_tuple %s8, %s9, %s10
  %s12 = sld [smem:[#allocation0]]
  $region58: #{vae2_forward.1} parent=0
    _
  %s14 = ssub.s32 1, %s12
  %s15 = scalar_select 0, %s14, %s12
  $region1: #{vae2_forward.1} parent=0
    #allocation2 [shape = 'u8[1024]{0}', space=vmem, size = 0x400, scoped, tag = 'output window, operand 1, single buffered']
    #allocation3 [shape = 's32[1]{0}', space=sflag, size = 0x4, scoped, tag = 'scoped memory for vae2_forward.1']
    #allocation4 [shape = 'u8[1024]{0}', space=vmem, size = 0x400, scoped, tag = 'output window, operand 2, single buffered']
    #allocation5 [shape = 's32[1]{0}', space=sflag, size = 0x4, scoped, tag = 'scoped memory for vae2_forward.1']
    %16 = vsyncpa [#allocation3], 0
    %17 = vsyncpa [#allocation5], 0
    // Predicated region
    $region2: #{vae2_forward.1} parent=1 // pred_check
      _
    $region3: #{vae2_forward.1} parent=1 // pred_check_branch
      %19 = sbr.rel (0) target = $region5
    $region4: #{vae2_forward.1} parent=1 // pred_region
      _
    $region5: #{vae2_forward.1} parent=1 // pred_fallthru
      _
    // Predicated region
    $region6: #{vae2_forward.1} parent=1 // pred_check
      _
    $region7: #{vae2_forward.1} parent=1 // pred_check_branch
      %21 = sbr.rel (0) target = $region9
    $region8: #{vae2_forward.1} parent=1 // pred_region
      _
    $region9: #{vae2_forward.1} parent=1 // pred_fallthru
      _
    // Predicated region
    $region10: #{vae2_forward.1} parent=1 // pred_check
      _
    $region11: #{vae2_forward.1} parent=1 // pred_check_branch
      %23 = sbr.rel (0) target = $region13
    $region12: #{vae2_forward.1} parent=1 // pred_region
      _
    $region13: #{vae2_forward.1} parent=1 // pred_fallthru
      _
    // Predicated region
    $region14: #{vae2_forward.1} parent=1 // pred_check
      _
    $region15: #{vae2_forward.1} parent=1 // pred_check_branch
      %25 = sbr.rel (0) target = $region17
    $region16: #{vae2_forward.1} parent=1 // pred_region
      _
    $region17: #{vae2_forward.1} parent=1 // pred_fallthru
      _
    // Predicated region
    $region18: #{vae2_forward.1} parent=1 // pred_check
      _
    $region19: #{vae2_forward.1} parent=1 // pred_check_branch
      %27 = sbr.rel (0) target = $region21
    $region20: #{vae2_forward.1} parent=1 // pred_region
      _
    $region21: #{vae2_forward.1} parent=1 // pred_fallthru
      _
    // Predicated region
    $region22: #{vae2_forward.1} parent=1 // pred_check
      _
    $region23: #{vae2_forward.1} parent=1 // pred_check_branch
      %29 = sbr.rel (0) target = $region25
    $region24: #{vae2_forward.1} parent=1 // pred_region
      _
    $region25: #{vae2_forward.1} parent=1 // pred_fallthru
      _
    // Predicated region
    $region26: #{vae2_forward.1} parent=1 // pred_check
      _
    $region27: #{vae2_forward.1} parent=1 // pred_check_branch
      %31 = sbr.rel (0) target = $region29
    $region28: #{vae2_forward.1} parent=1 // pred_region
      _
    $region29: #{vae2_forward.1} parent=1 // pred_fallthru
      _
    // Predicated region
    $region30: #{vae2_forward.1} parent=1 // pred_check
      _
    $region31: #{vae2_forward.1} parent=1 // pred_check_branch
      %33 = sbr.rel (0) target = $region33
    $region32: #{vae2_forward.1} parent=1 // pred_region
      _
    $region33: #{vae2_forward.1} parent=1 // pred_fallthru
      _
    %v34 = vld [vmem:[%s1] sm:$0xff]
    %v35 = vld [vmem:[%s1 + $0x8] sm:$0xf]
    %v36 = vld [vmem:[%s2] sm:$0xff]
    %v37 = vld [vmem:[%s2 + $0x8] sm:$0xf]
    %v38 = vld [vmem:[%s4] sm:$0x3]
    %v39 = vld [vmem:[%s0] sm:$0xff]
    %v40 = vld [vmem:[%s0 + $0x8] sm:$0xff]
    %v41 = vld [vmem:[%s0 + $0x10] sm:$0xff]
    %v42 = vld [vmem:[%s0 + $0x18] sm:$0xff]
    %v43 = vld [vmem:[%s0 + $0x20] sm:$0xff]
    %v44 = vld [vmem:[%s0 + $0x28] sm:$0xff]
    %v45 = vld [vmem:[%s0 + $0x30] sm:$0x3f]
    %v46 = vld [vmem:[%s0 + $0x38] sm:$0x3f]
    %48 = vset.pattern.permute.xlu0 0
    %49 = vperm.xlu0 %48, %v36
    %v50 = vpop.permute.xlu0 %49
    %53 = vset.pattern.permute.xlu0 0
    %54 = vperm.xlu0 %53, %v37
    %v55 = vpop.permute.xlu0 %54
    %vm57 = vcmask 244736
    %v59 = vsel %vm57, %v34, 0
    %v62 = vsel %vm57, %v35, 0
    %vm64 = vcmask 1045504
    %v66 = vsel %vm64, %v45, 0
    %v69 = vsel %vm64, %v46, 0
    %71 = vmatprep.subr.mxu0 0.0
    %72 = vmatpush1.msra.mxu0 0.0
    %73 = vmatprep.subr.mxu0 0.0
    %74 = vmatpush1.msra.mxu0 0.0
    %75 = vmatprep.subr.mxu0 0.0
    %76 = vmatpush1.msra.mxu0 0.0
    %77 = vmatprep.subr.mxu0 0.0
    %78 = vmatpush1.msra.mxu0 0.0
    %79 = vmatprep.subr.mxu0 0.0
    %80 = vmatpush1.msra.mxu0 0.0
    %81 = vmatprep.subr.mxu0 0.0
    %82 = vmatpush1.msra.mxu0 0.0
    %83 = vmatprep.subr.mxu0 0.0
    %84 = vmatpush1.msra.mxu0 0.0
    %85 = vmatprep.subr.mxu0 0.0
    %86 = vmatpush1.msra.mxu0 0.0
    %87 = vmatprep.subr.mxu0 0.0
    %88 = vmatpush1.msra.mxu0 0.0
    %89 = vmatprep.subr.mxu0 0.0
    %90 = vmatpush1.msra.mxu0 0.0
    %91 = vmatprep.subr.mxu0 0.0
    %92 = vmatpush1.msra.mxu0 0.0
    %93 = vmatprep.subr.mxu0 0.0
    %94 = vmatpush1.msra.mxu0 0.0
    %95 = vmatprep.subr.mxu0 %v69
    %96 = vmatpush1.msra.mxu0 %v66
    %97 = vmatprep.subr.mxu0 %v44
    %98 = vmatpush1.msra.mxu0 %v43
    %99 = vmatprep.subr.mxu0 %v42
    %100 = vmatpush1.msra.mxu0 %v41
    %101 = vmatprep.subr.mxu0 %v40
    %102 = vmatpush1.msra.mxu0 %v39
    %103 = vmatprep.subr.mxu0 0.0
    %104 = vmatpush2.msra.mxu0 0.0
    %105 = vmatprep.subr.mxu0 0.0
    %106 = vmatpush2.msra.mxu0 0.0
    %107 = vmatprep.subr.mxu0 0.0
    %108 = vmatpush2.msra.mxu0 0.0
    %109 = vmatprep.subr.mxu0 0.0
    %110 = vmatpush2.msra.mxu0 0.0
    %111 = vmatprep.subr.mxu0 0.0
    %112 = vmatpush2.msra.mxu0 0.0
    %113 = vmatprep.subr.mxu0 0.0
    %114 = vmatpush2.msra.mxu0 0.0
    %115 = vmatprep.subr.mxu0 0.0
    %116 = vmatpush2.msra.mxu0 0.0
    %117 = vmatprep.subr.mxu0 0.0
    %118 = vmatpush2.msra.mxu0 0.0
    %119 = vmatprep.subr.mxu0 0.0
    %120 = vmatpush2.msra.mxu0 0.0
    %121 = vmatprep.subr.mxu0 0.0
    %122 = vmatpush2.msra.mxu0 0.0
    %123 = vmatprep.subr.mxu0 0.0
    %124 = vmatpush2.msra.mxu0 0.0
    %125 = vmatprep.subr.mxu0 0.0
    %126 = vmatpush2.msra.mxu0 0.0
    %127 = vmatprep.subr.mxu0 0.0
    %128 = vmatpush2.msra.mxu0 0.0
    %129 = vmatprep.subr.mxu0 0.0
    %130 = vmatpush2.msra.mxu0 0.0
    %131 = vmatprep.subr.mxu0 0.0
    %132 = vmatpush2.msra.mxu0 0.0
    %133 = vmatprep.subr.mxu0 0.0
    %134 = vmatpush2.msra.mxu0 0.0
    %135 = vmatprep.mubr.f32.mxu0 0.0
    %136 = vmatmul.mubr.f32.gmra.mxu0 %v59
    %v137 = vpop.f32.mrf.mxu0
    %v138 = vadd.f32 %v50, %v137
    %v139 = vpop.f32.mrf.mxu0
    %v140 = vadd.f32 %v50, %v139
    %141 = vmatprep.mubr.f32.mxu0 0.0
    %142 = vmatmul.mubr.f32.gmra.mxu0 %v62
    %v143 = vpop.f32.mrf.mxu0
    %v144 = vadd.f32 %v55, %v143
    %v145 = vpop.f32.mrf.mxu0
    %v146 = vadd.f32 %v55, %v145
    %147 = vdwg.mxu0
    %150 = vrot.lane.b32.xlu0 %v138, 78
    %v151 = vpop.permute.xlu0 %150
    %152 = vrot.lane.b32.xlu0 %v144, 78
    %v153 = vpop.permute.xlu0 %152
    %v156 = vmax.f32 %v138, %v151
    %v157 = vmax.f32 %v144, %v153
    %160 = vrot.lane.b32.xlu0 %v140, 78
    %v161 = vpop.permute.xlu0 %160
    %162 = vrot.lane.b32.xlu0 %v146, 78
    %v163 = vpop.permute.xlu0 %162
    %v166 = vmax.f32 %v138, %v161
    %v167 = vmax.f32 %v140, %v161
    %v168 = vmax.f32 %v144, %v163
    %v169 = vmax.f32 %v146, %v163
    %174 = vrot.lane.b32.xlu0 %v166, 28
    %v175 = vpop.permute.xlu0 %174
    %176 = vrot.lane.b32.xlu0 %v167, 28
    %v177 = vpop.permute.xlu0 %176
    %178 = vrot.lane.b32.xlu0 %v168, 28
    %v179 = vpop.permute.xlu0 %178
    %180 = vrot.lane.b32.xlu0 %v169, 28
    %v181 = vpop.permute.xlu0 %180
    %vm182 = vcmask 228352
    %v183 = vsel %vm182, %v175, %v177
    %v184 = vsel %vm182, %v179, %v181
    %v187 = vmax.f32 %v156, %v183
    %v188 = vmax.f32 %v157, %v184
    %v189 = vld [vmem:[%s3] sm:$0xff]
    %v190 = vld [vmem:[%s3 + $0x8] sm:$0xff]
    %v191 = vld [vmem:[%s3 + $0x10] sm:$0xff]
    %v192 = vld [vmem:[%s3 + $0x18] sm:$0xff]
    %v193 = vld [vmem:[%s3 + $0x20] sm:$0xff]
    %v194 = vld [vmem:[%s3 + $0x28] sm:$0xff]
    %v195 = vld [vmem:[%s3 + $0x30] sm:$0xff]
    %v196 = vld [vmem:[%s3 + $0x38] sm:$0xff]
    %v197 = vld [vmem:[%s3 + $0x40] sm:$0xff]
    %v198 = vld [vmem:[%s3 + $0x48] sm:$0xff]
    %v199 = vld [vmem:[%s3 + $0x50] sm:$0xff]
    %v200 = vld [vmem:[%s3 + $0x58] sm:$0xff]
    %v201 = vld [vmem:[%s3 + $0x60] sm:$0x3]
    %v202 = vld [vmem:[%s3 + $0x68] sm:$0x3]
    %vm203 = vcmask 408576
    %v205 = vsel %vm203, %v187, 0
    %vm207 = vcmask 1041408
    %v209 = vsel %vm207, %v201, 0
    %v212 = vsel %vm207, %v202, 0
    %214 = vmatprep.subr.mxu0 0.0
    %215 = vmatpush1.msra.mxu0 0.0
    %216 = vmatprep.subr.mxu0 0.0
    %217 = vmatpush1.msra.mxu0 0.0
    %218 = vmatprep.subr.mxu0 0.0
    %219 = vmatpush1.msra.mxu0 0.0
    %220 = vmatprep.subr.mxu0 0.0
    %221 = vmatpush1.msra.mxu0 0.0
    %222 = vmatprep.subr.mxu0 0.0
    %223 = vmatpush1.msra.mxu0 0.0
    %224 = vmatprep.subr.mxu0 0.0
    %225 = vmatpush1.msra.mxu0 0.0
    %226 = vmatprep.subr.mxu0 0.0
    %227 = vmatpush1.msra.mxu0 0.0
    %228 = vmatprep.subr.mxu0 0.0
    %229 = vmatpush1.msra.mxu0 0.0
    %230 = vmatprep.subr.mxu0 0.0
    %231 = vmatpush1.msra.mxu0 0.0
    %232 = vmatprep.subr.mxu0 %v212
    %233 = vmatpush1.msra.mxu0 %v209
    %234 = vmatprep.subr.mxu0 %v200
    %235 = vmatpush1.msra.mxu0 %v199
    %236 = vmatprep.subr.mxu0 %v198
    %237 = vmatpush1.msra.mxu0 %v197
    %238 = vmatprep.subr.mxu0 %v196
    %239 = vmatpush1.msra.mxu0 %v195
    %240 = vmatprep.subr.mxu0 %v194
    %241 = vmatpush1.msra.mxu0 %v193
    %242 = vmatprep.subr.mxu0 %v192
    %243 = vmatpush1.msra.mxu0 %v191
    %244 = vmatprep.subr.mxu0 %v190
    %245 = vmatpush1.msra.mxu0 %v189
    %246 = vmatprep.subr.mxu0 0.0
    %247 = vmatpush2.msra.mxu0 0.0
    %248 = vmatprep.subr.mxu0 0.0
    %249 = vmatpush2.msra.mxu0 0.0
    %250 = vmatprep.subr.mxu0 0.0
    %251 = vmatpush2.msra.mxu0 0.0
    %252 = vmatprep.subr.mxu0 0.0
    %253 = vmatpush2.msra.mxu0 0.0
    %254 = vmatprep.subr.mxu0 0.0
    %255 = vmatpush2.msra.mxu0 0.0
    %256 = vmatprep.subr.mxu0 0.0
    %257 = vmatpush2.msra.mxu0 0.0
    %258 = vmatprep.subr.mxu0 0.0
    %259 = vmatpush2.msra.mxu0 0.0
    %260 = vmatprep.subr.mxu0 0.0
    %261 = vmatpush2.msra.mxu0 0.0
    %262 = vmatprep.subr.mxu0 0.0
    %263 = vmatpush2.msra.mxu0 0.0
    %264 = vmatprep.subr.mxu0 0.0
    %265 = vmatpush2.msra.mxu0 0.0
    %266 = vmatprep.subr.mxu0 0.0
    %267 = vmatpush2.msra.mxu0 0.0
    %268 = vmatprep.subr.mxu0 0.0
    %269 = vmatpush2.msra.mxu0 0.0
    %270 = vmatprep.subr.mxu0 0.0
    %271 = vmatpush2.msra.mxu0 0.0
    %272 = vmatprep.subr.mxu0 0.0
    %273 = vmatpush2.msra.mxu0 0.0
    %274 = vmatprep.subr.mxu0 0.0
    %275 = vmatpush2.msra.mxu0 0.0
    %276 = vmatprep.subr.mxu0 0.0
    %277 = vmatpush2.msra.mxu0 0.0
    %278 = vmatprep.mubr.f32.mxu0 0.0
    %279 = vmatmul.mubr.f32.gmra.mxu0 %v205
    %v280 = vpop.f32.mrf.mxu0
    %v281 = vadd.f32 0.0, %v280
    %v282 = vpop.f32.mrf.mxu0
    %v283 = vadd.f32 0.0, %v282
    %284 = vdwg.mxu0
    %v287 = vcombine.low %v281, %v283
    %v289 = vunpack.c.l.s4 1966171168
    %v290 = vunpack.c.0.s8 %v289
    %v291 = vlaneseq
    %v292 = vshrl.u32 %v291, 7
    %v293 = vsub.s32 %v290, %v292
    %v294 = vrot.slane %v287, %v293
    %v296 = vunpack.c.l.s4 1966171168
    %v297 = vunpack.c.0.s8 %v296
    %v298 = vlaneseq
    %v299 = vshrl.u32 %v298, 7
    %v300 = vsub.s32 %v297, %v299
    %v301 = vrot.slane %v294, %v300
    %v303 = vadd.f32 %v38, %v301
    %s304 = scalar_lea.vmem %s3, 112
    %v305 = vld [vmem:[%s304] sm:$0xff]
    %v306 = vld [vmem:[%s304 + $0x8] sm:$0xff]
    %v307 = vld [vmem:[%s304 + $0x10] sm:$0xff]
    %v308 = vld [vmem:[%s304 + $0x18] sm:$0xff]
    %v309 = vld [vmem:[%s304 + $0x20] sm:$0xff]
    %v310 = vld [vmem:[%s304 + $0x28] sm:$0xff]
    %v311 = vld [vmem:[%s304 + $0x30] sm:$0xff]
    %v312 = vld [vmem:[%s304 + $0x38] sm:$0xff]
    %v313 = vld [vmem:[%s304 + $0x40] sm:$0xff]
    %v314 = vld [vmem:[%s304 + $0x48] sm:$0xff]
    %v315 = vld [vmem:[%s304 + $0x50] sm:$0xff]
    %v316 = vld [vmem:[%s304 + $0x58] sm:$0xff]
    %v317 = vld [vmem:[%s304 + $0x60] sm:$0x3]
    %v318 = vld [vmem:[%s304 + $0x68] sm:$0x3]
    %v319 = vrot.slane %v187, 1
    %v320 = vsel %vm203, %v319, 0
    %v323 = vsel %vm207, %v317, 0
    %v326 = vsel %vm207, %v318, 0
    %328 = vmatprep.subr.mxu0 0.0
    %329 = vmatpush1.msra.mxu0 0.0
    %330 = vmatprep.subr.mxu0 0.0
    %331 = vmatpush1.msra.mxu0 0.0
    %332 = vmatprep.subr.mxu0 0.0
    %333 = vmatpush1.msra.mxu0 0.0
    %334 = vmatprep.subr.mxu0 0.0
    %335 = vmatpush1.msra.mxu0 0.0
    %336 = vmatprep.subr.mxu0 0.0
    %337 = vmatpush1.msra.mxu0 0.0
    %338 = vmatprep.subr.mxu0 0.0
    %339 = vmatpush1.msra.mxu0 0.0
    %340 = vmatprep.subr.mxu0 0.0
    %341 = vmatpush1.msra.mxu0 0.0
    %342 = vmatprep.subr.mxu0 0.0
    %343 = vmatpush1.msra.mxu0 0.0
    %344 = vmatprep.subr.mxu0 0.0
    %345 = vmatpush1.msra.mxu0 0.0
    %346 = vmatprep.subr.mxu0 %v326
    %347 = vmatpush1.msra.mxu0 %v323
    %348 = vmatprep.subr.mxu0 %v316
    %349 = vmatpush1.msra.mxu0 %v315
    %350 = vmatprep.subr.mxu0 %v314
    %351 = vmatpush1.msra.mxu0 %v313
    %352 = vmatprep.subr.mxu0 %v312
    %353 = vmatpush1.msra.mxu0 %v311
    %354 = vmatprep.subr.mxu0 %v310
    %355 = vmatpush1.msra.mxu0 %v309
    %356 = vmatprep.subr.mxu0 %v308
    %357 = vmatpush1.msra.mxu0 %v307
    %358 = vmatprep.subr.mxu0 %v306
    %359 = vmatpush1.msra.mxu0 %v305
    %360 = vmatprep.subr.mxu0 0.0
    %361 = vmatpush2.msra.mxu0 0.0
    %362 = vmatprep.subr.mxu0 0.0
    %363 = vmatpush2.msra.mxu0 0.0
    %364 = vmatprep.subr.mxu0 0.0
    %365 = vmatpush2.msra.mxu0 0.0
    %366 = vmatprep.subr.mxu0 0.0
    %367 = vmatpush2.msra.mxu0 0.0
    %368 = vmatprep.subr.mxu0 0.0
    %369 = vmatpush2.msra.mxu0 0.0
    %370 = vmatprep.subr.mxu0 0.0
    %371 = vmatpush2.msra.mxu0 0.0
    %372 = vmatprep.subr.mxu0 0.0
    %373 = vmatpush2.msra.mxu0 0.0
    %374 = vmatprep.subr.mxu0 0.0
    %375 = vmatpush2.msra.mxu0 0.0
    %376 = vmatprep.subr.mxu0 0.0
    %377 = vmatpush2.msra.mxu0 0.0
    %378 = vmatprep.subr.mxu0 0.0
    %379 = vmatpush2.msra.mxu0 0.0
    %380 = vmatprep.subr.mxu0 0.0
    %381 = vmatpush2.msra.mxu0 0.0
    %382 = vmatprep.subr.mxu0 0.0
    %383 = vmatpush2.msra.mxu0 0.0
    %384 = vmatprep.subr.mxu0 0.0
    %385 = vmatpush2.msra.mxu0 0.0
    %386 = vmatprep.subr.mxu0 0.0
    %387 = vmatpush2.msra.mxu0 0.0
    %388 = vmatprep.subr.mxu0 0.0
    %389 = vmatpush2.msra.mxu0 0.0
    %390 = vmatprep.subr.mxu0 0.0
    %391 = vmatpush2.msra.mxu0 0.0
    %392 = vmatprep.mubr.f32.mxu0 0.0
    %393 = vmatmul.mubr.f32.gmra.mxu0 %v320
    %v394 = vpop.f32.mrf.mxu0
    %v395 = vadd.f32 0.0, %v394
    %v396 = vpop.f32.mrf.mxu0
    %v397 = vadd.f32 0.0, %v396
    %398 = vdwg.mxu0
    %v401 = vcombine.low %v395, %v397
    %v403 = vunpack.c.l.s4 1966171168
    %v404 = vunpack.c.0.s8 %v403
    %v405 = vlaneseq
    %v406 = vshrl.u32 %v405, 7
    %v407 = vsub.s32 %v404, %v406
    %v408 = vrot.slane %v401, %v407
    %v410 = vunpack.c.l.s4 1966171168
    %v411 = vunpack.c.0.s8 %v410
    %v412 = vlaneseq
    %v413 = vshrl.u32 %v412, 7
    %v414 = vsub.s32 %v411, %v413
    %v415 = vrot.slane %v408, %v414
    %v417 = vadd.f32 %v303, %v415
    %s418 = scalar_lea.vmem %s3, 224
    %v419 = vld [vmem:[%s418] sm:$0xff]
    %v420 = vld [vmem:[%s418 + $0x8] sm:$0xff]
    %v421 = vld [vmem:[%s418 + $0x10] sm:$0xff]
    %v422 = vld [vmem:[%s418 + $0x18] sm:$0xff]
    %v423 = vld [vmem:[%s418 + $0x20] sm:$0xff]
    %v424 = vld [vmem:[%s418 + $0x28] sm:$0xff]
    %v425 = vld [vmem:[%s418 + $0x30] sm:$0xff]
    %v426 = vld [vmem:[%s418 + $0x38] sm:$0xff]
    %v427 = vld [vmem:[%s418 + $0x40] sm:$0xff]
    %v428 = vld [vmem:[%s418 + $0x48] sm:$0xff]
    %v429 = vld [vmem:[%s418 + $0x50] sm:$0xff]
    %v430 = vld [vmem:[%s418 + $0x58] sm:$0xff]
    %v431 = vld [vmem:[%s418 + $0x60] sm:$0x3]
    %v432 = vld [vmem:[%s418 + $0x68] sm:$0x3]
    %v433 = vrot.slane %v187, 2
    %v434 = vsel %vm203, %v433, 0
    %v437 = vsel %vm207, %v431, 0
    %v440 = vsel %vm207, %v432, 0
    %442 = vmatprep.subr.mxu0 0.0
    %443 = vmatpush1.msra.mxu0 0.0
    %444 = vmatprep.subr.mxu0 0.0
    %445 = vmatpush1.msra.mxu0 0.0
    %446 = vmatprep.subr.mxu0 0.0
    %447 = vmatpush1.msra.mxu0 0.0
    %448 = vmatprep.subr.mxu0 0.0
    %449 = vmatpush1.msra.mxu0 0.0
    %450 = vmatprep.subr.mxu0 0.0
    %451 = vmatpush1.msra.mxu0 0.0
    %452 = vmatprep.subr.mxu0 0.0
    %453 = vmatpush1.msra.mxu0 0.0
    %454 = vmatprep.subr.mxu0 0.0
    %455 = vmatpush1.msra.mxu0 0.0
    %456 = vmatprep.subr.mxu0 0.0
    %457 = vmatpush1.msra.mxu0 0.0
    %458 = vmatprep.subr.mxu0 0.0
    %459 = vmatpush1.msra.mxu0 0.0
    %460 = vmatprep.subr.mxu0 %v440
    %461 = vmatpush1.msra.mxu0 %v437
    %462 = vmatprep.subr.mxu0 %v430
    %463 = vmatpush1.msra.mxu0 %v429
    %464 = vmatprep.subr.mxu0 %v428
    %465 = vmatpush1.msra.mxu0 %v427
    %466 = vmatprep.subr.mxu0 %v426
    %467 = vmatpush1.msra.mxu0 %v425
    %468 = vmatprep.subr.mxu0 %v424
    %469 = vmatpush1.msra.mxu0 %v423
    %470 = vmatprep.subr.mxu0 %v422
    %471 = vmatpush1.msra.mxu0 %v421
    %472 = vmatprep.subr.mxu0 %v420
    %473 = vmatpush1.msra.mxu0 %v419
    %474 = vmatprep.subr.mxu0 0.0
    %475 = vmatpush2.msra.mxu0 0.0
    %476 = vmatprep.subr.mxu0 0.0
    %477 = vmatpush2.msra.mxu0 0.0
    %478 = vmatprep.subr.mxu0 0.0
    %479 = vmatpush2.msra.mxu0 0.0
    %480 = vmatprep.subr.mxu0 0.0
    %481 = vmatpush2.msra.mxu0 0.0
    %482 = vmatprep.subr.mxu0 0.0
    %483 = vmatpush2.msra.mxu0 0.0
    %484 = vmatprep.subr.mxu0 0.0
    %485 = vmatpush2.msra.mxu0 0.0
    %486 = vmatprep.subr.mxu0 0.0
    %487 = vmatpush2.msra.mxu0 0.0
    %488 = vmatprep.subr.mxu0 0.0
    %489 = vmatpush2.msra.mxu0 0.0
    %490 = vmatprep.subr.mxu0 0.0
    %491 = vmatpush2.msra.mxu0 0.0
    %492 = vmatprep.subr.mxu0 0.0
    %493 = vmatpush2.msra.mxu0 0.0
    %494 = vmatprep.subr.mxu0 0.0
    %495 = vmatpush2.msra.mxu0 0.0
    %496 = vmatprep.subr.mxu0 0.0
    %497 = vmatpush2.msra.mxu0 0.0
    %498 = vmatprep.subr.mxu0 0.0
    %499 = vmatpush2.msra.mxu0 0.0
    %500 = vmatprep.subr.mxu0 0.0
    %501 = vmatpush2.msra.mxu0 0.0
    %502 = vmatprep.subr.mxu0 0.0
    %503 = vmatpush2.msra.mxu0 0.0
    %504 = vmatprep.subr.mxu0 0.0
    %505 = vmatpush2.msra.mxu0 0.0
    %506 = vmatprep.mubr.f32.mxu0 0.0
    %507 = vmatmul.mubr.f32.gmra.mxu0 %v434
    %v508 = vpop.f32.mrf.mxu0
    %v509 = vadd.f32 0.0, %v508
    %v510 = vpop.f32.mrf.mxu0
    %v511 = vadd.f32 0.0, %v510
    %512 = vdwg.mxu0
    %v515 = vcombine.low %v509, %v511
    %v517 = vunpack.c.l.s4 1966171168
    %v518 = vunpack.c.0.s8 %v517
    %v519 = vlaneseq
    %v520 = vshrl.u32 %v519, 7
    %v521 = vsub.s32 %v518, %v520
    %v522 = vrot.slane %v515, %v521
    %v524 = vunpack.c.l.s4 1966171168
    %v525 = vunpack.c.0.s8 %v524
    %v526 = vlaneseq
    %v527 = vshrl.u32 %v526, 7
    %v528 = vsub.s32 %v525, %v527
    %v529 = vrot.slane %v522, %v528
    %v531 = vadd.f32 %v417, %v529
    %s532 = scalar_lea.vmem %s3, 336
    %v533 = vld [vmem:[%s532] sm:$0xff]
    %v534 = vld [vmem:[%s532 + $0x8] sm:$0xff]
    %v535 = vld [vmem:[%s532 + $0x10] sm:$0xff]
    %v536 = vld [vmem:[%s532 + $0x18] sm:$0xff]
    %v537 = vld [vmem:[%s532 + $0x20] sm:$0xff]
    %v538 = vld [vmem:[%s532 + $0x28] sm:$0xff]
    %v539 = vld [vmem:[%s532 + $0x30] sm:$0xff]
    %v540 = vld [vmem:[%s532 + $0x38] sm:$0xff]
    %v541 = vld [vmem:[%s532 + $0x40] sm:$0xff]
    %v542 = vld [vmem:[%s532 + $0x48] sm:$0xff]
    %v543 = vld [vmem:[%s532 + $0x50] sm:$0xff]
    %v544 = vld [vmem:[%s532 + $0x58] sm:$0xff]
    %v545 = vld [vmem:[%s532 + $0x60] sm:$0x3]
    %v546 = vld [vmem:[%s532 + $0x68] sm:$0x3]
    %v547 = vrot.slane %v187, 3
    %v548 = vsel %vm203, %v547, 0
    %v551 = vsel %vm207, %v545, 0
    %v554 = vsel %vm207, %v546, 0
    %556 = vmatprep.subr.mxu0 0.0
    %557 = vmatpush1.msra.mxu0 0.0
    %558 = vmatprep.subr.mxu0 0.0
    %559 = vmatpush1.msra.mxu0 0.0
    %560 = vmatprep.subr.mxu0 0.0
    %561 = vmatpush1.msra.mxu0 0.0
    %562 = vmatprep.subr.mxu0 0.0
    %563 = vmatpush1.msra.mxu0 0.0
    %564 = vmatprep.subr.mxu0 0.0
    %565 = vmatpush1.msra.mxu0 0.0
    %566 = vmatprep.subr.mxu0 0.0
    %567 = vmatpush1.msra.mxu0 0.0
    %568 = vmatprep.subr.mxu0 0.0
    %569 = vmatpush1.msra.mxu0 0.0
    %570 = vmatprep.subr.mxu0 0.0
    %571 = vmatpush1.msra.mxu0 0.0
    %572 = vmatprep.subr.mxu0 0.0
    %573 = vmatpush1.msra.mxu0 0.0
    %574 = vmatprep.subr.mxu0 %v554
    %575 = vmatpush1.msra.mxu0 %v551
    %576 = vmatprep.subr.mxu0 %v544
    %577 = vmatpush1.msra.mxu0 %v543
    %578 = vmatprep.subr.mxu0 %v542
    %579 = vmatpush1.msra.mxu0 %v541
    %580 = vmatprep.subr.mxu0 %v540
    %581 = vmatpush1.msra.mxu0 %v539
    %582 = vmatprep.subr.mxu0 %v538
    %583 = vmatpush1.msra.mxu0 %v537
    %584 = vmatprep.subr.mxu0 %v536
    %585 = vmatpush1.msra.mxu0 %v535
    %586 = vmatprep.subr.mxu0 %v534
    %587 = vmatpush1.msra.mxu0 %v533
    %588 = vmatprep.subr.mxu0 0.0
    %589 = vmatpush2.msra.mxu0 0.0
    %590 = vmatprep.subr.mxu0 0.0
    %591 = vmatpush2.msra.mxu0 0.0
    %592 = vmatprep.subr.mxu0 0.0
    %593 = vmatpush2.msra.mxu0 0.0
    %594 = vmatprep.subr.mxu0 0.0
    %595 = vmatpush2.msra.mxu0 0.0
    %596 = vmatprep.subr.mxu0 0.0
    %597 = vmatpush2.msra.mxu0 0.0
    %598 = vmatprep.subr.mxu0 0.0
    %599 = vmatpush2.msra.mxu0 0.0
    %600 = vmatprep.subr.mxu0 0.0
    %601 = vmatpush2.msra.mxu0 0.0
    %602 = vmatprep.subr.mxu0 0.0
    %603 = vmatpush2.msra.mxu0 0.0
    %604 = vmatprep.subr.mxu0 0.0
    %605 = vmatpush2.msra.mxu0 0.0
    %606 = vmatprep.subr.mxu0 0.0
    %607 = vmatpush2.msra.mxu0 0.0
    %608 = vmatprep.subr.mxu0 0.0
    %609 = vmatpush2.msra.mxu0 0.0
    %610 = vmatprep.subr.mxu0 0.0
    %611 = vmatpush2.msra.mxu0 0.0
    %612 = vmatprep.subr.mxu0 0.0
    %613 = vmatpush2.msra.mxu0 0.0
    %614 = vmatprep.subr.mxu0 0.0
    %615 = vmatpush2.msra.mxu0 0.0
    %616 = vmatprep.subr.mxu0 0.0
    %617 = vmatpush2.msra.mxu0 0.0
    %618 = vmatprep.subr.mxu0 0.0
    %619 = vmatpush2.msra.mxu0 0.0
    %620 = vmatprep.mubr.f32.mxu0 0.0
    %621 = vmatmul.mubr.f32.gmra.mxu0 %v548
    %v622 = vpop.f32.mrf.mxu0
    %v623 = vadd.f32 0.0, %v622
    %v624 = vpop.f32.mrf.mxu0
    %v625 = vadd.f32 0.0, %v624
    %626 = vdwg.mxu0
    %v629 = vcombine.low %v623, %v625
    %v631 = vunpack.c.l.s4 1966171168
    %v632 = vunpack.c.0.s8 %v631
    %v633 = vlaneseq
    %v634 = vshrl.u32 %v633, 7
    %v635 = vsub.s32 %v632, %v634
    %v636 = vrot.slane %v629, %v635
    %v638 = vunpack.c.l.s4 1966171168
    %v639 = vunpack.c.0.s8 %v638
    %v640 = vlaneseq
    %v641 = vshrl.u32 %v640, 7
    %v642 = vsub.s32 %v639, %v641
    %v643 = vrot.slane %v636, %v642
    %v645 = vadd.f32 %v531, %v643
    %s646 = scalar_lea.vmem %s3, 448
    %v647 = vld [vmem:[%s646] sm:$0xff]
    %v648 = vld [vmem:[%s646 + $0x8] sm:$0xff]
    %v649 = vld [vmem:[%s646 + $0x10] sm:$0xff]
    %v650 = vld [vmem:[%s646 + $0x18] sm:$0xff]
    %v651 = vld [vmem:[%s646 + $0x20] sm:$0xff]
    %v652 = vld [vmem:[%s646 + $0x28] sm:$0xff]
    %v653 = vld [vmem:[%s646 + $0x30] sm:$0xff]
    %v654 = vld [vmem:[%s646 + $0x38] sm:$0xff]
    %v655 = vld [vmem:[%s646 + $0x40] sm:$0xff]
    %v656 = vld [vmem:[%s646 + $0x48] sm:$0xff]
    %v657 = vld [vmem:[%s646 + $0x50] sm:$0xff]
    %v658 = vld [vmem:[%s646 + $0x58] sm:$0xff]
    %v659 = vld [vmem:[%s646 + $0x60] sm:$0x3]
    %v660 = vld [vmem:[%s646 + $0x68] sm:$0x3]
    %v661 = vrot.slane %v187, 4
    %v662 = vsel %vm203, %v661, 0
    %v665 = vsel %vm207, %v659, 0
    %v668 = vsel %vm207, %v660, 0
    %670 = vmatprep.subr.mxu0 0.0
    %671 = vmatpush1.msra.mxu0 0.0
    %672 = vmatprep.subr.mxu0 0.0
    %673 = vmatpush1.msra.mxu0 0.0
    %674 = vmatprep.subr.mxu0 0.0
    %675 = vmatpush1.msra.mxu0 0.0
    %676 = vmatprep.subr.mxu0 0.0
    %677 = vmatpush1.msra.mxu0 0.0
    %678 = vmatprep.subr.mxu0 0.0
    %679 = vmatpush1.msra.mxu0 0.0
    %680 = vmatprep.subr.mxu0 0.0
    %681 = vmatpush1.msra.mxu0 0.0
    %682 = vmatprep.subr.mxu0 0.0
    %683 = vmatpush1.msra.mxu0 0.0
    %684 = vmatprep.subr.mxu0 0.0
    %685 = vmatpush1.msra.mxu0 0.0
    %686 = vmatprep.subr.mxu0 0.0
    %687 = vmatpush1.msra.mxu0 0.0
    %688 = vmatprep.subr.mxu0 %v668
    %689 = vmatpush1.msra.mxu0 %v665
    %690 = vmatprep.subr.mxu0 %v658
    %691 = vmatpush1.msra.mxu0 %v657
    %692 = vmatprep.subr.mxu0 %v656
    %693 = vmatpush1.msra.mxu0 %v655
    %694 = vmatprep.subr.mxu0 %v654
    %695 = vmatpush1.msra.mxu0 %v653
    %696 = vmatprep.subr.mxu0 %v652
    %697 = vmatpush1.msra.mxu0 %v651
    %698 = vmatprep.subr.mxu0 %v650
    %699 = vmatpush1.msra.mxu0 %v649
    %700 = vmatprep.subr.mxu0 %v648
    %701 = vmatpush1.msra.mxu0 %v647
    %702 = vmatprep.subr.mxu0 0.0
    %703 = vmatpush2.msra.mxu0 0.0
    %704 = vmatprep.subr.mxu0 0.0
    %705 = vmatpush2.msra.mxu0 0.0
    %706 = vmatprep.subr.mxu0 0.0
    %707 = vmatpush2.msra.mxu0 0.0
    %708 = vmatprep.subr.mxu0 0.0
    %709 = vmatpush2.msra.mxu0 0.0
    %710 = vmatprep.subr.mxu0 0.0
    %711 = vmatpush2.msra.mxu0 0.0
    %712 = vmatprep.subr.mxu0 0.0
    %713 = vmatpush2.msra.mxu0 0.0
    %714 = vmatprep.subr.mxu0 0.0
    %715 = vmatpush2.msra.mxu0 0.0
    %716 = vmatprep.subr.mxu0 0.0
    %717 = vmatpush2.msra.mxu0 0.0
    %718 = vmatprep.subr.mxu0 0.0
    %719 = vmatpush2.msra.mxu0 0.0
    %720 = vmatprep.subr.mxu0 0.0
    %721 = vmatpush2.msra.mxu0 0.0
    %722 = vmatprep.subr.mxu0 0.0
    %723 = vmatpush2.msra.mxu0 0.0
    %724 = vmatprep.subr.mxu0 0.0
    %725 = vmatpush2.msra.mxu0 0.0
    %726 = vmatprep.subr.mxu0 0.0
    %727 = vmatpush2.msra.mxu0 0.0
    %728 = vmatprep.subr.mxu0 0.0
    %729 = vmatpush2.msra.mxu0 0.0
    %730 = vmatprep.subr.mxu0 0.0
    %731 = vmatpush2.msra.mxu0 0.0
    %732 = vmatprep.subr.mxu0 0.0
    %733 = vmatpush2.msra.mxu0 0.0
    %734 = vmatprep.mubr.f32.mxu0 0.0
    %735 = vmatmul.mubr.f32.gmra.mxu0 %v662
    %v736 = vpop.f32.mrf.mxu0
    %v737 = vadd.f32 0.0, %v736
    %v738 = vpop.f32.mrf.mxu0
    %v739 = vadd.f32 0.0, %v738
    %740 = vdwg.mxu0
    %v743 = vcombine.low %v737, %v739
    %v745 = vunpack.c.l.s4 1966171168
    %v746 = vunpack.c.0.s8 %v745
    %v747 = vlaneseq
    %v748 = vshrl.u32 %v747, 7
    %v749 = vsub.s32 %v746, %v748
    %v750 = vrot.slane %v743, %v749
    %v752 = vunpack.c.l.s4 1966171168
    %v753 = vunpack.c.0.s8 %v752
    %v754 = vlaneseq
    %v755 = vshrl.u32 %v754, 7
    %v756 = vsub.s32 %v753, %v755
    %v757 = vrot.slane %v750, %v756
    %v759 = vadd.f32 %v645, %v757
    %s760 = scalar_lea.vmem %s3, 560
    %v761 = vld [vmem:[%s760] sm:$0xff]
    %v762 = vld [vmem:[%s760 + $0x8] sm:$0xff]
    %v763 = vld [vmem:[%s760 + $0x10] sm:$0xff]
    %v764 = vld [vmem:[%s760 + $0x18] sm:$0xff]
    %v765 = vld [vmem:[%s760 + $0x20] sm:$0xff]
    %v766 = vld [vmem:[%s760 + $0x28] sm:$0xff]
    %v767 = vld [vmem:[%s760 + $0x30] sm:$0xff]
    %v768 = vld [vmem:[%s760 + $0x38] sm:$0xff]
    %v769 = vld [vmem:[%s760 + $0x40] sm:$0xff]
    %v770 = vld [vmem:[%s760 + $0x48] sm:$0xff]
    %v771 = vld [vmem:[%s760 + $0x50] sm:$0xff]
    %v772 = vld [vmem:[%s760 + $0x58] sm:$0xff]
    %v773 = vld [vmem:[%s760 + $0x60] sm:$0x3]
    %v774 = vld [vmem:[%s760 + $0x68] sm:$0x3]
    %v775 = vrot.slane %v187, 5
    %v776 = vsel %vm203, %v775, 0
    %v779 = vsel %vm207, %v773, 0
    %v782 = vsel %vm207, %v774, 0
    %784 = vmatprep.subr.mxu0 0.0
    %785 = vmatpush1.msra.mxu0 0.0
    %786 = vmatprep.subr.mxu0 0.0
    %787 = vmatpush1.msra.mxu0 0.0
    %788 = vmatprep.subr.mxu0 0.0
    %789 = vmatpush1.msra.mxu0 0.0
    %790 = vmatprep.subr.mxu0 0.0
    %791 = vmatpush1.msra.mxu0 0.0
    %792 = vmatprep.subr.mxu0 0.0
    %793 = vmatpush1.msra.mxu0 0.0
    %794 = vmatprep.subr.mxu0 0.0
    %795 = vmatpush1.msra.mxu0 0.0
    %796 = vmatprep.subr.mxu0 0.0
    %797 = vmatpush1.msra.mxu0 0.0
    %798 = vmatprep.subr.mxu0 0.0
    %799 = vmatpush1.msra.mxu0 0.0
    %800 = vmatprep.subr.mxu0 0.0
    %801 = vmatpush1.msra.mxu0 0.0
    %802 = vmatprep.subr.mxu0 %v782
    %803 = vmatpush1.msra.mxu0 %v779
    %804 = vmatprep.subr.mxu0 %v772
    %805 = vmatpush1.msra.mxu0 %v771
    %806 = vmatprep.subr.mxu0 %v770
    %807 = vmatpush1.msra.mxu0 %v769
    %808 = vmatprep.subr.mxu0 %v768
    %809 = vmatpush1.msra.mxu0 %v767
    %810 = vmatprep.subr.mxu0 %v766
    %811 = vmatpush1.msra.mxu0 %v765
    %812 = vmatprep.subr.mxu0 %v764
    %813 = vmatpush1.msra.mxu0 %v763
    %814 = vmatprep.subr.mxu0 %v762
    %815 = vmatpush1.msra.mxu0 %v761
    %816 = vmatprep.subr.mxu0 0.0
    %817 = vmatpush2.msra.mxu0 0.0
    %818 = vmatprep.subr.mxu0 0.0
    %819 = vmatpush2.msra.mxu0 0.0
    %820 = vmatprep.subr.mxu0 0.0
    %821 = vmatpush2.msra.mxu0 0.0
    %822 = vmatprep.subr.mxu0 0.0
    %823 = vmatpush2.msra.mxu0 0.0
    %824 = vmatprep.subr.mxu0 0.0
    %825 = vmatpush2.msra.mxu0 0.0
    %826 = vmatprep.subr.mxu0 0.0
    %827 = vmatpush2.msra.mxu0 0.0
    %828 = vmatprep.subr.mxu0 0.0
    %829 = vmatpush2.msra.mxu0 0.0
    %830 = vmatprep.subr.mxu0 0.0
    %831 = vmatpush2.msra.mxu0 0.0
    %832 = vmatprep.subr.mxu0 0.0
    %833 = vmatpush2.msra.mxu0 0.0
    %834 = vmatprep.subr.mxu0 0.0
    %835 = vmatpush2.msra.mxu0 0.0
    %836 = vmatprep.subr.mxu0 0.0
    %837 = vmatpush2.msra.mxu0 0.0
    %838 = vmatprep.subr.mxu0 0.0
    %839 = vmatpush2.msra.mxu0 0.0
    %840 = vmatprep.subr.mxu0 0.0
    %841 = vmatpush2.msra.mxu0 0.0
    %842 = vmatprep.subr.mxu0 0.0
    %843 = vmatpush2.msra.mxu0 0.0
    %844 = vmatprep.subr.mxu0 0.0
    %845 = vmatpush2.msra.mxu0 0.0
    %846 = vmatprep.subr.mxu0 0.0
    %847 = vmatpush2.msra.mxu0 0.0
    %848 = vmatprep.mubr.f32.mxu0 0.0
    %849 = vmatmul.mubr.f32.gmra.mxu0 %v776
    %v850 = vpop.f32.mrf.mxu0
    %v851 = vadd.f32 0.0, %v850
    %v852 = vpop.f32.mrf.mxu0
    %v853 = vadd.f32 0.0, %v852
    %854 = vdwg.mxu0
    %v857 = vcombine.low %v851, %v853
    %v859 = vunpack.c.l.s4 1966171168
    %v860 = vunpack.c.0.s8 %v859
    %v861 = vlaneseq
    %v862 = vshrl.u32 %v861, 7
    %v863 = vsub.s32 %v860, %v862
    %v864 = vrot.slane %v857, %v863
    %v866 = vunpack.c.l.s4 1966171168
    %v867 = vunpack.c.0.s8 %v866
    %v868 = vlaneseq
    %v869 = vshrl.u32 %v868, 7
    %v870 = vsub.s32 %v867, %v869
    %v871 = vrot.slane %v864, %v870
    %v873 = vadd.f32 %v759, %v871
    %s874 = scalar_lea.vmem %s3, 672
    %v875 = vld [vmem:[%s874] sm:$0xff]
    %v876 = vld [vmem:[%s874 + $0x8] sm:$0xff]
    %v877 = vld [vmem:[%s874 + $0x10] sm:$0xff]
    %v878 = vld [vmem:[%s874 + $0x18] sm:$0xff]
    %v879 = vld [vmem:[%s874 + $0x20] sm:$0xff]
    %v880 = vld [vmem:[%s874 + $0x28] sm:$0xff]
    %v881 = vld [vmem:[%s874 + $0x30] sm:$0xff]
    %v882 = vld [vmem:[%s874 + $0x38] sm:$0xff]
    %v883 = vld [vmem:[%s874 + $0x40] sm:$0xff]
    %v884 = vld [vmem:[%s874 + $0x48] sm:$0xff]
    %v885 = vld [vmem:[%s874 + $0x50] sm:$0xff]
    %v886 = vld [vmem:[%s874 + $0x58] sm:$0xff]
    %v887 = vld [vmem:[%s874 + $0x60] sm:$0x3]
    %v888 = vld [vmem:[%s874 + $0x68] sm:$0x3]
    %v889 = vrot.slane %v187, 6
    %v890 = vsel %vm203, %v889, 0
    %v893 = vsel %vm207, %v887, 0
    %v896 = vsel %vm207, %v888, 0
    %898 = vmatprep.subr.mxu0 0.0
    %899 = vmatpush1.msra.mxu0 0.0
    %900 = vmatprep.subr.mxu0 0.0
    %901 = vmatpush1.msra.mxu0 0.0
    %902 = vmatprep.subr.mxu0 0.0
    %903 = vmatpush1.msra.mxu0 0.0
    %904 = vmatprep.subr.mxu0 0.0
    %905 = vmatpush1.msra.mxu0 0.0
    %906 = vmatprep.subr.mxu0 0.0
    %907 = vmatpush1.msra.mxu0 0.0
    %908 = vmatprep.subr.mxu0 0.0
    %909 = vmatpush1.msra.mxu0 0.0
    %910 = vmatprep.subr.mxu0 0.0
    %911 = vmatpush1.msra.mxu0 0.0
    %912 = vmatprep.subr.mxu0 0.0
    %913 = vmatpush1.msra.mxu0 0.0
    %914 = vmatprep.subr.mxu0 0.0
    %915 = vmatpush1.msra.mxu0 0.0
    %916 = vmatprep.subr.mxu0 %v896
    %917 = vmatpush1.msra.mxu0 %v893
    %918 = vmatprep.subr.mxu0 %v886
    %919 = vmatpush1.msra.mxu0 %v885
    %920 = vmatprep.subr.mxu0 %v884
    %921 = vmatpush1.msra.mxu0 %v883
    %922 = vmatprep.subr.mxu0 %v882
    %923 = vmatpush1.msra.mxu0 %v881
    %924 = vmatprep.subr.mxu0 %v880
    %925 = vmatpush1.msra.mxu0 %v879
    %926 = vmatprep.subr.mxu0 %v878
    %927 = vmatpush1.msra.mxu0 %v877
    %928 = vmatprep.subr.mxu0 %v876
    %929 = vmatpush1.msra.mxu0 %v875
    %930 = vmatprep.subr.mxu0 0.0
    %931 = vmatpush2.msra.mxu0 0.0
    %932 = vmatprep.subr.mxu0 0.0
    %933 = vmatpush2.msra.mxu0 0.0
    %934 = vmatprep.subr.mxu0 0.0
    %935 = vmatpush2.msra.mxu0 0.0
    %936 = vmatprep.subr.mxu0 0.0
    %937 = vmatpush2.msra.mxu0 0.0
    %938 = vmatprep.subr.mxu0 0.0
    %939 = vmatpush2.msra.mxu0 0.0
    %940 = vmatprep.subr.mxu0 0.0
    %941 = vmatpush2.msra.mxu0 0.0
    %942 = vmatprep.subr.mxu0 0.0
    %943 = vmatpush2.msra.mxu0 0.0
    %944 = vmatprep.subr.mxu0 0.0
    %945 = vmatpush2.msra.mxu0 0.0
    %946 = vmatprep.subr.mxu0 0.0
    %947 = vmatpush2.msra.mxu0 0.0
    %948 = vmatprep.subr.mxu0 0.0
    %949 = vmatpush2.msra.mxu0 0.0
    %950 = vmatprep.subr.mxu0 0.0
    %951 = vmatpush2.msra.mxu0 0.0
    %952 = vmatprep.subr.mxu0 0.0
    %953 = vmatpush2.msra.mxu0 0.0
    %954 = vmatprep.subr.mxu0 0.0
    %955 = vmatpush2.msra.mxu0 0.0
    %956 = vmatprep.subr.mxu0 0.0
    %957 = vmatpush2.msra.mxu0 0.0
    %958 = vmatprep.subr.mxu0 0.0
    %959 = vmatpush2.msra.mxu0 0.0
    %960 = vmatprep.subr.mxu0 0.0
    %961 = vmatpush2.msra.mxu0 0.0
    %962 = vmatprep.mubr.f32.mxu0 0.0
    %963 = vmatmul.mubr.f32.gmra.mxu0 %v890
    %v964 = vpop.f32.mrf.mxu0
    %v965 = vadd.f32 0.0, %v964
    %v966 = vpop.f32.mrf.mxu0
    %v967 = vadd.f32 0.0, %v966
    %968 = vdwg.mxu0
    %v971 = vcombine.low %v965, %v967
    %v973 = vunpack.c.l.s4 1966171168
    %v974 = vunpack.c.0.s8 %v973
    %v975 = vlaneseq
    %v976 = vshrl.u32 %v975, 7
    %v977 = vsub.s32 %v974, %v976
    %v978 = vrot.slane %v971, %v977
    %v980 = vunpack.c.l.s4 1966171168
    %v981 = vunpack.c.0.s8 %v980
    %v982 = vlaneseq
    %v983 = vshrl.u32 %v982, 7
    %v984 = vsub.s32 %v981, %v983
    %v985 = vrot.slane %v978, %v984
    %v987 = vadd.f32 %v873, %v985
    %s988 = scalar_lea.vmem %s3, 784
    %v989 = vld [vmem:[%s988] sm:$0xff]
    %v990 = vld [vmem:[%s988 + $0x8] sm:$0xff]
    %v991 = vld [vmem:[%s988 + $0x10] sm:$0xff]
    %v992 = vld [vmem:[%s988 + $0x18] sm:$0xff]
    %v993 = vld [vmem:[%s988 + $0x20] sm:$0xff]
    %v994 = vld [vmem:[%s988 + $0x28] sm:$0xff]
    %v995 = vld [vmem:[%s988 + $0x30] sm:$0xff]
    %v996 = vld [vmem:[%s988 + $0x38] sm:$0xff]
    %v997 = vld [vmem:[%s988 + $0x40] sm:$0xff]
    %v998 = vld [vmem:[%s988 + $0x48] sm:$0xff]
    %v999 = vld [vmem:[%s988 + $0x50] sm:$0xff]
    %v1000 = vld [vmem:[%s988 + $0x58] sm:$0xff]
    %v1001 = vld [vmem:[%s988 + $0x60] sm:$0x3]
    %v1002 = vld [vmem:[%s988 + $0x68] sm:$0x3]
    %v1003 = vrot.slane %v187, 7
    %v1004 = vsel %vm203, %v1003, 0
    %v1007 = vsel %vm207, %v1001, 0
    %v1010 = vsel %vm207, %v1002, 0
    %1012 = vmatprep.subr.mxu0 0.0
    %1013 = vmatpush1.msra.mxu0 0.0
    %1014 = vmatprep.subr.mxu0 0.0
    %1015 = vmatpush1.msra.mxu0 0.0
    %1016 = vmatprep.subr.mxu0 0.0
    %1017 = vmatpush1.msra.mxu0 0.0
    %1018 = vmatprep.subr.mxu0 0.0
    %1019 = vmatpush1.msra.mxu0 0.0
    %1020 = vmatprep.subr.mxu0 0.0
    %1021 = vmatpush1.msra.mxu0 0.0
    %1022 = vmatprep.subr.mxu0 0.0
    %1023 = vmatpush1.msra.mxu0 0.0
    %1024 = vmatprep.subr.mxu0 0.0
    %1025 = vmatpush1.msra.mxu0 0.0
    %1026 = vmatprep.subr.mxu0 0.0
    %1027 = vmatpush1.msra.mxu0 0.0
    %1028 = vmatprep.subr.mxu0 0.0
    %1029 = vmatpush1.msra.mxu0 0.0
    %1030 = vmatprep.subr.mxu0 %v1010
    %1031 = vmatpush1.msra.mxu0 %v1007
    %1032 = vmatprep.subr.mxu0 %v1000
    %1033 = vmatpush1.msra.mxu0 %v999
    %1034 = vmatprep.subr.mxu0 %v998
    %1035 = vmatpush1.msra.mxu0 %v997
    %1036 = vmatprep.subr.mxu0 %v996
    %1037 = vmatpush1.msra.mxu0 %v995
    %1038 = vmatprep.subr.mxu0 %v994
    %1039 = vmatpush1.msra.mxu0 %v993
    %1040 = vmatprep.subr.mxu0 %v992
    %1041 = vmatpush1.msra.mxu0 %v991
    %1042 = vmatprep.subr.mxu0 %v990
    %1043 = vmatpush1.msra.mxu0 %v989
    %1044 = vmatprep.subr.mxu0 0.0
    %1045 = vmatpush2.msra.mxu0 0.0
    %1046 = vmatprep.subr.mxu0 0.0
    %1047 = vmatpush2.msra.mxu0 0.0
    %1048 = vmatprep.subr.mxu0 0.0
    %1049 = vmatpush2.msra.mxu0 0.0
    %1050 = vmatprep.subr.mxu0 0.0
    %1051 = vmatpush2.msra.mxu0 0.0
    %1052 = vmatprep.subr.mxu0 0.0
    %1053 = vmatpush2.msra.mxu0 0.0
    %1054 = vmatprep.subr.mxu0 0.0
    %1055 = vmatpush2.msra.mxu0 0.0
    %1056 = vmatprep.subr.mxu0 0.0
    %1057 = vmatpush2.msra.mxu0 0.0
    %1058 = vmatprep.subr.mxu0 0.0
    %1059 = vmatpush2.msra.mxu0 0.0
    %1060 = vmatprep.subr.mxu0 0.0
    %1061 = vmatpush2.msra.mxu0 0.0
    %1062 = vmatprep.subr.mxu0 0.0
    %1063 = vmatpush2.msra.mxu0 0.0
    %1064 = vmatprep.subr.mxu0 0.0
    %1065 = vmatpush2.msra.mxu0 0.0
    %1066 = vmatprep.subr.mxu0 0.0
    %1067 = vmatpush2.msra.mxu0 0.0
    %1068 = vmatprep.subr.mxu0 0.0
    %1069 = vmatpush2.msra.mxu0 0.0
    %1070 = vmatprep.subr.mxu0 0.0
    %1071 = vmatpush2.msra.mxu0 0.0
    %1072 = vmatprep.subr.mxu0 0.0
    %1073 = vmatpush2.msra.mxu0 0.0
    %1074 = vmatprep.subr.mxu0 0.0
    %1075 = vmatpush2.msra.mxu0 0.0
    %1076 = vmatprep.mubr.f32.mxu0 0.0
    %1077 = vmatmul.mubr.f32.gmra.mxu0 %v1004
    %v1078 = vpop.f32.mrf.mxu0
    %v1079 = vadd.f32 0.0, %v1078
    %v1080 = vpop.f32.mrf.mxu0
    %v1081 = vadd.f32 0.0, %v1080
    %1082 = vdwg.mxu0
    %v1085 = vcombine.low %v1079, %v1081
    %v1087 = vunpack.c.l.s4 1966171168
    %v1088 = vunpack.c.0.s8 %v1087
    %v1089 = vlaneseq
    %v1090 = vshrl.u32 %v1089, 7
    %v1091 = vsub.s32 %v1088, %v1090
    %v1092 = vrot.slane %v1085, %v1091
    %v1094 = vunpack.c.l.s4 1966171168
    %v1095 = vunpack.c.0.s8 %v1094
    %v1096 = vlaneseq
    %v1097 = vshrl.u32 %v1096, 7
    %v1098 = vsub.s32 %v1095, %v1097
    %v1099 = vrot.slane %v1092, %v1098
    %v1101 = vadd.f32 %v987, %v1099
    %s1102 = scalar_lea.vmem %s3, 896
    %v1103 = vld [vmem:[%s1102] sm:$0xff]
    %v1104 = vld [vmem:[%s1102 + $0x8] sm:$0xff]
    %v1105 = vld [vmem:[%s1102 + $0x10] sm:$0xff]
    %v1106 = vld [vmem:[%s1102 + $0x18] sm:$0xff]
    %v1107 = vld [vmem:[%s1102 + $0x20] sm:$0xff]
    %v1108 = vld [vmem:[%s1102 + $0x28] sm:$0xff]
    %v1109 = vld [vmem:[%s1102 + $0x30] sm:$0xff]
    %v1110 = vld [vmem:[%s1102 + $0x38] sm:$0xff]
    %v1111 = vld [vmem:[%s1102 + $0x40] sm:$0xff]
    %v1112 = vld [vmem:[%s1102 + $0x48] sm:$0xff]
    %v1113 = vld [vmem:[%s1102 + $0x50] sm:$0xff]
    %v1114 = vld [vmem:[%s1102 + $0x58] sm:$0xff]
    %v1115 = vld [vmem:[%s1102 + $0x60] sm:$0x3]
    %v1116 = vld [vmem:[%s1102 + $0x68] sm:$0x3]
    %v1118 = vsel %vm203, %v188, 0
    %v1121 = vsel %vm207, %v1115, 0
    %v1124 = vsel %vm207, %v1116, 0
    %1126 = vmatprep.subr.mxu0 0.0
    %1127 = vmatpush1.msra.mxu0 0.0
    %1128 = vmatprep.subr.mxu0 0.0
    %1129 = vmatpush1.msra.mxu0 0.0
    %1130 = vmatprep.subr.mxu0 0.0
    %1131 = vmatpush1.msra.mxu0 0.0
    %1132 = vmatprep.subr.mxu0 0.0
    %1133 = vmatpush1.msra.mxu0 0.0
    %1134 = vmatprep.subr.mxu0 0.0
    %1135 = vmatpush1.msra.mxu0 0.0
    %1136 = vmatprep.subr.mxu0 0.0
    %1137 = vmatpush1.msra.mxu0 0.0
    %1138 = vmatprep.subr.mxu0 0.0
    %1139 = vmatpush1.msra.mxu0 0.0
    %1140 = vmatprep.subr.mxu0 0.0
    %1141 = vmatpush1.msra.mxu0 0.0
    %1142 = vmatprep.subr.mxu0 0.0
    %1143 = vmatpush1.msra.mxu0 0.0
    %1144 = vmatprep.subr.mxu0 %v1124
    %1145 = vmatpush1.msra.mxu0 %v1121
    %1146 = vmatprep.subr.mxu0 %v1114
    %1147 = vmatpush1.msra.mxu0 %v1113
    %1148 = vmatprep.subr.mxu0 %v1112
    %1149 = vmatpush1.msra.mxu0 %v1111
    %1150 = vmatprep.subr.mxu0 %v1110
    %1151 = vmatpush1.msra.mxu0 %v1109
    %1152 = vmatprep.subr.mxu0 %v1108
    %1153 = vmatpush1.msra.mxu0 %v1107
    %1154 = vmatprep.subr.mxu0 %v1106
    %1155 = vmatpush1.msra.mxu0 %v1105
    %1156 = vmatprep.subr.mxu0 %v1104
    %1157 = vmatpush1.msra.mxu0 %v1103
    %1158 = vmatprep.subr.mxu0 0.0
    %1159 = vmatpush2.msra.mxu0 0.0
    %1160 = vmatprep.subr.mxu0 0.0
    %1161 = vmatpush2.msra.mxu0 0.0
    %1162 = vmatprep.subr.mxu0 0.0
    %1163 = vmatpush2.msra.mxu0 0.0
    %1164 = vmatprep.subr.mxu0 0.0
    %1165 = vmatpush2.msra.mxu0 0.0
    %1166 = vmatprep.subr.mxu0 0.0
    %1167 = vmatpush2.msra.mxu0 0.0
    %1168 = vmatprep.subr.mxu0 0.0
    %1169 = vmatpush2.msra.mxu0 0.0
    %1170 = vmatprep.subr.mxu0 0.0
    %1171 = vmatpush2.msra.mxu0 0.0
    %1172 = vmatprep.subr.mxu0 0.0
    %1173 = vmatpush2.msra.mxu0 0.0
    %1174 = vmatprep.subr.mxu0 0.0
    %1175 = vmatpush2.msra.mxu0 0.0
    %1176 = vmatprep.subr.mxu0 0.0
    %1177 = vmatpush2.msra.mxu0 0.0
    %1178 = vmatprep.subr.mxu0 0.0
    %1179 = vmatpush2.msra.mxu0 0.0
    %1180 = vmatprep.subr.mxu0 0.0
    %1181 = vmatpush2.msra.mxu0 0.0
    %1182 = vmatprep.subr.mxu0 0.0
    %1183 = vmatpush2.msra.mxu0 0.0
    %1184 = vmatprep.subr.mxu0 0.0
    %1185 = vmatpush2.msra.mxu0 0.0
    %1186 = vmatprep.subr.mxu0 0.0
    %1187 = vmatpush2.msra.mxu0 0.0
    %1188 = vmatprep.subr.mxu0 0.0
    %1189 = vmatpush2.msra.mxu0 0.0
    %1190 = vmatprep.mubr.f32.mxu0 0.0
    %1191 = vmatmul.mubr.f32.gmra.mxu0 %v1118
    %v1192 = vpop.f32.mrf.mxu0
    %v1193 = vadd.f32 0.0, %v1192
    %v1194 = vpop.f32.mrf.mxu0
    %v1195 = vadd.f32 0.0, %v1194
    %1196 = vdwg.mxu0
    %v1199 = vcombine.low %v1193, %v1195
    %v1201 = vunpack.c.l.s4 1966171168
    %v1202 = vunpack.c.0.s8 %v1201
    %v1203 = vlaneseq
    %v1204 = vshrl.u32 %v1203, 7
    %v1205 = vsub.s32 %v1202, %v1204
    %v1206 = vrot.slane %v1199, %v1205
    %v1208 = vunpack.c.l.s4 1966171168
    %v1209 = vunpack.c.0.s8 %v1208
    %v1210 = vlaneseq
    %v1211 = vshrl.u32 %v1210, 7
    %v1212 = vsub.s32 %v1209, %v1211
    %v1213 = vrot.slane %v1206, %v1212
    %v1215 = vadd.f32 %v1101, %v1213
    %s1216 = scalar_lea.vmem %s3, 1008
    %v1217 = vld [vmem:[%s1216] sm:$0xff]
    %v1218 = vld [vmem:[%s1216 + $0x8] sm:$0xff]
    %v1219 = vld [vmem:[%s1216 + $0x10] sm:$0xff]
    %v1220 = vld [vmem:[%s1216 + $0x18] sm:$0xff]
    %v1221 = vld [vmem:[%s1216 + $0x20] sm:$0xff]
    %v1222 = vld [vmem:[%s1216 + $0x28] sm:$0xff]
    %v1223 = vld [vmem:[%s1216 + $0x30] sm:$0xff]
    %v1224 = vld [vmem:[%s1216 + $0x38] sm:$0xff]
    %v1225 = vld [vmem:[%s1216 + $0x40] sm:$0xff]
    %v1226 = vld [vmem:[%s1216 + $0x48] sm:$0xff]
    %v1227 = vld [vmem:[%s1216 + $0x50] sm:$0xff]
    %v1228 = vld [vmem:[%s1216 + $0x58] sm:$0xff]
    %v1229 = vld [vmem:[%s1216 + $0x60] sm:$0x3]
    %v1230 = vld [vmem:[%s1216 + $0x68] sm:$0x3]
    %v1231 = vrot.slane %v188, 1
    %v1232 = vsel %vm203, %v1231, 0
    %v1235 = vsel %vm207, %v1229, 0
    %v1238 = vsel %vm207, %v1230, 0
    %1240 = vmatprep.subr.mxu0 0.0
    %1241 = vmatpush1.msra.mxu0 0.0
    %1242 = vmatprep.subr.mxu0 0.0
    %1243 = vmatpush1.msra.mxu0 0.0
    %1244 = vmatprep.subr.mxu0 0.0
    %1245 = vmatpush1.msra.mxu0 0.0
    %1246 = vmatprep.subr.mxu0 0.0
    %1247 = vmatpush1.msra.mxu0 0.0
    %1248 = vmatprep.subr.mxu0 0.0
    %1249 = vmatpush1.msra.mxu0 0.0
    %1250 = vmatprep.subr.mxu0 0.0
    %1251 = vmatpush1.msra.mxu0 0.0
    %1252 = vmatprep.subr.mxu0 0.0
    %1253 = vmatpush1.msra.mxu0 0.0
    %1254 = vmatprep.subr.mxu0 0.0
    %1255 = vmatpush1.msra.mxu0 0.0
    %1256 = vmatprep.subr.mxu0 0.0
    %1257 = vmatpush1.msra.mxu0 0.0
    %1258 = vmatprep.subr.mxu0 %v1238
    %1259 = vmatpush1.msra.mxu0 %v1235
    %1260 = vmatprep.subr.mxu0 %v1228
    %1261 = vmatpush1.msra.mxu0 %v1227
    %1262 = vmatprep.subr.mxu0 %v1226
    %1263 = vmatpush1.msra.mxu0 %v1225
    %1264 = vmatprep.subr.mxu0 %v1224
    %1265 = vmatpush1.msra.mxu0 %v1223
    %1266 = vmatprep.subr.mxu0 %v1222
    %1267 = vmatpush1.msra.mxu0 %v1221
    %1268 = vmatprep.subr.mxu0 %v1220
    %1269 = vmatpush1.msra.mxu0 %v1219
    %1270 = vmatprep.subr.mxu0 %v1218
    %1271 = vmatpush1.msra.mxu0 %v1217
    %1272 = vmatprep.subr.mxu0 0.0
    %1273 = vmatpush2.msra.mxu0 0.0
    %1274 = vmatprep.subr.mxu0 0.0
    %1275 = vmatpush2.msra.mxu0 0.0
    %1276 = vmatprep.subr.mxu0 0.0
    %1277 = vmatpush2.msra.mxu0 0.0
    %1278 = vmatprep.subr.mxu0 0.0
    %1279 = vmatpush2.msra.mxu0 0.0
    %1280 = vmatprep.subr.mxu0 0.0
    %1281 = vmatpush2.msra.mxu0 0.0
    %1282 = vmatprep.subr.mxu0 0.0
    %1283 = vmatpush2.msra.mxu0 0.0
    %1284 = vmatprep.subr.mxu0 0.0
    %1285 = vmatpush2.msra.mxu0 0.0
    %1286 = vmatprep.subr.mxu0 0.0
    %1287 = vmatpush2.msra.mxu0 0.0
    %1288 = vmatprep.subr.mxu0 0.0
    %1289 = vmatpush2.msra.mxu0 0.0
    %1290 = vmatprep.subr.mxu0 0.0
    %1291 = vmatpush2.msra.mxu0 0.0
    %1292 = vmatprep.subr.mxu0 0.0
    %1293 = vmatpush2.msra.mxu0 0.0
    %1294 = vmatprep.subr.mxu0 0.0
    %1295 = vmatpush2.msra.mxu0 0.0
    %1296 = vmatprep.subr.mxu0 0.0
    %1297 = vmatpush2.msra.mxu0 0.0
    %1298 = vmatprep.subr.mxu0 0.0
    %1299 = vmatpush2.msra.mxu0 0.0
    %1300 = vmatprep.subr.mxu0 0.0
    %1301 = vmatpush2.msra.mxu0 0.0
    %1302 = vmatprep.subr.mxu0 0.0
    %1303 = vmatpush2.msra.mxu0 0.0
    %1304 = vmatprep.mubr.f32.mxu0 0.0
    %1305 = vmatmul.mubr.f32.gmra.mxu0 %v1232
    %v1306 = vpop.f32.mrf.mxu0
    %v1307 = vadd.f32 0.0, %v1306
    %v1308 = vpop.f32.mrf.mxu0
    %v1309 = vadd.f32 0.0, %v1308
    %1310 = vdwg.mxu0
    %v1313 = vcombine.low %v1307, %v1309
    %v1315 = vunpack.c.l.s4 1966171168
    %v1316 = vunpack.c.0.s8 %v1315
    %v1317 = vlaneseq
    %v1318 = vshrl.u32 %v1317, 7
    %v1319 = vsub.s32 %v1316, %v1318
    %v1320 = vrot.slane %v1313, %v1319
    %v1322 = vunpack.c.l.s4 1966171168
    %v1323 = vunpack.c.0.s8 %v1322
    %v1324 = vlaneseq
    %v1325 = vshrl.u32 %v1324, 7
    %v1326 = vsub.s32 %v1323, %v1325
    %v1327 = vrot.slane %v1320, %v1326
    %v1329 = vadd.f32 %v1215, %v1327
    %s1330 = scalar_lea.vmem %s3, 1120
    %v1331 = vld [vmem:[%s1330] sm:$0xff]
    %v1332 = vld [vmem:[%s1330 + $0x8] sm:$0xff]
    %v1333 = vld [vmem:[%s1330 + $0x10] sm:$0xff]
    %v1334 = vld [vmem:[%s1330 + $0x18] sm:$0xff]
    %v1335 = vld [vmem:[%s1330 + $0x20] sm:$0xff]
    %v1336 = vld [vmem:[%s1330 + $0x28] sm:$0xff]
    %v1337 = vld [vmem:[%s1330 + $0x30] sm:$0xff]
    %v1338 = vld [vmem:[%s1330 + $0x38] sm:$0xff]
    %v1339 = vld [vmem:[%s1330 + $0x40] sm:$0xff]
    %v1340 = vld [vmem:[%s1330 + $0x48] sm:$0xff]
    %v1341 = vld [vmem:[%s1330 + $0x50] sm:$0xff]
    %v1342 = vld [vmem:[%s1330 + $0x58] sm:$0xff]
    %v1343 = vld [vmem:[%s1330 + $0x60] sm:$0x3]
    %v1344 = vld [vmem:[%s1330 + $0x68] sm:$0x3]
    %v1345 = vrot.slane %v188, 2
    %v1346 = vsel %vm203, %v1345, 0
    %v1349 = vsel %vm207, %v1343, 0
    %v1352 = vsel %vm207, %v1344, 0
    %1354 = vmatprep.subr.mxu0 0.0
    %1355 = vmatpush1.msra.mxu0 0.0
    %1356 = vmatprep.subr.mxu0 0.0
    %1357 = vmatpush1.msra.mxu0 0.0
    %1358 = vmatprep.subr.mxu0 0.0
    %1359 = vmatpush1.msra.mxu0 0.0
    %1360 = vmatprep.subr.mxu0 0.0
    %1361 = vmatpush1.msra.mxu0 0.0
    %1362 = vmatprep.subr.mxu0 0.0
    %1363 = vmatpush1.msra.mxu0 0.0
    %1364 = vmatprep.subr.mxu0 0.0
    %1365 = vmatpush1.msra.mxu0 0.0
    %1366 = vmatprep.subr.mxu0 0.0
    %1367 = vmatpush1.msra.mxu0 0.0
    %1368 = vmatprep.subr.mxu0 0.0
    %1369 = vmatpush1.msra.mxu0 0.0
    %1370 = vmatprep.subr.mxu0 0.0
    %1371 = vmatpush1.msra.mxu0 0.0
    %1372 = vmatprep.subr.mxu0 %v1352
    %1373 = vmatpush1.msra.mxu0 %v1349
    %1374 = vmatprep.subr.mxu0 %v1342
    %1375 = vmatpush1.msra.mxu0 %v1341
    %1376 = vmatprep.subr.mxu0 %v1340
    %1377 = vmatpush1.msra.mxu0 %v1339
    %1378 = vmatprep.subr.mxu0 %v1338
    %1379 = vmatpush1.msra.mxu0 %v1337
    %1380 = vmatprep.subr.mxu0 %v1336
    %1381 = vmatpush1.msra.mxu0 %v1335
    %1382 = vmatprep.subr.mxu0 %v1334
    %1383 = vmatpush1.msra.mxu0 %v1333
    %1384 = vmatprep.subr.mxu0 %v1332
    %1385 = vmatpush1.msra.mxu0 %v1331
    %1386 = vmatprep.subr.mxu0 0.0
    %1387 = vmatpush2.msra.mxu0 0.0
    %1388 = vmatprep.subr.mxu0 0.0
    %1389 = vmatpush2.msra.mxu0 0.0
    %1390 = vmatprep.subr.mxu0 0.0
    %1391 = vmatpush2.msra.mxu0 0.0
    %1392 = vmatprep.subr.mxu0 0.0
    %1393 = vmatpush2.msra.mxu0 0.0
    %1394 = vmatprep.subr.mxu0 0.0
    %1395 = vmatpush2.msra.mxu0 0.0
    %1396 = vmatprep.subr.mxu0 0.0
    %1397 = vmatpush2.msra.mxu0 0.0
    %1398 = vmatprep.subr.mxu0 0.0
    %1399 = vmatpush2.msra.mxu0 0.0
    %1400 = vmatprep.subr.mxu0 0.0
    %1401 = vmatpush2.msra.mxu0 0.0
    %1402 = vmatprep.subr.mxu0 0.0
    %1403 = vmatpush2.msra.mxu0 0.0
    %1404 = vmatprep.subr.mxu0 0.0
    %1405 = vmatpush2.msra.mxu0 0.0
    %1406 = vmatprep.subr.mxu0 0.0
    %1407 = vmatpush2.msra.mxu0 0.0
    %1408 = vmatprep.subr.mxu0 0.0
    %1409 = vmatpush2.msra.mxu0 0.0
    %1410 = vmatprep.subr.mxu0 0.0
    %1411 = vmatpush2.msra.mxu0 0.0
    %1412 = vmatprep.subr.mxu0 0.0
    %1413 = vmatpush2.msra.mxu0 0.0
    %1414 = vmatprep.subr.mxu0 0.0
    %1415 = vmatpush2.msra.mxu0 0.0
    %1416 = vmatprep.subr.mxu0 0.0
    %1417 = vmatpush2.msra.mxu0 0.0
    %1418 = vmatprep.mubr.f32.mxu0 0.0
    %1419 = vmatmul.mubr.f32.gmra.mxu0 %v1346
    %v1420 = vpop.f32.mrf.mxu0
    %v1421 = vadd.f32 0.0, %v1420
    %v1422 = vpop.f32.mrf.mxu0
    %v1423 = vadd.f32 0.0, %v1422
    %1424 = vdwg.mxu0
    %v1427 = vcombine.low %v1421, %v1423
    %v1429 = vunpack.c.l.s4 1966171168
    %v1430 = vunpack.c.0.s8 %v1429
    %v1431 = vlaneseq
    %v1432 = vshrl.u32 %v1431, 7
    %v1433 = vsub.s32 %v1430, %v1432
    %v1434 = vrot.slane %v1427, %v1433
    %v1436 = vunpack.c.l.s4 1966171168
    %v1437 = vunpack.c.0.s8 %v1436
    %v1438 = vlaneseq
    %v1439 = vshrl.u32 %v1438, 7
    %v1440 = vsub.s32 %v1437, %v1439
    %v1441 = vrot.slane %v1434, %v1440
    %v1443 = vadd.f32 %v1329, %v1441
    %s1444 = scalar_lea.vmem %s3, 1232
    %v1445 = vld [vmem:[%s1444] sm:$0xff]
    %v1446 = vld [vmem:[%s1444 + $0x8] sm:$0xff]
    %v1447 = vld [vmem:[%s1444 + $0x10] sm:$0xff]
    %v1448 = vld [vmem:[%s1444 + $0x18] sm:$0xff]
    %v1449 = vld [vmem:[%s1444 + $0x20] sm:$0xff]
    %v1450 = vld [vmem:[%s1444 + $0x28] sm:$0xff]
    %v1451 = vld [vmem:[%s1444 + $0x30] sm:$0xff]
    %v1452 = vld [vmem:[%s1444 + $0x38] sm:$0xff]
    %v1453 = vld [vmem:[%s1444 + $0x40] sm:$0xff]
    %v1454 = vld [vmem:[%s1444 + $0x48] sm:$0xff]
    %v1455 = vld [vmem:[%s1444 + $0x50] sm:$0xff]
    %v1456 = vld [vmem:[%s1444 + $0x58] sm:$0xff]
    %v1457 = vld [vmem:[%s1444 + $0x60] sm:$0x3]
    %v1458 = vld [vmem:[%s1444 + $0x68] sm:$0x3]
    %v1459 = vrot.slane %v188, 3
    %v1460 = vsel %vm203, %v1459, 0
    %v1463 = vsel %vm207, %v1457, 0
    %v1466 = vsel %vm207, %v1458, 0
    %1468 = vmatprep.subr.mxu0 0.0
    %1469 = vmatpush1.msra.mxu0 0.0
    %1470 = vmatprep.subr.mxu0 0.0
    %1471 = vmatpush1.msra.mxu0 0.0
    %1472 = vmatprep.subr.mxu0 0.0
    %1473 = vmatpush1.msra.mxu0 0.0
    %1474 = vmatprep.subr.mxu0 0.0
    %1475 = vmatpush1.msra.mxu0 0.0
    %1476 = vmatprep.subr.mxu0 0.0
    %1477 = vmatpush1.msra.mxu0 0.0
    %1478 = vmatprep.subr.mxu0 0.0
    %1479 = vmatpush1.msra.mxu0 0.0
    %1480 = vmatprep.subr.mxu0 0.0
    %1481 = vmatpush1.msra.mxu0 0.0
    %1482 = vmatprep.subr.mxu0 0.0
    %1483 = vmatpush1.msra.mxu0 0.0
    %1484 = vmatprep.subr.mxu0 0.0
    %1485 = vmatpush1.msra.mxu0 0.0
    %1486 = vmatprep.subr.mxu0 %v1466
    %1487 = vmatpush1.msra.mxu0 %v1463
    %1488 = vmatprep.subr.mxu0 %v1456
    %1489 = vmatpush1.msra.mxu0 %v1455
    %1490 = vmatprep.subr.mxu0 %v1454
    %1491 = vmatpush1.msra.mxu0 %v1453
    %1492 = vmatprep.subr.mxu0 %v1452
    %1493 = vmatpush1.msra.mxu0 %v1451
    %1494 = vmatprep.subr.mxu0 %v1450
    %1495 = vmatpush1.msra.mxu0 %v1449
    %1496 = vmatprep.subr.mxu0 %v1448
    %1497 = vmatpush1.msra.mxu0 %v1447
    %1498 = vmatprep.subr.mxu0 %v1446
    %1499 = vmatpush1.msra.mxu0 %v1445
    %1500 = vmatprep.subr.mxu0 0.0
    %1501 = vmatpush2.msra.mxu0 0.0
    %1502 = vmatprep.subr.mxu0 0.0
    %1503 = vmatpush2.msra.mxu0 0.0
    %1504 = vmatprep.subr.mxu0 0.0
    %1505 = vmatpush2.msra.mxu0 0.0
    %1506 = vmatprep.subr.mxu0 0.0
    %1507 = vmatpush2.msra.mxu0 0.0
    %1508 = vmatprep.subr.mxu0 0.0
    %1509 = vmatpush2.msra.mxu0 0.0
    %1510 = vmatprep.subr.mxu0 0.0
    %1511 = vmatpush2.msra.mxu0 0.0
    %1512 = vmatprep.subr.mxu0 0.0
    %1513 = vmatpush2.msra.mxu0 0.0
    %1514 = vmatprep.subr.mxu0 0.0
    %1515 = vmatpush2.msra.mxu0 0.0
    %1516 = vmatprep.subr.mxu0 0.0
    %1517 = vmatpush2.msra.mxu0 0.0
    %1518 = vmatprep.subr.mxu0 0.0
    %1519 = vmatpush2.msra.mxu0 0.0
    %1520 = vmatprep.subr.mxu0 0.0
    %1521 = vmatpush2.msra.mxu0 0.0
    %1522 = vmatprep.subr.mxu0 0.0
    %1523 = vmatpush2.msra.mxu0 0.0
    %1524 = vmatprep.subr.mxu0 0.0
    %1525 = vmatpush2.msra.mxu0 0.0
    %1526 = vmatprep.subr.mxu0 0.0
    %1527 = vmatpush2.msra.mxu0 0.0
    %1528 = vmatprep.subr.mxu0 0.0
    %1529 = vmatpush2.msra.mxu0 0.0
    %1530 = vmatprep.subr.mxu0 0.0
    %1531 = vmatpush2.msra.mxu0 0.0
    %1532 = vmatprep.mubr.f32.mxu0 0.0
    %1533 = vmatmul.mubr.f32.gmra.mxu0 %v1460
    %v1534 = vpop.f32.mrf.mxu0
    %v1535 = vadd.f32 0.0, %v1534
    %v1536 = vpop.f32.mrf.mxu0
    %v1537 = vadd.f32 0.0, %v1536
    %1538 = vdwg.mxu0
    %v1541 = vcombine.low %v1535, %v1537
    %v1543 = vunpack.c.l.s4 1966171168
    %v1544 = vunpack.c.0.s8 %v1543
    %v1545 = vlaneseq
    %v1546 = vshrl.u32 %v1545, 7
    %v1547 = vsub.s32 %v1544, %v1546
    %v1548 = vrot.slane %v1541, %v1547
    %v1550 = vunpack.c.l.s4 1966171168
    %v1551 = vunpack.c.0.s8 %v1550
    %v1552 = vlaneseq
    %v1553 = vshrl.u32 %v1552, 7
    %v1554 = vsub.s32 %v1551, %v1553
    %v1555 = vrot.slane %v1548, %v1554
    %v1557 = vadd.f32 %v1443, %v1555
    %vm1558 = vcmask 811008
    %1559 = vst.msk [vmem:[#allocation2] sm:$0x1] %vm1558, %v1557
    %v1561 = vlaneseq
    %v1562 = vshrl.u32 %v1561, 7
    %v1563 = vsub.s32 0, %v1562
    %v1564 = vrot.slane %v1557, %v1563
    %v1565 = vlaneseq
    %v1566 = vshrl.u32 %v1565, 7
    %v1567 = vsub.s32 1, %v1566
    %v1568 = vrot.slane %v1557, %v1567
    %1569 = vrot.lane.b32.xlu0 %v1564, 28
    %v1570 = vpop.permute.xlu0 %1569
    %1571 = vrot.lane.b32.xlu0 %v1568, 28
    %v1572 = vpop.permute.xlu0 %1571
    %v1573 = vsel %vm182, %v1570, %v1572
    %1575 = vst.msk [vmem:[#allocation4] sm:$0x1] %vm1558, %v1573
    %s1576 = scalar_lea.vmem %s0, 64
    %v1577 = vld [vmem:[%s1576] sm:$0xff]
    %v1578 = vld [vmem:[%s1576 + $0x8] sm:$0xff]
    %v1579 = vld [vmem:[%s1576 + $0x10] sm:$0xff]
    %v1580 = vld [vmem:[%s1576 + $0x18] sm:$0xff]
    %v1581 = vld [vmem:[%s1576 + $0x20] sm:$0xff]
    %v1582 = vld [vmem:[%s1576 + $0x28] sm:$0xff]
    %v1583 = vld [vmem:[%s1576 + $0x30] sm:$0x3f]
    %v1584 = vld [vmem:[%s1576 + $0x38] sm:$0x3f]
    %v1586 = vsel %vm64, %v1583, 0
    %v1589 = vsel %vm64, %v1584, 0
    %1591 = vmatprep.subr.mxu0 0.0
    %1592 = vmatpush1.msra.mxu0 0.0
    %1593 = vmatprep.subr.mxu0 0.0
    %1594 = vmatpush1.msra.mxu0 0.0
    %1595 = vmatprep.subr.mxu0 0.0
    %1596 = vmatpush1.msra.mxu0 0.0
    %1597 = vmatprep.subr.mxu0 0.0
    %1598 = vmatpush1.msra.mxu0 0.0
    %1599 = vmatprep.subr.mxu0 0.0
    %1600 = vmatpush1.msra.mxu0 0.0
    %1601 = vmatprep.subr.mxu0 0.0
    %1602 = vmatpush1.msra.mxu0 0.0
    %1603 = vmatprep.subr.mxu0 0.0
    %1604 = vmatpush1.msra.mxu0 0.0
    %1605 = vmatprep.subr.mxu0 0.0
    %1606 = vmatpush1.msra.mxu0 0.0
    %1607 = vmatprep.subr.mxu0 0.0
    %1608 = vmatpush1.msra.mxu0 0.0
    %1609 = vmatprep.subr.mxu0 0.0
    %1610 = vmatpush1.msra.mxu0 0.0
    %1611 = vmatprep.subr.mxu0 0.0
    %1612 = vmatpush1.msra.mxu0 0.0
    %1613 = vmatprep.subr.mxu0 0.0
    %1614 = vmatpush1.msra.mxu0 0.0
    %1615 = vmatprep.subr.mxu0 %v1589
    %1616 = vmatpush1.msra.mxu0 %v1586
    %1617 = vmatprep.subr.mxu0 %v1582
    %1618 = vmatpush1.msra.mxu0 %v1581
    %1619 = vmatprep.subr.mxu0 %v1580
    %1620 = vmatpush1.msra.mxu0 %v1579
    %1621 = vmatprep.subr.mxu0 %v1578
    %1622 = vmatpush1.msra.mxu0 %v1577
    %1623 = vmatprep.subr.mxu0 0.0
    %1624 = vmatpush2.msra.mxu0 0.0
    %1625 = vmatprep.subr.mxu0 0.0
    %1626 = vmatpush2.msra.mxu0 0.0
    %1627 = vmatprep.subr.mxu0 0.0
    %1628 = vmatpush2.msra.mxu0 0.0
    %1629 = vmatprep.subr.mxu0 0.0
    %1630 = vmatpush2.msra.mxu0 0.0
    %1631 = vmatprep.subr.mxu0 0.0
    %1632 = vmatpush2.msra.mxu0 0.0
    %1633 = vmatprep.subr.mxu0 0.0
    %1634 = vmatpush2.msra.mxu0 0.0
    %1635 = vmatprep.subr.mxu0 0.0
    %1636 = vmatpush2.msra.mxu0 0.0
    %1637 = vmatprep.subr.mxu0 0.0
    %1638 = vmatpush2.msra.mxu0 0.0
    %1639 = vmatprep.subr.mxu0 0.0
    %1640 = vmatpush2.msra.mxu0 0.0
    %1641 = vmatprep.subr.mxu0 0.0
    %1642 = vmatpush2.msra.mxu0 0.0
    %1643 = vmatprep.subr.mxu0 0.0
    %1644 = vmatpush2.msra.mxu0 0.0
    %1645 = vmatprep.subr.mxu0 0.0
    %1646 = vmatpush2.msra.mxu0 0.0
    %1647 = vmatprep.subr.mxu0 0.0
    %1648 = vmatpush2.msra.mxu0 0.0
    %1649 = vmatprep.subr.mxu0 0.0
    %1650 = vmatpush2.msra.mxu0 0.0
    %1651 = vmatprep.subr.mxu0 0.0
    %1652 = vmatpush2.msra.mxu0 0.0
    %1653 = vmatprep.subr.mxu0 0.0
    %1654 = vmatpush2.msra.mxu0 0.0
    %1655 = vmatprep.mubr.f32.mxu0 0.0
    %1656 = vmatmul.mubr.f32.gmra.mxu0 %v59
    %v1657 = vpop.f32.mrf.mxu0
    %v1658 = vadd.f32 %v50, %v1657
    %v1659 = vpop.f32.mrf.mxu0
    %v1660 = vadd.f32 %v50, %v1659
    %1661 = vmatprep.mubr.f32.mxu0 0.0
    %1662 = vmatmul.mubr.f32.gmra.mxu0 %v62
    %v1663 = vpop.f32.mrf.mxu0
    %v1664 = vadd.f32 %v55, %v1663
    %v1665 = vpop.f32.mrf.mxu0
    %v1666 = vadd.f32 %v55, %v1665
    %1667 = vdwg.mxu0
    %1670 = vrot.lane.b32.xlu0 %v1658, 78
    %v1671 = vpop.permute.xlu0 %1670
    %1672 = vrot.lane.b32.xlu0 %v1664, 78
    %v1673 = vpop.permute.xlu0 %1672
    %v1676 = vmax.f32 %v1658, %v1671
    %v1677 = vmax.f32 %v1664, %v1673
    %1680 = vrot.lane.b32.xlu0 %v1660, 78
    %v1681 = vpop.permute.xlu0 %1680
    %1682 = vrot.lane.b32.xlu0 %v1666, 78
    %v1683 = vpop.permute.xlu0 %1682
    %v1686 = vmax.f32 %v1658, %v1681
    %v1687 = vmax.f32 %v1660, %v1681
    %v1688 = vmax.f32 %v1664, %v1683
    %v1689 = vmax.f32 %v1666, %v1683
    %1694 = vrot.lane.b32.xlu0 %v1686, 28
    %v1695 = vpop.permute.xlu0 %1694
    %1696 = vrot.lane.b32.xlu0 %v1687, 28
    %v1697 = vpop.permute.xlu0 %1696
    %1698 = vrot.lane.b32.xlu0 %v1688, 28
    %v1699 = vpop.permute.xlu0 %1698
    %1700 = vrot.lane.b32.xlu0 %v1689, 28
    %v1701 = vpop.permute.xlu0 %1700
    %v1702 = vsel %vm182, %v1695, %v1697
    %v1703 = vsel %vm182, %v1699, %v1701
    %v1706 = vmax.f32 %v1676, %v1702
    %v1707 = vmax.f32 %v1677, %v1703
    %v1708 = vld [vmem:[%s3] sm:$0xff]
    %v1709 = vld [vmem:[%s3 + $0x8] sm:$0xff]
    %v1710 = vld [vmem:[%s3 + $0x10] sm:$0xff]
    %v1711 = vld [vmem:[%s3 + $0x18] sm:$0xff]
    %v1712 = vld [vmem:[%s3 + $0x20] sm:$0xff]
    %v1713 = vld [vmem:[%s3 + $0x28] sm:$0xff]
    %v1714 = vld [vmem:[%s3 + $0x30] sm:$0xff]
    %v1715 = vld [vmem:[%s3 + $0x38] sm:$0xff]
    %v1716 = vld [vmem:[%s3 + $0x40] sm:$0xff]
    %v1717 = vld [vmem:[%s3 + $0x48] sm:$0xff]
    %v1718 = vld [vmem:[%s3 + $0x50] sm:$0xff]
    %v1719 = vld [vmem:[%s3 + $0x58] sm:$0xff]
    %v1720 = vld [vmem:[%s3 + $0x60] sm:$0x3]
    %v1721 = vld [vmem:[%s3 + $0x68] sm:$0x3]
    %v1723 = vsel %vm203, %v1706, 0
    %v1726 = vsel %vm207, %v1720, 0
    %v1729 = vsel %vm207, %v1721, 0
    %1731 = vmatprep.subr.mxu0 0.0
    %1732 = vmatpush1.msra.mxu0 0.0
    %1733 = vmatprep.subr.mxu0 0.0
    %1734 = vmatpush1.msra.mxu0 0.0
    %1735 = vmatprep.subr.mxu0 0.0
    %1736 = vmatpush1.msra.mxu0 0.0
    %1737 = vmatprep.subr.mxu0 0.0
    %1738 = vmatpush1.msra.mxu0 0.0
    %1739 = vmatprep.subr.mxu0 0.0
    %1740 = vmatpush1.msra.mxu0 0.0
    %1741 = vmatprep.subr.mxu0 0.0
    %1742 = vmatpush1.msra.mxu0 0.0
    %1743 = vmatprep.subr.mxu0 0.0
    %1744 = vmatpush1.msra.mxu0 0.0
    %1745 = vmatprep.subr.mxu0 0.0
    %1746 = vmatpush1.msra.mxu0 0.0
    %1747 = vmatprep.subr.mxu0 0.0
    %1748 = vmatpush1.msra.mxu0 0.0
    %1749 = vmatprep.subr.mxu0 %v1729
    %1750 = vmatpush1.msra.mxu0 %v1726
    %1751 = vmatprep.subr.mxu0 %v1719
    %1752 = vmatpush1.msra.mxu0 %v1718
    %1753 = vmatprep.subr.mxu0 %v1717
    %1754 = vmatpush1.msra.mxu0 %v1716
    %1755 = vmatprep.subr.mxu0 %v1715
    %1756 = vmatpush1.msra.mxu0 %v1714
    %1757 = vmatprep.subr.mxu0 %v1713
    %1758 = vmatpush1.msra.mxu0 %v1712
    %1759 = vmatprep.subr.mxu0 %v1711
    %1760 = vmatpush1.msra.mxu0 %v1710
    %1761 = vmatprep.subr.mxu0 %v1709
    %1762 = vmatpush1.msra.mxu0 %v1708
    %1763 = vmatprep.subr.mxu0 0.0
    %1764 = vmatpush2.msra.mxu0 0.0
    %1765 = vmatprep.subr.mxu0 0.0
    %1766 = vmatpush2.msra.mxu0 0.0
    %1767 = vmatprep.subr.mxu0 0.0
    %1768 = vmatpush2.msra.mxu0 0.0
    %1769 = vmatprep.subr.mxu0 0.0
    %1770 = vmatpush2.msra.mxu0 0.0
    %1771 = vmatprep.subr.mxu0 0.0
    %1772 = vmatpush2.msra.mxu0 0.0
    %1773 = vmatprep.subr.mxu0 0.0
    %1774 = vmatpush2.msra.mxu0 0.0
    %1775 = vmatprep.subr.mxu0 0.0
    %1776 = vmatpush2.msra.mxu0 0.0
    %1777 = vmatprep.subr.mxu0 0.0
    %1778 = vmatpush2.msra.mxu0 0.0
    %1779 = vmatprep.subr.mxu0 0.0
    %1780 = vmatpush2.msra.mxu0 0.0
    %1781 = vmatprep.subr.mxu0 0.0
    %1782 = vmatpush2.msra.mxu0 0.0
    %1783 = vmatprep.subr.mxu0 0.0
    %1784 = vmatpush2.msra.mxu0 0.0
    %1785 = vmatprep.subr.mxu0 0.0
    %1786 = vmatpush2.msra.mxu0 0.0
    %1787 = vmatprep.subr.mxu0 0.0
    %1788 = vmatpush2.msra.mxu0 0.0
    %1789 = vmatprep.subr.mxu0 0.0
    %1790 = vmatpush2.msra.mxu0 0.0
    %1791 = vmatprep.subr.mxu0 0.0
    %1792 = vmatpush2.msra.mxu0 0.0
    %1793 = vmatprep.subr.mxu0 0.0
    %1794 = vmatpush2.msra.mxu0 0.0
    %1795 = vmatprep.mubr.f32.mxu0 0.0
    %1796 = vmatmul.mubr.f32.gmra.mxu0 %v1723
    %v1797 = vpop.f32.mrf.mxu0
    %v1798 = vadd.f32 0.0, %v1797
    %v1799 = vpop.f32.mrf.mxu0
    %v1800 = vadd.f32 0.0, %v1799
    %1801 = vdwg.mxu0
    %v1804 = vcombine.low %v1798, %v1800
    %v1806 = vunpack.c.l.s4 1966171168
    %v1807 = vunpack.c.0.s8 %v1806
    %v1808 = vlaneseq
    %v1809 = vshrl.u32 %v1808, 7
    %v1810 = vsub.s32 %v1807, %v1809
    %v1811 = vrot.slane %v1804, %v1810
    %v1813 = vunpack.c.l.s4 1966171168
    %v1814 = vunpack.c.0.s8 %v1813
    %v1815 = vlaneseq
    %v1816 = vshrl.u32 %v1815, 7
    %v1817 = vsub.s32 %v1814, %v1816
    %v1818 = vrot.slane %v1811, %v1817
    %v1820 = vadd.f32 %v38, %v1818
    %v1821 = vld [vmem:[%s304] sm:$0xff]
    %v1822 = vld [vmem:[%s304 + $0x8] sm:$0xff]
    %v1823 = vld [vmem:[%s304 + $0x10] sm:$0xff]
    %v1824 = vld [vmem:[%s304 + $0x18] sm:$0xff]
    %v1825 = vld [vmem:[%s304 + $0x20] sm:$0xff]
    %v1826 = vld [vmem:[%s304 + $0x28] sm:$0xff]
    %v1827 = vld [vmem:[%s304 + $0x30] sm:$0xff]
    %v1828 = vld [vmem:[%s304 + $0x38] sm:$0xff]
    %v1829 = vld [vmem:[%s304 + $0x40] sm:$0xff]
    %v1830 = vld [vmem:[%s304 + $0x48] sm:$0xff]
    %v1831 = vld [vmem:[%s304 + $0x50] sm:$0xff]
    %v1832 = vld [vmem:[%s304 + $0x58] sm:$0xff]
    %v1833 = vld [vmem:[%s304 + $0x60] sm:$0x3]
    %v1834 = vld [vmem:[%s304 + $0x68] sm:$0x3]
    %v1835 = vrot.slane %v1706, 1
    %v1836 = vsel %vm203, %v1835, 0
    %v1839 = vsel %vm207, %v1833, 0
    %v1842 = vsel %vm207, %v1834, 0
    %1844 = vmatprep.subr.mxu0 0.0
    %1845 = vmatpush1.msra.mxu0 0.0
    %1846 = vmatprep.subr.mxu0 0.0
    %1847 = vmatpush1.msra.mxu0 0.0
    %1848 = vmatprep.subr.mxu0 0.0
    %1849 = vmatpush1.msra.mxu0 0.0
    %1850 = vmatprep.subr.mxu0 0.0
    %1851 = vmatpush1.msra.mxu0 0.0
    %1852 = vmatprep.subr.mxu0 0.0
    %1853 = vmatpush1.msra.mxu0 0.0
    %1854 = vmatprep.subr.mxu0 0.0
    %1855 = vmatpush1.msra.mxu0 0.0
    %1856 = vmatprep.subr.mxu0 0.0
    %1857 = vmatpush1.msra.mxu0 0.0
    %1858 = vmatprep.subr.mxu0 0.0
    %1859 = vmatpush1.msra.mxu0 0.0
    %1860 = vmatprep.subr.mxu0 0.0
    %1861 = vmatpush1.msra.mxu0 0.0
    %1862 = vmatprep.subr.mxu0 %v1842
    %1863 = vmatpush1.msra.mxu0 %v1839
    %1864 = vmatprep.subr.mxu0 %v1832
    %1865 = vmatpush1.msra.mxu0 %v1831
    %1866 = vmatprep.subr.mxu0 %v1830
    %1867 = vmatpush1.msra.mxu0 %v1829
    %1868 = vmatprep.subr.mxu0 %v1828
    %1869 = vmatpush1.msra.mxu0 %v1827
    %1870 = vmatprep.subr.mxu0 %v1826
    %1871 = vmatpush1.msra.mxu0 %v1825
    %1872 = vmatprep.subr.mxu0 %v1824
    %1873 = vmatpush1.msra.mxu0 %v1823
    %1874 = vmatprep.subr.mxu0 %v1822
    %1875 = vmatpush1.msra.mxu0 %v1821
    %1876 = vmatprep.subr.mxu0 0.0
    %1877 = vmatpush2.msra.mxu0 0.0
    %1878 = vmatprep.subr.mxu0 0.0
    %1879 = vmatpush2.msra.mxu0 0.0
    %1880 = vmatprep.subr.mxu0 0.0
    %1881 = vmatpush2.msra.mxu0 0.0
    %1882 = vmatprep.subr.mxu0 0.0
    %1883 = vmatpush2.msra.mxu0 0.0
    %1884 = vmatprep.subr.mxu0 0.0
    %1885 = vmatpush2.msra.mxu0 0.0
    %1886 = vmatprep.subr.mxu0 0.0
    %1887 = vmatpush2.msra.mxu0 0.0
    %1888 = vmatprep.subr.mxu0 0.0
    %1889 = vmatpush2.msra.mxu0 0.0
    %1890 = vmatprep.subr.mxu0 0.0
    %1891 = vmatpush2.msra.mxu0 0.0
    %1892 = vmatprep.subr.mxu0 0.0
    %1893 = vmatpush2.msra.mxu0 0.0
    %1894 = vmatprep.subr.mxu0 0.0
    %1895 = vmatpush2.msra.mxu0 0.0
    %1896 = vmatprep.subr.mxu0 0.0
    %1897 = vmatpush2.msra.mxu0 0.0
    %1898 = vmatprep.subr.mxu0 0.0
    %1899 = vmatpush2.msra.mxu0 0.0
    %1900 = vmatprep.subr.mxu0 0.0
    %1901 = vmatpush2.msra.mxu0 0.0
    %1902 = vmatprep.subr.mxu0 0.0
    %1903 = vmatpush2.msra.mxu0 0.0
    %1904 = vmatprep.subr.mxu0 0.0
    %1905 = vmatpush2.msra.mxu0 0.0
    %1906 = vmatprep.subr.mxu0 0.0
    %1907 = vmatpush2.msra.mxu0 0.0
    %1908 = vmatprep.mubr.f32.mxu0 0.0
    %1909 = vmatmul.mubr.f32.gmra.mxu0 %v1836
    %v1910 = vpop.f32.mrf.mxu0
    %v1911 = vadd.f32 0.0, %v1910
    %v1912 = vpop.f32.mrf.mxu0
    %v1913 = vadd.f32 0.0, %v1912
    %1914 = vdwg.mxu0
    %v1917 = vcombine.low %v1911, %v1913
    %v1919 = vunpack.c.l.s4 1966171168
    %v1920 = vunpack.c.0.s8 %v1919
    %v1921 = vlaneseq
    %v1922 = vshrl.u32 %v1921, 7
    %v1923 = vsub.s32 %v1920, %v1922
    %v1924 = vrot.slane %v1917, %v1923
    %v1926 = vunpack.c.l.s4 1966171168
    %v1927 = vunpack.c.0.s8 %v1926
    %v1928 = vlaneseq
    %v1929 = vshrl.u32 %v1928, 7
    %v1930 = vsub.s32 %v1927, %v1929
    %v1931 = vrot.slane %v1924, %v1930
    %v1933 = vadd.f32 %v1820, %v1931
    %v1934 = vld [vmem:[%s418] sm:$0xff]
    %v1935 = vld [vmem:[%s418 + $0x8] sm:$0xff]
    %v1936 = vld [vmem:[%s418 + $0x10] sm:$0xff]
    %v1937 = vld [vmem:[%s418 + $0x18] sm:$0xff]
    %v1938 = vld [vmem:[%s418 + $0x20] sm:$0xff]
    %v1939 = vld [vmem:[%s418 + $0x28] sm:$0xff]
    %v1940 = vld [vmem:[%s418 + $0x30] sm:$0xff]
    %v1941 = vld [vmem:[%s418 + $0x38] sm:$0xff]
    %v1942 = vld [vmem:[%s418 + $0x40] sm:$0xff]
    %v1943 = vld [vmem:[%s418 + $0x48] sm:$0xff]
    %v1944 = vld [vmem:[%s418 + $0x50] sm:$0xff]
    %v1945 = vld [vmem:[%s418 + $0x58] sm:$0xff]
    %v1946 = vld [vmem:[%s418 + $0x60] sm:$0x3]
    %v1947 = vld [vmem:[%s418 + $0x68] sm:$0x3]
    %v1948 = vrot.slane %v1706, 2
    %v1949 = vsel %vm203, %v1948, 0
    %v1952 = vsel %vm207, %v1946, 0
    %v1955 = vsel %vm207, %v1947, 0
    %1957 = vmatprep.subr.mxu0 0.0
    %1958 = vmatpush1.msra.mxu0 0.0
    %1959 = vmatprep.subr.mxu0 0.0
    %1960 = vmatpush1.msra.mxu0 0.0
    %1961 = vmatprep.subr.mxu0 0.0
    %1962 = vmatpush1.msra.mxu0 0.0
    %1963 = vmatprep.subr.mxu0 0.0
    %1964 = vmatpush1.msra.mxu0 0.0
    %1965 = vmatprep.subr.mxu0 0.0
    %1966 = vmatpush1.msra.mxu0 0.0
    %1967 = vmatprep.subr.mxu0 0.0
    %1968 = vmatpush1.msra.mxu0 0.0
    %1969 = vmatprep.subr.mxu0 0.0
    %1970 = vmatpush1.msra.mxu0 0.0
    %1971 = vmatprep.subr.mxu0 0.0
    %1972 = vmatpush1.msra.mxu0 0.0
    %1973 = vmatprep.subr.mxu0 0.0
    %1974 = vmatpush1.msra.mxu0 0.0
    %1975 = vmatprep.subr.mxu0 %v1955
    %1976 = vmatpush1.msra.mxu0 %v1952
    %1977 = vmatprep.subr.mxu0 %v1945
    %1978 = vmatpush1.msra.mxu0 %v1944
    %1979 = vmatprep.subr.mxu0 %v1943
    %1980 = vmatpush1.msra.mxu0 %v1942
    %1981 = vmatprep.subr.mxu0 %v1941
    %1982 = vmatpush1.msra.mxu0 %v1940
    %1983 = vmatprep.subr.mxu0 %v1939
    %1984 = vmatpush1.msra.mxu0 %v1938
    %1985 = vmatprep.subr.mxu0 %v1937
    %1986 = vmatpush1.msra.mxu0 %v1936
    %1987 = vmatprep.subr.mxu0 %v1935
    %1988 = vmatpush1.msra.mxu0 %v1934
    %1989 = vmatprep.subr.mxu0 0.0
    %1990 = vmatpush2.msra.mxu0 0.0
    %1991 = vmatprep.subr.mxu0 0.0
    %1992 = vmatpush2.msra.mxu0 0.0
    %1993 = vmatprep.subr.mxu0 0.0
    %1994 = vmatpush2.msra.mxu0 0.0
    %1995 = vmatprep.subr.mxu0 0.0
    %1996 = vmatpush2.msra.mxu0 0.0
    %1997 = vmatprep.subr.mxu0 0.0
    %1998 = vmatpush2.msra.mxu0 0.0
    %1999 = vmatprep.subr.mxu0 0.0
    %2000 = vmatpush2.msra.mxu0 0.0
    %2001 = vmatprep.subr.mxu0 0.0
    %2002 = vmatpush2.msra.mxu0 0.0
    %2003 = vmatprep.subr.mxu0 0.0
    %2004 = vmatpush2.msra.mxu0 0.0
    %2005 = vmatprep.subr.mxu0 0.0
    %2006 = vmatpush2.msra.mxu0 0.0
    %2007 = vmatprep.subr.mxu0 0.0
    %2008 = vmatpush2.msra.mxu0 0.0
    %2009 = vmatprep.subr.mxu0 0.0
    %2010 = vmatpush2.msra.mxu0 0.0
    %2011 = vmatprep.subr.mxu0 0.0
    %2012 = vmatpush2.msra.mxu0 0.0
    %2013 = vmatprep.subr.mxu0 0.0
    %2014 = vmatpush2.msra.mxu0 0.0
    %2015 = vmatprep.subr.mxu0 0.0
    %2016 = vmatpush2.msra.mxu0 0.0
    %2017 = vmatprep.subr.mxu0 0.0
    %2018 = vmatpush2.msra.mxu0 0.0
    %2019 = vmatprep.subr.mxu0 0.0
    %2020 = vmatpush2.msra.mxu0 0.0
    %2021 = vmatprep.mubr.f32.mxu0 0.0
    %2022 = vmatmul.mubr.f32.gmra.mxu0 %v1949
    %v2023 = vpop.f32.mrf.mxu0
    %v2024 = vadd.f32 0.0, %v2023
    %v2025 = vpop.f32.mrf.mxu0
    %v2026 = vadd.f32 0.0, %v2025
    %2027 = vdwg.mxu0
    %v2030 = vcombine.low %v2024, %v2026
    %v2032 = vunpack.c.l.s4 1966171168
    %v2033 = vunpack.c.0.s8 %v2032
    %v2034 = vlaneseq
    %v2035 = vshrl.u32 %v2034, 7
    %v2036 = vsub.s32 %v2033, %v2035
    %v2037 = vrot.slane %v2030, %v2036
    %v2039 = vunpack.c.l.s4 1966171168
    %v2040 = vunpack.c.0.s8 %v2039
    %v2041 = vlaneseq
    %v2042 = vshrl.u32 %v2041, 7
    %v2043 = vsub.s32 %v2040, %v2042
    %v2044 = vrot.slane %v2037, %v2043
    %v2046 = vadd.f32 %v1933, %v2044
    %v2047 = vld [vmem:[%s532] sm:$0xff]
    %v2048 = vld [vmem:[%s532 + $0x8] sm:$0xff]
    %v2049 = vld [vmem:[%s532 + $0x10] sm:$0xff]
    %v2050 = vld [vmem:[%s532 + $0x18] sm:$0xff]
    %v2051 = vld [vmem:[%s532 + $0x20] sm:$0xff]
    %v2052 = vld [vmem:[%s532 + $0x28] sm:$0xff]
    %v2053 = vld [vmem:[%s532 + $0x30] sm:$0xff]
    %v2054 = vld [vmem:[%s532 + $0x38] sm:$0xff]
    %v2055 = vld [vmem:[%s532 + $0x40] sm:$0xff]
    %v2056 = vld [vmem:[%s532 + $0x48] sm:$0xff]
    %v2057 = vld [vmem:[%s532 + $0x50] sm:$0xff]
    %v2058 = vld [vmem:[%s532 + $0x58] sm:$0xff]
    %v2059 = vld [vmem:[%s532 + $0x60] sm:$0x3]
    %v2060 = vld [vmem:[%s532 + $0x68] sm:$0x3]
    %v2061 = vrot.slane %v1706, 3
    %v2062 = vsel %vm203, %v2061, 0
    %v2065 = vsel %vm207, %v2059, 0
    %v2068 = vsel %vm207, %v2060, 0
    %2070 = vmatprep.subr.mxu0 0.0
    %2071 = vmatpush1.msra.mxu0 0.0
    %2072 = vmatprep.subr.mxu0 0.0
    %2073 = vmatpush1.msra.mxu0 0.0
    %2074 = vmatprep.subr.mxu0 0.0
    %2075 = vmatpush1.msra.mxu0 0.0
    %2076 = vmatprep.subr.mxu0 0.0
    %2077 = vmatpush1.msra.mxu0 0.0
    %2078 = vmatprep.subr.mxu0 0.0
    %2079 = vmatpush1.msra.mxu0 0.0
    %2080 = vmatprep.subr.mxu0 0.0
    %2081 = vmatpush1.msra.mxu0 0.0
    %2082 = vmatprep.subr.mxu0 0.0
    %2083 = vmatpush1.msra.mxu0 0.0
    %2084 = vmatprep.subr.mxu0 0.0
    %2085 = vmatpush1.msra.mxu0 0.0
    %2086 = vmatprep.subr.mxu0 0.0
    %2087 = vmatpush1.msra.mxu0 0.0
    %2088 = vmatprep.subr.mxu0 %v2068
    %2089 = vmatpush1.msra.mxu0 %v2065
    %2090 = vmatprep.subr.mxu0 %v2058
    %2091 = vmatpush1.msra.mxu0 %v2057
    %2092 = vmatprep.subr.mxu0 %v2056
    %2093 = vmatpush1.msra.mxu0 %v2055
    %2094 = vmatprep.subr.mxu0 %v2054
    %2095 = vmatpush1.msra.mxu0 %v2053
    %2096 = vmatprep.subr.mxu0 %v2052
    %2097 = vmatpush1.msra.mxu0 %v2051
    %2098 = vmatprep.subr.mxu0 %v2050
    %2099 = vmatpush1.msra.mxu0 %v2049
    %2100 = vmatprep.subr.mxu0 %v2048
    %2101 = vmatpush1.msra.mxu0 %v2047
    %2102 = vmatprep.subr.mxu0 0.0
    %2103 = vmatpush2.msra.mxu0 0.0
    %2104 = vmatprep.subr.mxu0 0.0
    %2105 = vmatpush2.msra.mxu0 0.0
    %2106 = vmatprep.subr.mxu0 0.0
    %2107 = vmatpush2.msra.mxu0 0.0
    %2108 = vmatprep.subr.mxu0 0.0
    %2109 = vmatpush2.msra.mxu0 0.0
    %2110 = vmatprep.subr.mxu0 0.0
    %2111 = vmatpush2.msra.mxu0 0.0
    %2112 = vmatprep.subr.mxu0 0.0
    %2113 = vmatpush2.msra.mxu0 0.0
    %2114 = vmatprep.subr.mxu0 0.0
    %2115 = vmatpush2.msra.mxu0 0.0
    %2116 = vmatprep.subr.mxu0 0.0
    %2117 = vmatpush2.msra.mxu0 0.0
    %2118 = vmatprep.subr.mxu0 0.0
    %2119 = vmatpush2.msra.mxu0 0.0
    %2120 = vmatprep.subr.mxu0 0.0
    %2121 = vmatpush2.msra.mxu0 0.0
    %2122 = vmatprep.subr.mxu0 0.0
    %2123 = vmatpush2.msra.mxu0 0.0
    %2124 = vmatprep.subr.mxu0 0.0
    %2125 = vmatpush2.msra.mxu0 0.0
    %2126 = vmatprep.subr.mxu0 0.0
    %2127 = vmatpush2.msra.mxu0 0.0
    %2128 = vmatprep.subr.mxu0 0.0
    %2129 = vmatpush2.msra.mxu0 0.0
    %2130 = vmatprep.subr.mxu0 0.0
    %2131 = vmatpush2.msra.mxu0 0.0
    %2132 = vmatprep.subr.mxu0 0.0
    %2133 = vmatpush2.msra.mxu0 0.0
    %2134 = vmatprep.mubr.f32.mxu0 0.0
    %2135 = vmatmul.mubr.f32.gmra.mxu0 %v2062
    %v2136 = vpop.f32.mrf.mxu0
    %v2137 = vadd.f32 0.0, %v2136
    %v2138 = vpop.f32.mrf.mxu0
    %v2139 = vadd.f32 0.0, %v2138
    %2140 = vdwg.mxu0
    %v2143 = vcombine.low %v2137, %v2139
    %v2145 = vunpack.c.l.s4 1966171168
    %v2146 = vunpack.c.0.s8 %v2145
    %v2147 = vlaneseq
    %v2148 = vshrl.u32 %v2147, 7
    %v2149 = vsub.s32 %v2146, %v2148
    %v2150 = vrot.slane %v2143, %v2149
    %v2152 = vunpack.c.l.s4 1966171168
    %v2153 = vunpack.c.0.s8 %v2152
    %v2154 = vlaneseq
    %v2155 = vshrl.u32 %v2154, 7
    %v2156 = vsub.s32 %v2153, %v2155
    %v2157 = vrot.slane %v2150, %v2156
    %v2159 = vadd.f32 %v2046, %v2157
    %v2160 = vld [vmem:[%s646] sm:$0xff]
    %v2161 = vld [vmem:[%s646 + $0x8] sm:$0xff]
    %v2162 = vld [vmem:[%s646 + $0x10] sm:$0xff]
    %v2163 = vld [vmem:[%s646 + $0x18] sm:$0xff]
    %v2164 = vld [vmem:[%s646 + $0x20] sm:$0xff]
    %v2165 = vld [vmem:[%s646 + $0x28] sm:$0xff]
    %v2166 = vld [vmem:[%s646 + $0x30] sm:$0xff]
    %v2167 = vld [vmem:[%s646 + $0x38] sm:$0xff]
    %v2168 = vld [vmem:[%s646 + $0x40] sm:$0xff]
    %v2169 = vld [vmem:[%s646 + $0x48] sm:$0xff]
    %v2170 = vld [vmem:[%s646 + $0x50] sm:$0xff]
    %v2171 = vld [vmem:[%s646 + $0x58] sm:$0xff]
    %v2172 = vld [vmem:[%s646 + $0x60] sm:$0x3]
    %v2173 = vld [vmem:[%s646 + $0x68] sm:$0x3]
    %v2174 = vrot.slane %v1706, 4
    %v2175 = vsel %vm203, %v2174, 0
    %v2178 = vsel %vm207, %v2172, 0
    %v2181 = vsel %vm207, %v2173, 0
    %2183 = vmatprep.subr.mxu0 0.0
    %2184 = vmatpush1.msra.mxu0 0.0
    %2185 = vmatprep.subr.mxu0 0.0
    %2186 = vmatpush1.msra.mxu0 0.0
    %2187 = vmatprep.subr.mxu0 0.0
    %2188 = vmatpush1.msra.mxu0 0.0
    %2189 = vmatprep.subr.mxu0 0.0
    %2190 = vmatpush1.msra.mxu0 0.0
    %2191 = vmatprep.subr.mxu0 0.0
    %2192 = vmatpush1.msra.mxu0 0.0
    %2193 = vmatprep.subr.mxu0 0.0
    %2194 = vmatpush1.msra.mxu0 0.0
    %2195 = vmatprep.subr.mxu0 0.0
    %2196 = vmatpush1.msra.mxu0 0.0
    %2197 = vmatprep.subr.mxu0 0.0
    %2198 = vmatpush1.msra.mxu0 0.0
    %2199 = vmatprep.subr.mxu0 0.0
    %2200 = vmatpush1.msra.mxu0 0.0
    %2201 = vmatprep.subr.mxu0 %v2181
    %2202 = vmatpush1.msra.mxu0 %v2178
    %2203 = vmatprep.subr.mxu0 %v2171
    %2204 = vmatpush1.msra.mxu0 %v2170
    %2205 = vmatprep.subr.mxu0 %v2169
    %2206 = vmatpush1.msra.mxu0 %v2168
    %2207 = vmatprep.subr.mxu0 %v2167
    %2208 = vmatpush1.msra.mxu0 %v2166
    %2209 = vmatprep.subr.mxu0 %v2165
    %2210 = vmatpush1.msra.mxu0 %v2164
    %2211 = vmatprep.subr.mxu0 %v2163
    %2212 = vmatpush1.msra.mxu0 %v2162
    %2213 = vmatprep.subr.mxu0 %v2161
    %2214 = vmatpush1.msra.mxu0 %v2160
    %2215 = vmatprep.subr.mxu0 0.0
    %2216 = vmatpush2.msra.mxu0 0.0
    %2217 = vmatprep.subr.mxu0 0.0
    %2218 = vmatpush2.msra.mxu0 0.0
    %2219 = vmatprep.subr.mxu0 0.0
    %2220 = vmatpush2.msra.mxu0 0.0
    %2221 = vmatprep.subr.mxu0 0.0
    %2222 = vmatpush2.msra.mxu0 0.0
    %2223 = vmatprep.subr.mxu0 0.0
    %2224 = vmatpush2.msra.mxu0 0.0
    %2225 = vmatprep.subr.mxu0 0.0
    %2226 = vmatpush2.msra.mxu0 0.0
    %2227 = vmatprep.subr.mxu0 0.0
    %2228 = vmatpush2.msra.mxu0 0.0
    %2229 = vmatprep.subr.mxu0 0.0
    %2230 = vmatpush2.msra.mxu0 0.0
    %2231 = vmatprep.subr.mxu0 0.0
    %2232 = vmatpush2.msra.mxu0 0.0
    %2233 = vmatprep.subr.mxu0 0.0
    %2234 = vmatpush2.msra.mxu0 0.0
    %2235 = vmatprep.subr.mxu0 0.0
    %2236 = vmatpush2.msra.mxu0 0.0
    %2237 = vmatprep.subr.mxu0 0.0
    %2238 = vmatpush2.msra.mxu0 0.0
    %2239 = vmatprep.subr.mxu0 0.0
    %2240 = vmatpush2.msra.mxu0 0.0
    %2241 = vmatprep.subr.mxu0 0.0
    %2242 = vmatpush2.msra.mxu0 0.0
    %2243 = vmatprep.subr.mxu0 0.0
    %2244 = vmatpush2.msra.mxu0 0.0
    %2245 = vmatprep.subr.mxu0 0.0
    %2246 = vmatpush2.msra.mxu0 0.0
    %2247 = vmatprep.mubr.f32.mxu0 0.0
    %2248 = vmatmul.mubr.f32.gmra.mxu0 %v2175
    %v2249 = vpop.f32.mrf.mxu0
    %v2250 = vadd.f32 0.0, %v2249
    %v2251 = vpop.f32.mrf.mxu0
    %v2252 = vadd.f32 0.0, %v2251
    %2253 = vdwg.mxu0
    %v2256 = vcombine.low %v2250, %v2252
    %v2258 = vunpack.c.l.s4 1966171168
    %v2259 = vunpack.c.0.s8 %v2258
    %v2260 = vlaneseq
    %v2261 = vshrl.u32 %v2260, 7
    %v2262 = vsub.s32 %v2259, %v2261
    %v2263 = vrot.slane %v2256, %v2262
    %v2265 = vunpack.c.l.s4 1966171168
    %v2266 = vunpack.c.0.s8 %v2265
    %v2267 = vlaneseq
    %v2268 = vshrl.u32 %v2267, 7
    %v2269 = vsub.s32 %v2266, %v2268
    %v2270 = vrot.slane %v2263, %v2269
    %v2272 = vadd.f32 %v2159, %v2270
    %v2273 = vld [vmem:[%s760] sm:$0xff]
    %v2274 = vld [vmem:[%s760 + $0x8] sm:$0xff]
    %v2275 = vld [vmem:[%s760 + $0x10] sm:$0xff]
    %v2276 = vld [vmem:[%s760 + $0x18] sm:$0xff]
    %v2277 = vld [vmem:[%s760 + $0x20] sm:$0xff]
    %v2278 = vld [vmem:[%s760 + $0x28] sm:$0xff]
    %v2279 = vld [vmem:[%s760 + $0x30] sm:$0xff]
    %v2280 = vld [vmem:[%s760 + $0x38] sm:$0xff]
    %v2281 = vld [vmem:[%s760 + $0x40] sm:$0xff]
    %v2282 = vld [vmem:[%s760 + $0x48] sm:$0xff]
    %v2283 = vld [vmem:[%s760 + $0x50] sm:$0xff]
    %v2284 = vld [vmem:[%s760 + $0x58] sm:$0xff]
    %v2285 = vld [vmem:[%s760 + $0x60] sm:$0x3]
    %v2286 = vld [vmem:[%s760 + $0x68] sm:$0x3]
    %v2287 = vrot.slane %v1706, 5
    %v2288 = vsel %vm203, %v2287, 0
    %v2291 = vsel %vm207, %v2285, 0
    %v2294 = vsel %vm207, %v2286, 0
    %2296 = vmatprep.subr.mxu0 0.0
    %2297 = vmatpush1.msra.mxu0 0.0
    %2298 = vmatprep.subr.mxu0 0.0
    %2299 = vmatpush1.msra.mxu0 0.0
    %2300 = vmatprep.subr.mxu0 0.0
    %2301 = vmatpush1.msra.mxu0 0.0
    %2302 = vmatprep.subr.mxu0 0.0
    %2303 = vmatpush1.msra.mxu0 0.0
    %2304 = vmatprep.subr.mxu0 0.0
    %2305 = vmatpush1.msra.mxu0 0.0
    %2306 = vmatprep.subr.mxu0 0.0
    %2307 = vmatpush1.msra.mxu0 0.0
    %2308 = vmatprep.subr.mxu0 0.0
    %2309 = vmatpush1.msra.mxu0 0.0
    %2310 = vmatprep.subr.mxu0 0.0
    %2311 = vmatpush1.msra.mxu0 0.0
    %2312 = vmatprep.subr.mxu0 0.0
    %2313 = vmatpush1.msra.mxu0 0.0
    %2314 = vmatprep.subr.mxu0 %v2294
    %2315 = vmatpush1.msra.mxu0 %v2291
    %2316 = vmatprep.subr.mxu0 %v2284
    %2317 = vmatpush1.msra.mxu0 %v2283
    %2318 = vmatprep.subr.mxu0 %v2282
    %2319 = vmatpush1.msra.mxu0 %v2281
    %2320 = vmatprep.subr.mxu0 %v2280
    %2321 = vmatpush1.msra.mxu0 %v2279
    %2322 = vmatprep.subr.mxu0 %v2278
    %2323 = vmatpush1.msra.mxu0 %v2277
    %2324 = vmatprep.subr.mxu0 %v2276
    %2325 = vmatpush1.msra.mxu0 %v2275
    %2326 = vmatprep.subr.mxu0 %v2274
    %2327 = vmatpush1.msra.mxu0 %v2273
    %2328 = vmatprep.subr.mxu0 0.0
    %2329 = vmatpush2.msra.mxu0 0.0
    %2330 = vmatprep.subr.mxu0 0.0
    %2331 = vmatpush2.msra.mxu0 0.0
    %2332 = vmatprep.subr.mxu0 0.0
    %2333 = vmatpush2.msra.mxu0 0.0
    %2334 = vmatprep.subr.mxu0 0.0
    %2335 = vmatpush2.msra.mxu0 0.0
    %2336 = vmatprep.subr.mxu0 0.0
    %2337 = vmatpush2.msra.mxu0 0.0
    %2338 = vmatprep.subr.mxu0 0.0
    %2339 = vmatpush2.msra.mxu0 0.0
    %2340 = vmatprep.subr.mxu0 0.0
    %2341 = vmatpush2.msra.mxu0 0.0
    %2342 = vmatprep.subr.mxu0 0.0
    %2343 = vmatpush2.msra.mxu0 0.0
    %2344 = vmatprep.subr.mxu0 0.0
    %2345 = vmatpush2.msra.mxu0 0.0
    %2346 = vmatprep.subr.mxu0 0.0
    %2347 = vmatpush2.msra.mxu0 0.0
    %2348 = vmatprep.subr.mxu0 0.0
    %2349 = vmatpush2.msra.mxu0 0.0
    %2350 = vmatprep.subr.mxu0 0.0
    %2351 = vmatpush2.msra.mxu0 0.0
    %2352 = vmatprep.subr.mxu0 0.0
    %2353 = vmatpush2.msra.mxu0 0.0
    %2354 = vmatprep.subr.mxu0 0.0
    %2355 = vmatpush2.msra.mxu0 0.0
    %2356 = vmatprep.subr.mxu0 0.0
    %2357 = vmatpush2.msra.mxu0 0.0
    %2358 = vmatprep.subr.mxu0 0.0
    %2359 = vmatpush2.msra.mxu0 0.0
    %2360 = vmatprep.mubr.f32.mxu0 0.0
    %2361 = vmatmul.mubr.f32.gmra.mxu0 %v2288
    %v2362 = vpop.f32.mrf.mxu0
    %v2363 = vadd.f32 0.0, %v2362
    %v2364 = vpop.f32.mrf.mxu0
    %v2365 = vadd.f32 0.0, %v2364
    %2366 = vdwg.mxu0
    %v2369 = vcombine.low %v2363, %v2365
    %v2371 = vunpack.c.l.s4 1966171168
    %v2372 = vunpack.c.0.s8 %v2371
    %v2373 = vlaneseq
    %v2374 = vshrl.u32 %v2373, 7
    %v2375 = vsub.s32 %v2372, %v2374
    %v2376 = vrot.slane %v2369, %v2375
    %v2378 = vunpack.c.l.s4 1966171168
    %v2379 = vunpack.c.0.s8 %v2378
    %v2380 = vlaneseq
    %v2381 = vshrl.u32 %v2380, 7
    %v2382 = vsub.s32 %v2379, %v2381
    %v2383 = vrot.slane %v2376, %v2382
    %v2385 = vadd.f32 %v2272, %v2383
    %v2386 = vld [vmem:[%s874] sm:$0xff]
    %v2387 = vld [vmem:[%s874 + $0x8] sm:$0xff]
    %v2388 = vld [vmem:[%s874 + $0x10] sm:$0xff]
    %v2389 = vld [vmem:[%s874 + $0x18] sm:$0xff]
    %v2390 = vld [vmem:[%s874 + $0x20] sm:$0xff]
    %v2391 = vld [vmem:[%s874 + $0x28] sm:$0xff]
    %v2392 = vld [vmem:[%s874 + $0x30] sm:$0xff]
    %v2393 = vld [vmem:[%s874 + $0x38] sm:$0xff]
    %v2394 = vld [vmem:[%s874 + $0x40] sm:$0xff]
    %v2395 = vld [vmem:[%s874 + $0x48] sm:$0xff]
    %v2396 = vld [vmem:[%s874 + $0x50] sm:$0xff]
    %v2397 = vld [vmem:[%s874 + $0x58] sm:$0xff]
    %v2398 = vld [vmem:[%s874 + $0x60] sm:$0x3]
    %v2399 = vld [vmem:[%s874 + $0x68] sm:$0x3]
    %v2400 = vrot.slane %v1706, 6
    %v2401 = vsel %vm203, %v2400, 0
    %v2404 = vsel %vm207, %v2398, 0
    %v2407 = vsel %vm207, %v2399, 0
    %2409 = vmatprep.subr.mxu0 0.0
    %2410 = vmatpush1.msra.mxu0 0.0
    %2411 = vmatprep.subr.mxu0 0.0
    %2412 = vmatpush1.msra.mxu0 0.0
    %2413 = vmatprep.subr.mxu0 0.0
    %2414 = vmatpush1.msra.mxu0 0.0
    %2415 = vmatprep.subr.mxu0 0.0
    %2416 = vmatpush1.msra.mxu0 0.0
    %2417 = vmatprep.subr.mxu0 0.0
    %2418 = vmatpush1.msra.mxu0 0.0
    %2419 = vmatprep.subr.mxu0 0.0
    %2420 = vmatpush1.msra.mxu0 0.0
    %2421 = vmatprep.subr.mxu0 0.0
    %2422 = vmatpush1.msra.mxu0 0.0
    %2423 = vmatprep.subr.mxu0 0.0
    %2424 = vmatpush1.msra.mxu0 0.0
    %2425 = vmatprep.subr.mxu0 0.0
    %2426 = vmatpush1.msra.mxu0 0.0
    %2427 = vmatprep.subr.mxu0 %v2407
    %2428 = vmatpush1.msra.mxu0 %v2404
    %2429 = vmatprep.subr.mxu0 %v2397
    %2430 = vmatpush1.msra.mxu0 %v2396
    %2431 = vmatprep.subr.mxu0 %v2395
    %2432 = vmatpush1.msra.mxu0 %v2394
    %2433 = vmatprep.subr.mxu0 %v2393
    %2434 = vmatpush1.msra.mxu0 %v2392
    %2435 = vmatprep.subr.mxu0 %v2391
    %2436 = vmatpush1.msra.mxu0 %v2390
    %2437 = vmatprep.subr.mxu0 %v2389
    %2438 = vmatpush1.msra.mxu0 %v2388
    %2439 = vmatprep.subr.mxu0 %v2387
    %2440 = vmatpush1.msra.mxu0 %v2386
    %2441 = vmatprep.subr.mxu0 0.0
    %2442 = vmatpush2.msra.mxu0 0.0
    %2443 = vmatprep.subr.mxu0 0.0
    %2444 = vmatpush2.msra.mxu0 0.0
    %2445 = vmatprep.subr.mxu0 0.0
    %2446 = vmatpush2.msra.mxu0 0.0
    %2447 = vmatprep.subr.mxu0 0.0
    %2448 = vmatpush2.msra.mxu0 0.0
    %2449 = vmatprep.subr.mxu0 0.0
    %2450 = vmatpush2.msra.mxu0 0.0
    %2451 = vmatprep.subr.mxu0 0.0
    %2452 = vmatpush2.msra.mxu0 0.0
    %2453 = vmatprep.subr.mxu0 0.0
    %2454 = vmatpush2.msra.mxu0 0.0
    %2455 = vmatprep.subr.mxu0 0.0
    %2456 = vmatpush2.msra.mxu0 0.0
    %2457 = vmatprep.subr.mxu0 0.0
    %2458 = vmatpush2.msra.mxu0 0.0
    %2459 = vmatprep.subr.mxu0 0.0
    %2460 = vmatpush2.msra.mxu0 0.0
    %2461 = vmatprep.subr.mxu0 0.0
    %2462 = vmatpush2.msra.mxu0 0.0
    %2463 = vmatprep.subr.mxu0 0.0
    %2464 = vmatpush2.msra.mxu0 0.0
    %2465 = vmatprep.subr.mxu0 0.0
    %2466 = vmatpush2.msra.mxu0 0.0
    %2467 = vmatprep.subr.mxu0 0.0
    %2468 = vmatpush2.msra.mxu0 0.0
    %2469 = vmatprep.subr.mxu0 0.0
    %2470 = vmatpush2.msra.mxu0 0.0
    %2471 = vmatprep.subr.mxu0 0.0
    %2472 = vmatpush2.msra.mxu0 0.0
    %2473 = vmatprep.mubr.f32.mxu0 0.0
    %2474 = vmatmul.mubr.f32.gmra.mxu0 %v2401
    %v2475 = vpop.f32.mrf.mxu0
    %v2476 = vadd.f32 0.0, %v2475
    %v2477 = vpop.f32.mrf.mxu0
    %v2478 = vadd.f32 0.0, %v2477
    %2479 = vdwg.mxu0
    %v2482 = vcombine.low %v2476, %v2478
    %v2484 = vunpack.c.l.s4 1966171168
    %v2485 = vunpack.c.0.s8 %v2484
    %v2486 = vlaneseq
    %v2487 = vshrl.u32 %v2486, 7
    %v2488 = vsub.s32 %v2485, %v2487
    %v2489 = vrot.slane %v2482, %v2488
    %v2491 = vunpack.c.l.s4 1966171168
    %v2492 = vunpack.c.0.s8 %v2491
    %v2493 = vlaneseq
    %v2494 = vshrl.u32 %v2493, 7
    %v2495 = vsub.s32 %v2492, %v2494
    %v2496 = vrot.slane %v2489, %v2495
    %v2498 = vadd.f32 %v2385, %v2496
    %v2499 = vld [vmem:[%s988] sm:$0xff]
    %v2500 = vld [vmem:[%s988 + $0x8] sm:$0xff]
    %v2501 = vld [vmem:[%s988 + $0x10] sm:$0xff]
    %v2502 = vld [vmem:[%s988 + $0x18] sm:$0xff]
    %v2503 = vld [vmem:[%s988 + $0x20] sm:$0xff]
    %v2504 = vld [vmem:[%s988 + $0x28] sm:$0xff]
    %v2505 = vld [vmem:[%s988 + $0x30] sm:$0xff]
    %v2506 = vld [vmem:[%s988 + $0x38] sm:$0xff]
    %v2507 = vld [vmem:[%s988 + $0x40] sm:$0xff]
    %v2508 = vld [vmem:[%s988 + $0x48] sm:$0xff]
    %v2509 = vld [vmem:[%s988 + $0x50] sm:$0xff]
    %v2510 = vld [vmem:[%s988 + $0x58] sm:$0xff]
    %v2511 = vld [vmem:[%s988 + $0x60] sm:$0x3]
    %v2512 = vld [vmem:[%s988 + $0x68] sm:$0x3]
    %v2513 = vrot.slane %v1706, 7
    %v2514 = vsel %vm203, %v2513, 0
    %v2517 = vsel %vm207, %v2511, 0
    %v2520 = vsel %vm207, %v2512, 0
    %2522 = vmatprep.subr.mxu0 0.0
    %2523 = vmatpush1.msra.mxu0 0.0
    %2524 = vmatprep.subr.mxu0 0.0
    %2525 = vmatpush1.msra.mxu0 0.0
    %2526 = vmatprep.subr.mxu0 0.0
    %2527 = vmatpush1.msra.mxu0 0.0
    %2528 = vmatprep.subr.mxu0 0.0
    %2529 = vmatpush1.msra.mxu0 0.0
    %2530 = vmatprep.subr.mxu0 0.0
    %2531 = vmatpush1.msra.mxu0 0.0
    %2532 = vmatprep.subr.mxu0 0.0
    %2533 = vmatpush1.msra.mxu0 0.0
    %2534 = vmatprep.subr.mxu0 0.0
    %2535 = vmatpush1.msra.mxu0 0.0
    %2536 = vmatprep.subr.mxu0 0.0
    %2537 = vmatpush1.msra.mxu0 0.0
    %2538 = vmatprep.subr.mxu0 0.0
    %2539 = vmatpush1.msra.mxu0 0.0
    %2540 = vmatprep.subr.mxu0 %v2520
    %2541 = vmatpush1.msra.mxu0 %v2517
    %2542 = vmatprep.subr.mxu0 %v2510
    %2543 = vmatpush1.msra.mxu0 %v2509
    %2544 = vmatprep.subr.mxu0 %v2508
    %2545 = vmatpush1.msra.mxu0 %v2507
    %2546 = vmatprep.subr.mxu0 %v2506
    %2547 = vmatpush1.msra.mxu0 %v2505
    %2548 = vmatprep.subr.mxu0 %v2504
    %2549 = vmatpush1.msra.mxu0 %v2503
    %2550 = vmatprep.subr.mxu0 %v2502
    %2551 = vmatpush1.msra.mxu0 %v2501
    %2552 = vmatprep.subr.mxu0 %v2500
    %2553 = vmatpush1.msra.mxu0 %v2499
    %2554 = vmatprep.subr.mxu0 0.0
    %2555 = vmatpush2.msra.mxu0 0.0
    %2556 = vmatprep.subr.mxu0 0.0
    %2557 = vmatpush2.msra.mxu0 0.0
    %2558 = vmatprep.subr.mxu0 0.0
    %2559 = vmatpush2.msra.mxu0 0.0
    %2560 = vmatprep.subr.mxu0 0.0
    %2561 = vmatpush2.msra.mxu0 0.0
    %2562 = vmatprep.subr.mxu0 0.0
    %2563 = vmatpush2.msra.mxu0 0.0
    %2564 = vmatprep.subr.mxu0 0.0
    %2565 = vmatpush2.msra.mxu0 0.0
    %2566 = vmatprep.subr.mxu0 0.0
    %2567 = vmatpush2.msra.mxu0 0.0
    %2568 = vmatprep.subr.mxu0 0.0
    %2569 = vmatpush2.msra.mxu0 0.0
    %2570 = vmatprep.subr.mxu0 0.0
    %2571 = vmatpush2.msra.mxu0 0.0
    %2572 = vmatprep.subr.mxu0 0.0
    %2573 = vmatpush2.msra.mxu0 0.0
    %2574 = vmatprep.subr.mxu0 0.0
    %2575 = vmatpush2.msra.mxu0 0.0
    %2576 = vmatprep.subr.mxu0 0.0
    %2577 = vmatpush2.msra.mxu0 0.0
    %2578 = vmatprep.subr.mxu0 0.0
    %2579 = vmatpush2.msra.mxu0 0.0
    %2580 = vmatprep.subr.mxu0 0.0
    %2581 = vmatpush2.msra.mxu0 0.0
    %2582 = vmatprep.subr.mxu0 0.0
    %2583 = vmatpush2.msra.mxu0 0.0
    %2584 = vmatprep.subr.mxu0 0.0
    %2585 = vmatpush2.msra.mxu0 0.0
    %2586 = vmatprep.mubr.f32.mxu0 0.0
    %2587 = vmatmul.mubr.f32.gmra.mxu0 %v2514
    %v2588 = vpop.f32.mrf.mxu0
    %v2589 = vadd.f32 0.0, %v2588
    %v2590 = vpop.f32.mrf.mxu0
    %v2591 = vadd.f32 0.0, %v2590
    %2592 = vdwg.mxu0
    %v2595 = vcombine.low %v2589, %v2591
    %v2597 = vunpack.c.l.s4 1966171168
    %v2598 = vunpack.c.0.s8 %v2597
    %v2599 = vlaneseq
    %v2600 = vshrl.u32 %v2599, 7
    %v2601 = vsub.s32 %v2598, %v2600
    %v2602 = vrot.slane %v2595, %v2601
    %v2604 = vunpack.c.l.s4 1966171168
    %v2605 = vunpack.c.0.s8 %v2604
    %v2606 = vlaneseq
    %v2607 = vshrl.u32 %v2606, 7
    %v2608 = vsub.s32 %v2605, %v2607
    %v2609 = vrot.slane %v2602, %v2608
    %v2611 = vadd.f32 %v2498, %v2609
    %v2612 = vld [vmem:[%s1102] sm:$0xff]
    %v2613 = vld [vmem:[%s1102 + $0x8] sm:$0xff]
    %v2614 = vld [vmem:[%s1102 + $0x10] sm:$0xff]
    %v2615 = vld [vmem:[%s1102 + $0x18] sm:$0xff]
    %v2616 = vld [vmem:[%s1102 + $0x20] sm:$0xff]
    %v2617 = vld [vmem:[%s1102 + $0x28] sm:$0xff]
    %v2618 = vld [vmem:[%s1102 + $0x30] sm:$0xff]
    %v2619 = vld [vmem:[%s1102 + $0x38] sm:$0xff]
    %v2620 = vld [vmem:[%s1102 + $0x40] sm:$0xff]
    %v2621 = vld [vmem:[%s1102 + $0x48] sm:$0xff]
    %v2622 = vld [vmem:[%s1102 + $0x50] sm:$0xff]
    %v2623 = vld [vmem:[%s1102 + $0x58] sm:$0xff]
    %v2624 = vld [vmem:[%s1102 + $0x60] sm:$0x3]
    %v2625 = vld [vmem:[%s1102 + $0x68] sm:$0x3]
    %v2627 = vsel %vm203, %v1707, 0
    %v2630 = vsel %vm207, %v2624, 0
    %v2633 = vsel %vm207, %v2625, 0
    %2635 = vmatprep.subr.mxu0 0.0
    %2636 = vmatpush1.msra.mxu0 0.0
    %2637 = vmatprep.subr.mxu0 0.0
    %2638 = vmatpush1.msra.mxu0 0.0
    %2639 = vmatprep.subr.mxu0 0.0
    %2640 = vmatpush1.msra.mxu0 0.0
    %2641 = vmatprep.subr.mxu0 0.0
    %2642 = vmatpush1.msra.mxu0 0.0
    %2643 = vmatprep.subr.mxu0 0.0
    %2644 = vmatpush1.msra.mxu0 0.0
    %2645 = vmatprep.subr.mxu0 0.0
    %2646 = vmatpush1.msra.mxu0 0.0
    %2647 = vmatprep.subr.mxu0 0.0
    %2648 = vmatpush1.msra.mxu0 0.0
    %2649 = vmatprep.subr.mxu0 0.0
    %2650 = vmatpush1.msra.mxu0 0.0
    %2651 = vmatprep.subr.mxu0 0.0
    %2652 = vmatpush1.msra.mxu0 0.0
    %2653 = vmatprep.subr.mxu0 %v2633
    %2654 = vmatpush1.msra.mxu0 %v2630
    %2655 = vmatprep.subr.mxu0 %v2623
    %2656 = vmatpush1.msra.mxu0 %v2622
    %2657 = vmatprep.subr.mxu0 %v2621
    %2658 = vmatpush1.msra.mxu0 %v2620
    %2659 = vmatprep.subr.mxu0 %v2619
    %2660 = vmatpush1.msra.mxu0 %v2618
    %2661 = vmatprep.subr.mxu0 %v2617
    %2662 = vmatpush1.msra.mxu0 %v2616
    %2663 = vmatprep.subr.mxu0 %v2615
    %2664 = vmatpush1.msra.mxu0 %v2614
    %2665 = vmatprep.subr.mxu0 %v2613
    %2666 = vmatpush1.msra.mxu0 %v2612
    %2667 = vmatprep.subr.mxu0 0.0
    %2668 = vmatpush2.msra.mxu0 0.0
    %2669 = vmatprep.subr.mxu0 0.0
    %2670 = vmatpush2.msra.mxu0 0.0
    %2671 = vmatprep.subr.mxu0 0.0
    %2672 = vmatpush2.msra.mxu0 0.0
    %2673 = vmatprep.subr.mxu0 0.0
    %2674 = vmatpush2.msra.mxu0 0.0
    %2675 = vmatprep.subr.mxu0 0.0
    %2676 = vmatpush2.msra.mxu0 0.0
    %2677 = vmatprep.subr.mxu0 0.0
    %2678 = vmatpush2.msra.mxu0 0.0
    %2679 = vmatprep.subr.mxu0 0.0
    %2680 = vmatpush2.msra.mxu0 0.0
    %2681 = vmatprep.subr.mxu0 0.0
    %2682 = vmatpush2.msra.mxu0 0.0
    %2683 = vmatprep.subr.mxu0 0.0
    %2684 = vmatpush2.msra.mxu0 0.0
    %2685 = vmatprep.subr.mxu0 0.0
    %2686 = vmatpush2.msra.mxu0 0.0
    %2687 = vmatprep.subr.mxu0 0.0
    %2688 = vmatpush2.msra.mxu0 0.0
    %2689 = vmatprep.subr.mxu0 0.0
    %2690 = vmatpush2.msra.mxu0 0.0
    %2691 = vmatprep.subr.mxu0 0.0
    %2692 = vmatpush2.msra.mxu0 0.0
    %2693 = vmatprep.subr.mxu0 0.0
    %2694 = vmatpush2.msra.mxu0 0.0
    %2695 = vmatprep.subr.mxu0 0.0
    %2696 = vmatpush2.msra.mxu0 0.0
    %2697 = vmatprep.subr.mxu0 0.0
    %2698 = vmatpush2.msra.mxu0 0.0
    %2699 = vmatprep.mubr.f32.mxu0 0.0
    %2700 = vmatmul.mubr.f32.gmra.mxu0 %v2627
    %v2701 = vpop.f32.mrf.mxu0
    %v2702 = vadd.f32 0.0, %v2701
    %v2703 = vpop.f32.mrf.mxu0
    %v2704 = vadd.f32 0.0, %v2703
    %2705 = vdwg.mxu0
    %v2708 = vcombine.low %v2702, %v2704
    %v2710 = vunpack.c.l.s4 1966171168
    %v2711 = vunpack.c.0.s8 %v2710
    %v2712 = vlaneseq
    %v2713 = vshrl.u32 %v2712, 7
    %v2714 = vsub.s32 %v2711, %v2713
    %v2715 = vrot.slane %v2708, %v2714
    %v2717 = vunpack.c.l.s4 1966171168
    %v2718 = vunpack.c.0.s8 %v2717
    %v2719 = vlaneseq
    %v2720 = vshrl.u32 %v2719, 7
    %v2721 = vsub.s32 %v2718, %v2720
    %v2722 = vrot.slane %v2715, %v2721
    %v2724 = vadd.f32 %v2611, %v2722
    %v2725 = vld [vmem:[%s1216] sm:$0xff]
    %v2726 = vld [vmem:[%s1216 + $0x8] sm:$0xff]
    %v2727 = vld [vmem:[%s1216 + $0x10] sm:$0xff]
    %v2728 = vld [vmem:[%s1216 + $0x18] sm:$0xff]
    %v2729 = vld [vmem:[%s1216 + $0x20] sm:$0xff]
    %v2730 = vld [vmem:[%s1216 + $0x28] sm:$0xff]
    %v2731 = vld [vmem:[%s1216 + $0x30] sm:$0xff]
    %v2732 = vld [vmem:[%s1216 + $0x38] sm:$0xff]
    %v2733 = vld [vmem:[%s1216 + $0x40] sm:$0xff]
    %v2734 = vld [vmem:[%s1216 + $0x48] sm:$0xff]
    %v2735 = vld [vmem:[%s1216 + $0x50] sm:$0xff]
    %v2736 = vld [vmem:[%s1216 + $0x58] sm:$0xff]
    %v2737 = vld [vmem:[%s1216 + $0x60] sm:$0x3]
    %v2738 = vld [vmem:[%s1216 + $0x68] sm:$0x3]
    %v2739 = vrot.slane %v1707, 1
    %v2740 = vsel %vm203, %v2739, 0
    %v2743 = vsel %vm207, %v2737, 0
    %v2746 = vsel %vm207, %v2738, 0
    %2748 = vmatprep.subr.mxu0 0.0
    %2749 = vmatpush1.msra.mxu0 0.0
    %2750 = vmatprep.subr.mxu0 0.0
    %2751 = vmatpush1.msra.mxu0 0.0
    %2752 = vmatprep.subr.mxu0 0.0
    %2753 = vmatpush1.msra.mxu0 0.0
    %2754 = vmatprep.subr.mxu0 0.0
    %2755 = vmatpush1.msra.mxu0 0.0
    %2756 = vmatprep.subr.mxu0 0.0
    %2757 = vmatpush1.msra.mxu0 0.0
    %2758 = vmatprep.subr.mxu0 0.0
    %2759 = vmatpush1.msra.mxu0 0.0
    %2760 = vmatprep.subr.mxu0 0.0
    %2761 = vmatpush1.msra.mxu0 0.0
    %2762 = vmatprep.subr.mxu0 0.0
    %2763 = vmatpush1.msra.mxu0 0.0
    %2764 = vmatprep.subr.mxu0 0.0
    %2765 = vmatpush1.msra.mxu0 0.0
    %2766 = vmatprep.subr.mxu0 %v2746
    %2767 = vmatpush1.msra.mxu0 %v2743
    %2768 = vmatprep.subr.mxu0 %v2736
    %2769 = vmatpush1.msra.mxu0 %v2735
    %2770 = vmatprep.subr.mxu0 %v2734
    %2771 = vmatpush1.msra.mxu0 %v2733
    %2772 = vmatprep.subr.mxu0 %v2732
    %2773 = vmatpush1.msra.mxu0 %v2731
    %2774 = vmatprep.subr.mxu0 %v2730
    %2775 = vmatpush1.msra.mxu0 %v2729
    %2776 = vmatprep.subr.mxu0 %v2728
    %2777 = vmatpush1.msra.mxu0 %v2727
    %2778 = vmatprep.subr.mxu0 %v2726
    %2779 = vmatpush1.msra.mxu0 %v2725
    %2780 = vmatprep.subr.mxu0 0.0
    %2781 = vmatpush2.msra.mxu0 0.0
    %2782 = vmatprep.subr.mxu0 0.0
    %2783 = vmatpush2.msra.mxu0 0.0
    %2784 = vmatprep.subr.mxu0 0.0
    %2785 = vmatpush2.msra.mxu0 0.0
    %2786 = vmatprep.subr.mxu0 0.0
    %2787 = vmatpush2.msra.mxu0 0.0
    %2788 = vmatprep.subr.mxu0 0.0
    %2789 = vmatpush2.msra.mxu0 0.0
    %2790 = vmatprep.subr.mxu0 0.0
    %2791 = vmatpush2.msra.mxu0 0.0
    %2792 = vmatprep.subr.mxu0 0.0
    %2793 = vmatpush2.msra.mxu0 0.0
    %2794 = vmatprep.subr.mxu0 0.0
    %2795 = vmatpush2.msra.mxu0 0.0
    %2796 = vmatprep.subr.mxu0 0.0
    %2797 = vmatpush2.msra.mxu0 0.0
    %2798 = vmatprep.subr.mxu0 0.0
    %2799 = vmatpush2.msra.mxu0 0.0
    %2800 = vmatprep.subr.mxu0 0.0
    %2801 = vmatpush2.msra.mxu0 0.0
    %2802 = vmatprep.subr.mxu0 0.0
    %2803 = vmatpush2.msra.mxu0 0.0
    %2804 = vmatprep.subr.mxu0 0.0
    %2805 = vmatpush2.msra.mxu0 0.0
    %2806 = vmatprep.subr.mxu0 0.0
    %2807 = vmatpush2.msra.mxu0 0.0
    %2808 = vmatprep.subr.mxu0 0.0
    %2809 = vmatpush2.msra.mxu0 0.0
    %2810 = vmatprep.subr.mxu0 0.0
    %2811 = vmatpush2.msra.mxu0 0.0
    %2812 = vmatprep.mubr.f32.mxu0 0.0
    %2813 = vmatmul.mubr.f32.gmra.mxu0 %v2740
    %v2814 = vpop.f32.mrf.mxu0
    %v2815 = vadd.f32 0.0, %v2814
    %v2816 = vpop.f32.mrf.mxu0
    %v2817 = vadd.f32 0.0, %v2816
    %2818 = vdwg.mxu0
    %v2821 = vcombine.low %v2815, %v2817
    %v2823 = vunpack.c.l.s4 1966171168
    %v2824 = vunpack.c.0.s8 %v2823
    %v2825 = vlaneseq
    %v2826 = vshrl.u32 %v2825, 7
    %v2827 = vsub.s32 %v2824, %v2826
    %v2828 = vrot.slane %v2821, %v2827
    %v2830 = vunpack.c.l.s4 1966171168
    %v2831 = vunpack.c.0.s8 %v2830
    %v2832 = vlaneseq
    %v2833 = vshrl.u32 %v2832, 7
    %v2834 = vsub.s32 %v2831, %v2833
    %v2835 = vrot.slane %v2828, %v2834
    %v2837 = vadd.f32 %v2724, %v2835
    %v2838 = vld [vmem:[%s1330] sm:$0xff]
    %v2839 = vld [vmem:[%s1330 + $0x8] sm:$0xff]
    %v2840 = vld [vmem:[%s1330 + $0x10] sm:$0xff]
    %v2841 = vld [vmem:[%s1330 + $0x18] sm:$0xff]
    %v2842 = vld [vmem:[%s1330 + $0x20] sm:$0xff]
    %v2843 = vld [vmem:[%s1330 + $0x28] sm:$0xff]
    %v2844 = vld [vmem:[%s1330 + $0x30] sm:$0xff]
    %v2845 = vld [vmem:[%s1330 + $0x38] sm:$0xff]
    %v2846 = vld [vmem:[%s1330 + $0x40] sm:$0xff]
    %v2847 = vld [vmem:[%s1330 + $0x48] sm:$0xff]
    %v2848 = vld [vmem:[%s1330 + $0x50] sm:$0xff]
    %v2849 = vld [vmem:[%s1330 + $0x58] sm:$0xff]
    %v2850 = vld [vmem:[%s1330 + $0x60] sm:$0x3]
    %v2851 = vld [vmem:[%s1330 + $0x68] sm:$0x3]
    %v2852 = vrot.slane %v1707, 2
    %v2853 = vsel %vm203, %v2852, 0
    %v2856 = vsel %vm207, %v2850, 0
    %v2859 = vsel %vm207, %v2851, 0
    %2861 = vmatprep.subr.mxu0 0.0
    %2862 = vmatpush1.msra.mxu0 0.0
    %2863 = vmatprep.subr.mxu0 0.0
    %2864 = vmatpush1.msra.mxu0 0.0
    %2865 = vmatprep.subr.mxu0 0.0
    %2866 = vmatpush1.msra.mxu0 0.0
    %2867 = vmatprep.subr.mxu0 0.0
    %2868 = vmatpush1.msra.mxu0 0.0
    %2869 = vmatprep.subr.mxu0 0.0
    %2870 = vmatpush1.msra.mxu0 0.0
    %2871 = vmatprep.subr.mxu0 0.0
    %2872 = vmatpush1.msra.mxu0 0.0
    %2873 = vmatprep.subr.mxu0 0.0
    %2874 = vmatpush1.msra.mxu0 0.0
    %2875 = vmatprep.subr.mxu0 0.0
    %2876 = vmatpush1.msra.mxu0 0.0
    %2877 = vmatprep.subr.mxu0 0.0
    %2878 = vmatpush1.msra.mxu0 0.0
    %2879 = vmatprep.subr.mxu0 %v2859
    %2880 = vmatpush1.msra.mxu0 %v2856
    %2881 = vmatprep.subr.mxu0 %v2849
    %2882 = vmatpush1.msra.mxu0 %v2848
    %2883 = vmatprep.subr.mxu0 %v2847
    %2884 = vmatpush1.msra.mxu0 %v2846
    %2885 = vmatprep.subr.mxu0 %v2845
    %2886 = vmatpush1.msra.mxu0 %v2844
    %2887 = vmatprep.subr.mxu0 %v2843
    %2888 = vmatpush1.msra.mxu0 %v2842
    %2889 = vmatprep.subr.mxu0 %v2841
    %2890 = vmatpush1.msra.mxu0 %v2840
    %2891 = vmatprep.subr.mxu0 %v2839
    %2892 = vmatpush1.msra.mxu0 %v2838
    %2893 = vmatprep.subr.mxu0 0.0
    %2894 = vmatpush2.msra.mxu0 0.0
    %2895 = vmatprep.subr.mxu0 0.0
    %2896 = vmatpush2.msra.mxu0 0.0
    %2897 = vmatprep.subr.mxu0 0.0
    %2898 = vmatpush2.msra.mxu0 0.0
    %2899 = vmatprep.subr.mxu0 0.0
    %2900 = vmatpush2.msra.mxu0 0.0
    %2901 = vmatprep.subr.mxu0 0.0
    %2902 = vmatpush2.msra.mxu0 0.0
    %2903 = vmatprep.subr.mxu0 0.0
    %2904 = vmatpush2.msra.mxu0 0.0
    %2905 = vmatprep.subr.mxu0 0.0
    %2906 = vmatpush2.msra.mxu0 0.0
    %2907 = vmatprep.subr.mxu0 0.0
    %2908 = vmatpush2.msra.mxu0 0.0
    %2909 = vmatprep.subr.mxu0 0.0
    %2910 = vmatpush2.msra.mxu0 0.0
    %2911 = vmatprep.subr.mxu0 0.0
    %2912 = vmatpush2.msra.mxu0 0.0
    %2913 = vmatprep.subr.mxu0 0.0
    %2914 = vmatpush2.msra.mxu0 0.0
    %2915 = vmatprep.subr.mxu0 0.0
    %2916 = vmatpush2.msra.mxu0 0.0
    %2917 = vmatprep.subr.mxu0 0.0
    %2918 = vmatpush2.msra.mxu0 0.0
    %2919 = vmatprep.subr.mxu0 0.0
    %2920 = vmatpush2.msra.mxu0 0.0
    %2921 = vmatprep.subr.mxu0 0.0
    %2922 = vmatpush2.msra.mxu0 0.0
    %2923 = vmatprep.subr.mxu0 0.0
    %2924 = vmatpush2.msra.mxu0 0.0
    %2925 = vmatprep.mubr.f32.mxu0 0.0
    %2926 = vmatmul.mubr.f32.gmra.mxu0 %v2853
    %v2927 = vpop.f32.mrf.mxu0
    %v2928 = vadd.f32 0.0, %v2927
    %v2929 = vpop.f32.mrf.mxu0
    %v2930 = vadd.f32 0.0, %v2929
    %2931 = vdwg.mxu0
    %v2934 = vcombine.low %v2928, %v2930
    %v2936 = vunpack.c.l.s4 1966171168
    %v2937 = vunpack.c.0.s8 %v2936
    %v2938 = vlaneseq
    %v2939 = vshrl.u32 %v2938, 7
    %v2940 = vsub.s32 %v2937, %v2939
    %v2941 = vrot.slane %v2934, %v2940
    %v2943 = vunpack.c.l.s4 1966171168
    %v2944 = vunpack.c.0.s8 %v2943
    %v2945 = vlaneseq
    %v2946 = vshrl.u32 %v2945, 7
    %v2947 = vsub.s32 %v2944, %v2946
    %v2948 = vrot.slane %v2941, %v2947
    %v2950 = vadd.f32 %v2837, %v2948
    %v2951 = vld [vmem:[%s1444] sm:$0xff]
    %v2952 = vld [vmem:[%s1444 + $0x8] sm:$0xff]
    %v2953 = vld [vmem:[%s1444 + $0x10] sm:$0xff]
    %v2954 = vld [vmem:[%s1444 + $0x18] sm:$0xff]
    %v2955 = vld [vmem:[%s1444 + $0x20] sm:$0xff]
    %v2956 = vld [vmem:[%s1444 + $0x28] sm:$0xff]
    %v2957 = vld [vmem:[%s1444 + $0x30] sm:$0xff]
    %v2958 = vld [vmem:[%s1444 + $0x38] sm:$0xff]
    %v2959 = vld [vmem:[%s1444 + $0x40] sm:$0xff]
    %v2960 = vld [vmem:[%s1444 + $0x48] sm:$0xff]
    %v2961 = vld [vmem:[%s1444 + $0x50] sm:$0xff]
    %v2962 = vld [vmem:[%s1444 + $0x58] sm:$0xff]
    %v2963 = vld [vmem:[%s1444 + $0x60] sm:$0x3]
    %v2964 = vld [vmem:[%s1444 + $0x68] sm:$0x3]
    %v2965 = vrot.slane %v1707, 3
    %v2966 = vsel %vm203, %v2965, 0
    %v2969 = vsel %vm207, %v2963, 0
    %v2972 = vsel %vm207, %v2964, 0
    %2974 = vmatprep.subr.mxu0 0.0
    %2975 = vmatpush1.msra.mxu0 0.0
    %2976 = vmatprep.subr.mxu0 0.0
    %2977 = vmatpush1.msra.mxu0 0.0
    %2978 = vmatprep.subr.mxu0 0.0
    %2979 = vmatpush1.msra.mxu0 0.0
    %2980 = vmatprep.subr.mxu0 0.0
    %2981 = vmatpush1.msra.mxu0 0.0
    %2982 = vmatprep.subr.mxu0 0.0
    %2983 = vmatpush1.msra.mxu0 0.0
    %2984 = vmatprep.subr.mxu0 0.0
    %2985 = vmatpush1.msra.mxu0 0.0
    %2986 = vmatprep.subr.mxu0 0.0
    %2987 = vmatpush1.msra.mxu0 0.0
    %2988 = vmatprep.subr.mxu0 0.0
    %2989 = vmatpush1.msra.mxu0 0.0
    %2990 = vmatprep.subr.mxu0 0.0
    %2991 = vmatpush1.msra.mxu0 0.0
    %2992 = vmatprep.subr.mxu0 %v2972
    %2993 = vmatpush1.msra.mxu0 %v2969
    %2994 = vmatprep.subr.mxu0 %v2962
    %2995 = vmatpush1.msra.mxu0 %v2961
    %2996 = vmatprep.subr.mxu0 %v2960
    %2997 = vmatpush1.msra.mxu0 %v2959
    %2998 = vmatprep.subr.mxu0 %v2958
    %2999 = vmatpush1.msra.mxu0 %v2957
    %3000 = vmatprep.subr.mxu0 %v2956
    %3001 = vmatpush1.msra.mxu0 %v2955
    %3002 = vmatprep.subr.mxu0 %v2954
    %3003 = vmatpush1.msra.mxu0 %v2953
    %3004 = vmatprep.subr.mxu0 %v2952
    %3005 = vmatpush1.msra.mxu0 %v2951
    %3006 = vmatprep.subr.mxu0 0.0
    %3007 = vmatpush2.msra.mxu0 0.0
    %3008 = vmatprep.subr.mxu0 0.0
    %3009 = vmatpush2.msra.mxu0 0.0
    %3010 = vmatprep.subr.mxu0 0.0
    %3011 = vmatpush2.msra.mxu0 0.0
    %3012 = vmatprep.subr.mxu0 0.0
    %3013 = vmatpush2.msra.mxu0 0.0
    %3014 = vmatprep.subr.mxu0 0.0
    %3015 = vmatpush2.msra.mxu0 0.0
    %3016 = vmatprep.subr.mxu0 0.0
    %3017 = vmatpush2.msra.mxu0 0.0
    %3018 = vmatprep.subr.mxu0 0.0
    %3019 = vmatpush2.msra.mxu0 0.0
    %3020 = vmatprep.subr.mxu0 0.0
    %3021 = vmatpush2.msra.mxu0 0.0
    %3022 = vmatprep.subr.mxu0 0.0
    %3023 = vmatpush2.msra.mxu0 0.0
    %3024 = vmatprep.subr.mxu0 0.0
    %3025 = vmatpush2.msra.mxu0 0.0
    %3026 = vmatprep.subr.mxu0 0.0
    %3027 = vmatpush2.msra.mxu0 0.0
    %3028 = vmatprep.subr.mxu0 0.0
    %3029 = vmatpush2.msra.mxu0 0.0
    %3030 = vmatprep.subr.mxu0 0.0
    %3031 = vmatpush2.msra.mxu0 0.0
    %3032 = vmatprep.subr.mxu0 0.0
    %3033 = vmatpush2.msra.mxu0 0.0
    %3034 = vmatprep.subr.mxu0 0.0
    %3035 = vmatpush2.msra.mxu0 0.0
    %3036 = vmatprep.subr.mxu0 0.0
    %3037 = vmatpush2.msra.mxu0 0.0
    %3038 = vmatprep.mubr.f32.mxu0 0.0
    %3039 = vmatmul.mubr.f32.gmra.mxu0 %v2966
    %v3040 = vpop.f32.mrf.mxu0
    %v3041 = vadd.f32 0.0, %v3040
    %v3042 = vpop.f32.mrf.mxu0
    %v3043 = vadd.f32 0.0, %v3042
    %3044 = vdwg.mxu0
    %v3047 = vcombine.low %v3041, %v3043
    %v3049 = vunpack.c.l.s4 1966171168
    %v3050 = vunpack.c.0.s8 %v3049
    %v3051 = vlaneseq
    %v3052 = vshrl.u32 %v3051, 7
    %v3053 = vsub.s32 %v3050, %v3052
    %v3054 = vrot.slane %v3047, %v3053
    %v3056 = vunpack.c.l.s4 1966171168
    %v3057 = vunpack.c.0.s8 %v3056
    %v3058 = vlaneseq
    %v3059 = vshrl.u32 %v3058, 7
    %v3060 = vsub.s32 %v3057, %v3059
    %v3061 = vrot.slane %v3054, %v3060
    %v3063 = vadd.f32 %v2950, %v3061
    %3064 = vst.msk [vmem:[#allocation2 + $0x1] sm:$0x1] %vm1558, %v3063
    %v3066 = vlaneseq
    %v3067 = vshrl.u32 %v3066, 7
    %v3068 = vsub.s32 0, %v3067
    %v3069 = vrot.slane %v3063, %v3068
    %v3070 = vlaneseq
    %v3071 = vshrl.u32 %v3070, 7
    %v3072 = vsub.s32 1, %v3071
    %v3073 = vrot.slane %v3063, %v3072
    %3074 = vrot.lane.b32.xlu0 %v3069, 28
    %v3075 = vpop.permute.xlu0 %3074
    %3076 = vrot.lane.b32.xlu0 %v3073, 28
    %v3077 = vpop.permute.xlu0 %3076
    %v3078 = vsel %vm182, %v3075, %v3077
    %3080 = vst.msk [vmem:[#allocation4 + $0x1] sm:$0x1] %vm1558, %v3078
    %v3081 = vld [vmem:[#allocation2] sm:$0x3]
    %v3082 = vld [vmem:[#allocation4] sm:$0x3]
    %v3083 = vld [vmem:[%s7] sm:$0x3]
    %v3084 = vmul.f32 %v3082, %v3083
    %v3085 = vadd.f32 %v3081, %v3084
    %v3086 = vld [vmem:[%s5] sm:$0xff]
    %v3087 = vld [vmem:[%s5 + $0x8] sm:$0xff]
    %v3088 = vld [vmem:[%s5 + $0x10] sm:$0xff]
    %v3089 = vld [vmem:[%s5 + $0x18] sm:$0xff]
    %v3090 = vld [vmem:[%s5 + $0x20] sm:$0xff]
    %v3091 = vld [vmem:[%s5 + $0x28] sm:$0xff]
    %v3092 = vld [vmem:[%s5 + $0x30] sm:$0xff]
    %v3093 = vld [vmem:[%s5 + $0x38] sm:$0xff]
    %v3094 = vld [vmem:[%s5 + $0x40] sm:$0xff]
    %v3095 = vld [vmem:[%s5 + $0x48] sm:$0xff]
    %v3096 = vld [vmem:[%s5 + $0x50] sm:$0xff]
    %v3097 = vld [vmem:[%s5 + $0x58] sm:$0xff]
    %v3098 = vld [vmem:[%s5 + $0x60] sm:$0xff]
    %v3099 = vld [vmem:[%s5 + $0x68] sm:$0xff]
    %v3100 = vld [vmem:[%s5 + $0x70] sm:$0xff]
    %v3101 = vld [vmem:[%s5 + $0x78] sm:$0xff]
    %v3102 = vld [vmem:[%s5 + $0x80] sm:$0xff]
    %v3103 = vld [vmem:[%s5 + $0x88] sm:$0xff]
    %v3104 = vld [vmem:[%s5 + $0x90] sm:$0xff]
    %v3105 = vld [vmem:[%s5 + $0x98] sm:$0xff]
    %v3106 = vld [vmem:[%s5 + $0xa0] sm:$0xff]
    %v3107 = vld [vmem:[%s5 + $0xa8] sm:$0xff]
    %v3108 = vld [vmem:[%s5 + $0xb0] sm:$0xff]
    %v3109 = vld [vmem:[%s5 + $0xb8] sm:$0xff]
    %v3110 = vld [vmem:[%s5 + $0xc0] sm:$0xff]
    %v3111 = vld [vmem:[%s5 + $0xc8] sm:$0xff]
    %v3112 = vld [vmem:[%s5 + $0xd0] sm:$0xff]
    %v3113 = vld [vmem:[%s5 + $0xd8] sm:$0xff]
    %v3114 = vld [vmem:[%s5 + $0xe0] sm:$0xff]
    %v3115 = vld [vmem:[%s5 + $0xe8] sm:$0xff]
    %v3116 = vld [vmem:[%s5 + $0xf0] sm:$0xff]
    %v3117 = vld [vmem:[%s5 + $0xf8] sm:$0xff]
    %v3118 = vld [vmem:[%s5 + $0x100] sm:$0xff]
    %v3119 = vld [vmem:[%s5 + $0x108] sm:$0xff]
    %v3120 = vld [vmem:[%s5 + $0x110] sm:$0xff]
    %v3121 = vld [vmem:[%s5 + $0x118] sm:$0xff]
    %v3122 = vld [vmem:[%s5 + $0x120] sm:$0xff]
    %v3123 = vld [vmem:[%s5 + $0x128] sm:$0xff]
    %v3124 = vld [vmem:[%s5 + $0x130] sm:$0xff]
    %v3125 = vld [vmem:[%s5 + $0x138] sm:$0xff]
    %v3126 = vld [vmem:[%s5 + $0x140] sm:$0xff]
    %v3127 = vld [vmem:[%s5 + $0x148] sm:$0xff]
    %v3128 = vld [vmem:[%s5 + $0x150] sm:$0xff]
    %v3129 = vld [vmem:[%s5 + $0x158] sm:$0xff]
    %v3130 = vld [vmem:[%s5 + $0x160] sm:$0xff]
    %v3131 = vld [vmem:[%s5 + $0x168] sm:$0xff]
    %v3132 = vld [vmem:[%s5 + $0x170] sm:$0xff]
    %v3133 = vld [vmem:[%s5 + $0x178] sm:$0xff]
    %v3134 = vld [vmem:[%s5 + $0x180] sm:$0xff]
    %v3135 = vld [vmem:[%s5 + $0x188] sm:$0xff]
    %v3136 = vld [vmem:[%s5 + $0x190] sm:$0xff]
    %v3137 = vld [vmem:[%s5 + $0x198] sm:$0xff]
    %v3138 = vld [vmem:[%s5 + $0x1a0] sm:$0xff]
    %v3139 = vld [vmem:[%s5 + $0x1a8] sm:$0xff]
    %v3140 = vld [vmem:[%s5 + $0x1b0] sm:$0xff]
    %v3141 = vld [vmem:[%s5 + $0x1b8] sm:$0xff]
    %v3142 = vld [vmem:[%s5 + $0x1c0] sm:$0xff]
    %v3143 = vld [vmem:[%s5 + $0x1c8] sm:$0xff]
    %v3144 = vld [vmem:[%s5 + $0x1d0] sm:$0xff]
    %v3145 = vld [vmem:[%s5 + $0x1d8] sm:$0xff]
    %v3146 = vld [vmem:[%s5 + $0x1e0] sm:$0xff]
    %v3147 = vld [vmem:[%s5 + $0x1e8] sm:$0xff]
    %v3148 = vld [vmem:[%s5 + $0x1f0] sm:$0xff]
    %v3149 = vld [vmem:[%s5 + $0x1f8] sm:$0xff]
    %v3150 = vld [vmem:[%s5 + $0x200] sm:$0xff]
    %v3151 = vld [vmem:[%s5 + $0x208] sm:$0xff]
    %v3152 = vld [vmem:[%s5 + $0x210] sm:$0xff]
    %v3153 = vld [vmem:[%s5 + $0x218] sm:$0xff]
    %v3154 = vld [vmem:[%s5 + $0x220] sm:$0xff]
    %v3155 = vld [vmem:[%s5 + $0x228] sm:$0xff]
    %v3156 = vld [vmem:[%s5 + $0x230] sm:$0xff]
    %v3157 = vld [vmem:[%s5 + $0x238] sm:$0xff]
    %v3158 = vld [vmem:[%s5 + $0x240] sm:$0xff]
    %v3159 = vld [vmem:[%s5 + $0x248] sm:$0xff]
    %v3160 = vld [vmem:[%s5 + $0x250] sm:$0xff]
    %v3161 = vld [vmem:[%s5 + $0x258] sm:$0xff]
    %v3162 = vld [vmem:[%s5 + $0x260] sm:$0xff]
    %v3163 = vld [vmem:[%s5 + $0x268] sm:$0xff]
    %v3164 = vld [vmem:[%s5 + $0x270] sm:$0xff]
    %v3165 = vld [vmem:[%s5 + $0x278] sm:$0xff]
    %v3166 = vld [vmem:[%s5 + $0x280] sm:$0xff]
    %v3167 = vld [vmem:[%s5 + $0x288] sm:$0xff]
    %v3168 = vld [vmem:[%s5 + $0x290] sm:$0xff]
    %v3169 = vld [vmem:[%s5 + $0x298] sm:$0xff]
    %v3170 = vld [vmem:[%s5 + $0x2a0] sm:$0xff]
    %v3171 = vld [vmem:[%s5 + $0x2a8] sm:$0xff]
    %v3172 = vld [vmem:[%s5 + $0x2b0] sm:$0xff]
    %v3173 = vld [vmem:[%s5 + $0x2b8] sm:$0xff]
    %v3174 = vld [vmem:[%s5 + $0x2c0] sm:$0xff]
    %v3175 = vld [vmem:[%s5 + $0x2c8] sm:$0xff]
    %v3176 = vld [vmem:[%s5 + $0x2d0] sm:$0xff]
    %v3177 = vld [vmem:[%s5 + $0x2d8] sm:$0xff]
    %v3178 = vld [vmem:[%s5 + $0x2e0] sm:$0xff]
    %v3179 = vld [vmem:[%s5 + $0x2e8] sm:$0xff]
    %v3180 = vld [vmem:[%s5 + $0x2f0] sm:$0xff]
    %v3181 = vld [vmem:[%s5 + $0x2f8] sm:$0xff]
    %v3182 = vld [vmem:[%s5 + $0x300] sm:$0xff]
    %v3183 = vld [vmem:[%s5 + $0x308] sm:$0xff]
    %v3184 = vld [vmem:[%s5 + $0x310] sm:$0xff]
    %v3185 = vld [vmem:[%s5 + $0x318] sm:$0xff]
    %v3186 = vld [vmem:[%s5 + $0x320] sm:$0xff]
    %v3187 = vld [vmem:[%s5 + $0x328] sm:$0xff]
    %v3188 = vld [vmem:[%s5 + $0x330] sm:$0xff]
    %v3189 = vld [vmem:[%s5 + $0x338] sm:$0xff]
    %v3190 = vld [vmem:[%s5 + $0x340] sm:$0xff]
    %v3191 = vld [vmem:[%s5 + $0x348] sm:$0xff]
    %v3192 = vld [vmem:[%s5 + $0x350] sm:$0xff]
    %v3193 = vld [vmem:[%s5 + $0x358] sm:$0xff]
    %v3194 = vld [vmem:[%s5 + $0x360] sm:$0xff]
    %v3195 = vld [vmem:[%s5 + $0x368] sm:$0xff]
    %v3196 = vld [vmem:[%s5 + $0x370] sm:$0xff]
    %v3197 = vld [vmem:[%s5 + $0x378] sm:$0xff]
    %v3198 = vld [vmem:[%s5 + $0x380] sm:$0xff]
    %v3199 = vld [vmem:[%s5 + $0x388] sm:$0xff]
    %v3200 = vld [vmem:[%s5 + $0x390] sm:$0xff]
    %v3201 = vld [vmem:[%s5 + $0x398] sm:$0xff]
    %v3202 = vld [vmem:[%s5 + $0x3a0] sm:$0xff]
    %v3203 = vld [vmem:[%s5 + $0x3a8] sm:$0xff]
    %v3204 = vld [vmem:[%s5 + $0x3b0] sm:$0xff]
    %v3205 = vld [vmem:[%s5 + $0x3b8] sm:$0xff]
    %v3206 = vld [vmem:[%s5 + $0x3c0] sm:$0xf]
    %v3207 = vld [vmem:[%s5 + $0x3c8] sm:$0xf]
    %v3208 = vld [vmem:[%s5 + $0x3d0] sm:$0xf]
    %v3209 = vld [vmem:[%s5 + $0x3d8] sm:$0xf]
    %v3210 = vld [vmem:[%s5 + $0x3e0] sm:$0xf]
    %v3211 = vld [vmem:[%s5 + $0x3e8] sm:$0xf]
    %v3212 = vld [vmem:[%s5 + $0x3f0] sm:$0xf]
    %v3213 = vld [vmem:[%s5 + $0x3f8] sm:$0xf]
    %v3214 = vld [vmem:[%s5 + $0x400] sm:$0xf]
    %v3215 = vld [vmem:[%s5 + $0x408] sm:$0xf]
    %v3216 = vld [vmem:[%s6] sm:$0xff]
    %v3217 = vld [vmem:[%s6 + $0x8] sm:$0x3]
    %v3220 = vlaneseq
    %v3221 = vshrl.u32 %v3220, 7
    %v3222 = vsub.s32 0, %v3221
    %v3223 = vrot.slane %v3216, %v3222
    %v3224 = vlaneseq
    %v3225 = vshrl.u32 %v3224, 7
    %v3226 = vsub.s32 1, %v3225
    %v3227 = vrot.slane %v3216, %v3226
    %v3228 = vlaneseq
    %v3229 = vshrl.u32 %v3228, 7
    %v3230 = vsub.s32 2, %v3229
    %v3231 = vrot.slane %v3216, %v3230
    %v3232 = vlaneseq
    %v3233 = vshrl.u32 %v3232, 7
    %v3234 = vsub.s32 3, %v3233
    %v3235 = vrot.slane %v3216, %v3234
    %v3236 = vlaneseq
    %v3237 = vshrl.u32 %v3236, 7
    %v3238 = vsub.s32 4, %v3237
    %v3239 = vrot.slane %v3216, %v3238
    %v3240 = vlaneseq
    %v3241 = vshrl.u32 %v3240, 7
    %v3242 = vsub.s32 5, %v3241
    %v3243 = vrot.slane %v3216, %v3242
    %v3244 = vlaneseq
    %v3245 = vshrl.u32 %v3244, 7
    %v3246 = vsub.s32 6, %v3245
    %v3247 = vrot.slane %v3216, %v3246
    %v3248 = vlaneseq
    %v3249 = vshrl.u32 %v3248, 7
    %v3250 = vsub.s32 7, %v3249
    %v3251 = vrot.slane %v3216, %v3250
    %v3252 = vlaneseq
    %v3253 = vshrl.u32 %v3252, 7
    %v3254 = vsub.s32 0, %v3253
    %v3255 = vrot.slane %v3217, %v3254
    %v3256 = vlaneseq
    %v3257 = vshrl.u32 %v3256, 7
    %v3258 = vsub.s32 1, %v3257
    %v3259 = vrot.slane %v3217, %v3258
    %vm3270 = vcmask 818176
    %v3272 = vsel %vm3270, %v3085, 0
    %vm3274 = vcmask 1043456
    %v3276 = vsel %vm3274, %v3206, 0
    %v3279 = vsel %vm3274, %v3207, 0
    %v3282 = vsel %vm3274, %v3208, 0
    %v3285 = vsel %vm3274, %v3209, 0
    %v3288 = vsel %vm3274, %v3210, 0
    %v3291 = vsel %vm3274, %v3211, 0
    %v3294 = vsel %vm3274, %v3212, 0
    %v3297 = vsel %vm3274, %v3213, 0
    %v3300 = vsel %vm3274, %v3214, 0
    %v3303 = vsel %vm3274, %v3215, 0
    %3305 = vmatprep.subr.mxu0 0.0
    %3306 = vmatpush1.msra.mxu0 0.0
    %3307 = vmatprep.subr.mxu0 0.0
    %3308 = vmatpush1.msra.mxu0 0.0
    %3309 = vmatprep.subr.mxu0 0.0
    %3310 = vmatpush1.msra.mxu0 0.0
    %3311 = vmatprep.subr.mxu0 %v3279
    %3312 = vmatpush1.msra.mxu0 %v3276
    %3313 = vmatprep.subr.mxu0 %v3197
    %3314 = vmatpush1.msra.mxu0 %v3196
    %3315 = vmatprep.subr.mxu0 %v3187
    %3316 = vmatpush1.msra.mxu0 %v3186
    %3317 = vmatprep.subr.mxu0 %v3177
    %3318 = vmatpush1.msra.mxu0 %v3176
    %3319 = vmatprep.subr.mxu0 %v3167
    %3320 = vmatpush1.msra.mxu0 %v3166
    %3321 = vmatprep.subr.mxu0 %v3157
    %3322 = vmatpush1.msra.mxu0 %v3156
    %3323 = vmatprep.subr.mxu0 %v3147
    %3324 = vmatpush1.msra.mxu0 %v3146
    %3325 = vmatprep.subr.mxu0 %v3137
    %3326 = vmatpush1.msra.mxu0 %v3136
    %3327 = vmatprep.subr.mxu0 %v3127
    %3328 = vmatpush1.msra.mxu0 %v3126
    %3329 = vmatprep.subr.mxu0 %v3117
    %3330 = vmatpush1.msra.mxu0 %v3116
    %3331 = vmatprep.subr.mxu0 %v3107
    %3332 = vmatpush1.msra.mxu0 %v3106
    %3333 = vmatprep.subr.mxu0 %v3097
    %3334 = vmatpush1.msra.mxu0 %v3096
    %3335 = vmatprep.subr.mxu0 %v3087
    %3336 = vmatpush1.msra.mxu0 %v3086
    %3337 = vmatprep.subr.mxu0 0.0
    %3338 = vmatpush2.msra.mxu0 0.0
    %3339 = vmatprep.subr.mxu0 0.0
    %3340 = vmatpush2.msra.mxu0 0.0
    %3341 = vmatprep.subr.mxu0 0.0
    %3342 = vmatpush2.msra.mxu0 0.0
    %3343 = vmatprep.subr.mxu0 0.0
    %3344 = vmatpush2.msra.mxu0 0.0
    %3345 = vmatprep.subr.mxu0 0.0
    %3346 = vmatpush2.msra.mxu0 0.0
    %3347 = vmatprep.subr.mxu0 0.0
    %3348 = vmatpush2.msra.mxu0 0.0
    %3349 = vmatprep.subr.mxu0 0.0
    %3350 = vmatpush2.msra.mxu0 0.0
    %3351 = vmatprep.subr.mxu0 0.0
    %3352 = vmatpush2.msra.mxu0 0.0
    %3353 = vmatprep.subr.mxu0 0.0
    %3354 = vmatpush2.msra.mxu0 0.0
    %3355 = vmatprep.subr.mxu0 0.0
    %3356 = vmatpush2.msra.mxu0 0.0
    %3357 = vmatprep.subr.mxu0 0.0
    %3358 = vmatpush2.msra.mxu0 0.0
    %3359 = vmatprep.subr.mxu0 0.0
    %3360 = vmatpush2.msra.mxu0 0.0
    %3361 = vmatprep.subr.mxu0 0.0
    %3362 = vmatpush2.msra.mxu0 0.0
    %3363 = vmatprep.subr.mxu0 0.0
    %3364 = vmatpush2.msra.mxu0 0.0
    %3365 = vmatprep.subr.mxu0 0.0
    %3366 = vmatpush2.msra.mxu0 0.0
    %3367 = vmatprep.subr.mxu0 0.0
    %3368 = vmatpush2.msra.mxu0 0.0
    %3369 = vmatprep.mubr.f32.mxu0 0.0
    %3370 = vmatmul.mubr.f32.gmra.mxu0 %v3272
    %v3371 = vpop.f32.mrf.mxu0
    %v3372 = vadd.f32 %v3223, %v3371
    %v3373 = vpop.f32.mrf.mxu0
    %v3374 = vadd.f32 %v3227, %v3373
    %3375 = vdwg.mxu0
    %3376 = vmatprep.subr.mxu0 0.0
    %3377 = vmatpush1.msra.mxu0 0.0
    %3378 = vmatprep.subr.mxu0 0.0
    %3379 = vmatpush1.msra.mxu0 0.0
    %3380 = vmatprep.subr.mxu0 0.0
    %3381 = vmatpush1.msra.mxu0 0.0
    %3382 = vmatprep.subr.mxu0 %v3285
    %3383 = vmatpush1.msra.mxu0 %v3282
    %3384 = vmatprep.subr.mxu0 %v3199
    %3385 = vmatpush1.msra.mxu0 %v3198
    %3386 = vmatprep.subr.mxu0 %v3189
    %3387 = vmatpush1.msra.mxu0 %v3188
    %3388 = vmatprep.subr.mxu0 %v3179
    %3389 = vmatpush1.msra.mxu0 %v3178
    %3390 = vmatprep.subr.mxu0 %v3169
    %3391 = vmatpush1.msra.mxu0 %v3168
    %3392 = vmatprep.subr.mxu0 %v3159
    %3393 = vmatpush1.msra.mxu0 %v3158
    %3394 = vmatprep.subr.mxu0 %v3149
    %3395 = vmatpush1.msra.mxu0 %v3148
    %3396 = vmatprep.subr.mxu0 %v3139
    %3397 = vmatpush1.msra.mxu0 %v3138
    %3398 = vmatprep.subr.mxu0 %v3129
    %3399 = vmatpush1.msra.mxu0 %v3128
    %3400 = vmatprep.subr.mxu0 %v3119
    %3401 = vmatpush1.msra.mxu0 %v3118
    %3402 = vmatprep.subr.mxu0 %v3109
    %3403 = vmatpush1.msra.mxu0 %v3108
    %3404 = vmatprep.subr.mxu0 %v3099
    %3405 = vmatpush1.msra.mxu0 %v3098
    %3406 = vmatprep.subr.mxu0 %v3089
    %3407 = vmatpush1.msra.mxu0 %v3088
    %3408 = vmatprep.subr.mxu0 0.0
    %3409 = vmatpush2.msra.mxu0 0.0
    %3410 = vmatprep.subr.mxu0 0.0
    %3411 = vmatpush2.msra.mxu0 0.0
    %3412 = vmatprep.subr.mxu0 0.0
    %3413 = vmatpush2.msra.mxu0 0.0
    %3414 = vmatprep.subr.mxu0 0.0
    %3415 = vmatpush2.msra.mxu0 0.0
    %3416 = vmatprep.subr.mxu0 0.0
    %3417 = vmatpush2.msra.mxu0 0.0
    %3418 = vmatprep.subr.mxu0 0.0
    %3419 = vmatpush2.msra.mxu0 0.0
    %3420 = vmatprep.subr.mxu0 0.0
    %3421 = vmatpush2.msra.mxu0 0.0
    %3422 = vmatprep.subr.mxu0 0.0
    %3423 = vmatpush2.msra.mxu0 0.0
    %3424 = vmatprep.subr.mxu0 0.0
    %3425 = vmatpush2.msra.mxu0 0.0
    %3426 = vmatprep.subr.mxu0 0.0
    %3427 = vmatpush2.msra.mxu0 0.0
    %3428 = vmatprep.subr.mxu0 0.0
    %3429 = vmatpush2.msra.mxu0 0.0
    %3430 = vmatprep.subr.mxu0 0.0
    %3431 = vmatpush2.msra.mxu0 0.0
    %3432 = vmatprep.subr.mxu0 0.0
    %3433 = vmatpush2.msra.mxu0 0.0
    %3434 = vmatprep.subr.mxu0 0.0
    %3435 = vmatpush2.msra.mxu0 0.0
    %3436 = vmatprep.subr.mxu0 0.0
    %3437 = vmatpush2.msra.mxu0 0.0
    %3438 = vmatprep.subr.mxu0 0.0
    %3439 = vmatpush2.msra.mxu0 0.0
    %3440 = vmatprep.mubr.f32.mxu0 0.0
    %3441 = vmatmul.mubr.f32.gmra.mxu0 %v3272
    %v3442 = vpop.f32.mrf.mxu0
    %v3443 = vadd.f32 %v3231, %v3442
    %v3444 = vpop.f32.mrf.mxu0
    %v3445 = vadd.f32 %v3235, %v3444
    %3446 = vdwg.mxu0
    %3447 = vmatprep.subr.mxu0 0.0
    %3448 = vmatpush1.msra.mxu0 0.0
    %3449 = vmatprep.subr.mxu0 0.0
    %3450 = vmatpush1.msra.mxu0 0.0
    %3451 = vmatprep.subr.mxu0 0.0
    %3452 = vmatpush1.msra.mxu0 0.0
    %3453 = vmatprep.subr.mxu0 %v3291
    %3454 = vmatpush1.msra.mxu0 %v3288
    %3455 = vmatprep.subr.mxu0 %v3201
    %3456 = vmatpush1.msra.mxu0 %v3200
    %3457 = vmatprep.subr.mxu0 %v3191
    %3458 = vmatpush1.msra.mxu0 %v3190
    %3459 = vmatprep.subr.mxu0 %v3181
    %3460 = vmatpush1.msra.mxu0 %v3180
    %3461 = vmatprep.subr.mxu0 %v3171
    %3462 = vmatpush1.msra.mxu0 %v3170
    %3463 = vmatprep.subr.mxu0 %v3161
    %3464 = vmatpush1.msra.mxu0 %v3160
    %3465 = vmatprep.subr.mxu0 %v3151
    %3466 = vmatpush1.msra.mxu0 %v3150
    %3467 = vmatprep.subr.mxu0 %v3141
    %3468 = vmatpush1.msra.mxu0 %v3140
    %3469 = vmatprep.subr.mxu0 %v3131
    %3470 = vmatpush1.msra.mxu0 %v3130
    %3471 = vmatprep.subr.mxu0 %v3121
    %3472 = vmatpush1.msra.mxu0 %v3120
    %3473 = vmatprep.subr.mxu0 %v3111
    %3474 = vmatpush1.msra.mxu0 %v3110
    %3475 = vmatprep.subr.mxu0 %v3101
    %3476 = vmatpush1.msra.mxu0 %v3100
    %3477 = vmatprep.subr.mxu0 %v3091
    %3478 = vmatpush1.msra.mxu0 %v3090
    %3479 = vmatprep.subr.mxu0 0.0
    %3480 = vmatpush2.msra.mxu0 0.0
    %3481 = vmatprep.subr.mxu0 0.0
    %3482 = vmatpush2.msra.mxu0 0.0
    %3483 = vmatprep.subr.mxu0 0.0
    %3484 = vmatpush2.msra.mxu0 0.0
    %3485 = vmatprep.subr.mxu0 0.0
    %3486 = vmatpush2.msra.mxu0 0.0
    %3487 = vmatprep.subr.mxu0 0.0
    %3488 = vmatpush2.msra.mxu0 0.0
    %3489 = vmatprep.subr.mxu0 0.0
    %3490 = vmatpush2.msra.mxu0 0.0
    %3491 = vmatprep.subr.mxu0 0.0
    %3492 = vmatpush2.msra.mxu0 0.0
    %3493 = vmatprep.subr.mxu0 0.0
    %3494 = vmatpush2.msra.mxu0 0.0
    %3495 = vmatprep.subr.mxu0 0.0
    %3496 = vmatpush2.msra.mxu0 0.0
    %3497 = vmatprep.subr.mxu0 0.0
    %3498 = vmatpush2.msra.mxu0 0.0
    %3499 = vmatprep.subr.mxu0 0.0
    %3500 = vmatpush2.msra.mxu0 0.0
    %3501 = vmatprep.subr.mxu0 0.0
    %3502 = vmatpush2.msra.mxu0 0.0
    %3503 = vmatprep.subr.mxu0 0.0
    %3504 = vmatpush2.msra.mxu0 0.0
    %3505 = vmatprep.subr.mxu0 0.0
    %3506 = vmatpush2.msra.mxu0 0.0
    %3507 = vmatprep.subr.mxu0 0.0
    %3508 = vmatpush2.msra.mxu0 0.0
    %3509 = vmatprep.subr.mxu0 0.0
    %3510 = vmatpush2.msra.mxu0 0.0
    %3511 = vmatprep.mubr.f32.mxu0 0.0
    %3512 = vmatmul.mubr.f32.gmra.mxu0 %v3272
    %v3513 = vpop.f32.mrf.mxu0
    %v3514 = vadd.f32 %v3239, %v3513
    %v3515 = vpop.f32.mrf.mxu0
    %v3516 = vadd.f32 %v3243, %v3515
    %3517 = vdwg.mxu0
    %3518 = vmatprep.subr.mxu0 0.0
    %3519 = vmatpush1.msra.mxu0 0.0
    %3520 = vmatprep.subr.mxu0 0.0
    %3521 = vmatpush1.msra.mxu0 0.0
    %3522 = vmatprep.subr.mxu0 0.0
    %3523 = vmatpush1.msra.mxu0 0.0
    %3524 = vmatprep.subr.mxu0 %v3297
    %3525 = vmatpush1.msra.mxu0 %v3294
    %3526 = vmatprep.subr.mxu0 %v3203
    %3527 = vmatpush1.msra.mxu0 %v3202
    %3528 = vmatprep.subr.mxu0 %v3193
    %3529 = vmatpush1.msra.mxu0 %v3192
    %3530 = vmatprep.subr.mxu0 %v3183
    %3531 = vmatpush1.msra.mxu0 %v3182
    %3532 = vmatprep.subr.mxu0 %v3173
    %3533 = vmatpush1.msra.mxu0 %v3172
    %3534 = vmatprep.subr.mxu0 %v3163
    %3535 = vmatpush1.msra.mxu0 %v3162
    %3536 = vmatprep.subr.mxu0 %v3153
    %3537 = vmatpush1.msra.mxu0 %v3152
    %3538 = vmatprep.subr.mxu0 %v3143
    %3539 = vmatpush1.msra.mxu0 %v3142
    %3540 = vmatprep.subr.mxu0 %v3133
    %3541 = vmatpush1.msra.mxu0 %v3132
    %3542 = vmatprep.subr.mxu0 %v3123
    %3543 = vmatpush1.msra.mxu0 %v3122
    %3544 = vmatprep.subr.mxu0 %v3113
    %3545 = vmatpush1.msra.mxu0 %v3112
    %3546 = vmatprep.subr.mxu0 %v3103
    %3547 = vmatpush1.msra.mxu0 %v3102
    %3548 = vmatprep.subr.mxu0 %v3093
    %3549 = vmatpush1.msra.mxu0 %v3092
    %3550 = vmatprep.subr.mxu0 0.0
    %3551 = vmatpush2.msra.mxu0 0.0
    %3552 = vmatprep.subr.mxu0 0.0
    %3553 = vmatpush2.msra.mxu0 0.0
    %3554 = vmatprep.subr.mxu0 0.0
    %3555 = vmatpush2.msra.mxu0 0.0
    %3556 = vmatprep.subr.mxu0 0.0
    %3557 = vmatpush2.msra.mxu0 0.0
    %3558 = vmatprep.subr.mxu0 0.0
    %3559 = vmatpush2.msra.mxu0 0.0
    %3560 = vmatprep.subr.mxu0 0.0
    %3561 = vmatpush2.msra.mxu0 0.0
    %3562 = vmatprep.subr.mxu0 0.0
    %3563 = vmatpush2.msra.mxu0 0.0
    %3564 = vmatprep.subr.mxu0 0.0
    %3565 = vmatpush2.msra.mxu0 0.0
    %3566 = vmatprep.subr.mxu0 0.0
    %3567 = vmatpush2.msra.mxu0 0.0
    %3568 = vmatprep.subr.mxu0 0.0
    %3569 = vmatpush2.msra.mxu0 0.0
    %3570 = vmatprep.subr.mxu0 0.0
    %3571 = vmatpush2.msra.mxu0 0.0
    %3572 = vmatprep.subr.mxu0 0.0
    %3573 = vmatpush2.msra.mxu0 0.0
    %3574 = vmatprep.subr.mxu0 0.0
    %3575 = vmatpush2.msra.mxu0 0.0
    %3576 = vmatprep.subr.mxu0 0.0
    %3577 = vmatpush2.msra.mxu0 0.0
    %3578 = vmatprep.subr.mxu0 0.0
    %3579 = vmatpush2.msra.mxu0 0.0
    %3580 = vmatprep.subr.mxu0 0.0
    %3581 = vmatpush2.msra.mxu0 0.0
    %3582 = vmatprep.mubr.f32.mxu0 0.0
    %3583 = vmatmul.mubr.f32.gmra.mxu0 %v3272
    %v3584 = vpop.f32.mrf.mxu0
    %v3585 = vadd.f32 %v3247, %v3584
    %v3586 = vpop.f32.mrf.mxu0
    %v3587 = vadd.f32 %v3251, %v3586
    %3588 = vdwg.mxu0
    %3589 = vmatprep.subr.mxu0 0.0
    %3590 = vmatpush1.msra.mxu0 0.0
    %3591 = vmatprep.subr.mxu0 0.0
    %3592 = vmatpush1.msra.mxu0 0.0
    %3593 = vmatprep.subr.mxu0 0.0
    %3594 = vmatpush1.msra.mxu0 0.0
    %3595 = vmatprep.subr.mxu0 %v3303
    %3596 = vmatpush1.msra.mxu0 %v3300
    %3597 = vmatprep.subr.mxu0 %v3205
    %3598 = vmatpush1.msra.mxu0 %v3204
    %3599 = vmatprep.subr.mxu0 %v3195
    %3600 = vmatpush1.msra.mxu0 %v3194
    %3601 = vmatprep.subr.mxu0 %v3185
    %3602 = vmatpush1.msra.mxu0 %v3184
    %3603 = vmatprep.subr.mxu0 %v3175
    %3604 = vmatpush1.msra.mxu0 %v3174
    %3605 = vmatprep.subr.mxu0 %v3165
    %3606 = vmatpush1.msra.mxu0 %v3164
    %3607 = vmatprep.subr.mxu0 %v3155
    %3608 = vmatpush1.msra.mxu0 %v3154
    %3609 = vmatprep.subr.mxu0 %v3145
    %3610 = vmatpush1.msra.mxu0 %v3144
    %3611 = vmatprep.subr.mxu0 %v3135
    %3612 = vmatpush1.msra.mxu0 %v3134
    %3613 = vmatprep.subr.mxu0 %v3125
    %3614 = vmatpush1.msra.mxu0 %v3124
    %3615 = vmatprep.subr.mxu0 %v3115
    %3616 = vmatpush1.msra.mxu0 %v3114
    %3617 = vmatprep.subr.mxu0 %v3105
    %3618 = vmatpush1.msra.mxu0 %v3104
    %3619 = vmatprep.subr.mxu0 %v3095
    %3620 = vmatpush1.msra.mxu0 %v3094
    %3621 = vmatprep.subr.mxu0 0.0
    %3622 = vmatpush2.msra.mxu0 0.0
    %3623 = vmatprep.subr.mxu0 0.0
    %3624 = vmatpush2.msra.mxu0 0.0
    %3625 = vmatprep.subr.mxu0 0.0
    %3626 = vmatpush2.msra.mxu0 0.0
    %3627 = vmatprep.subr.mxu0 0.0
    %3628 = vmatpush2.msra.mxu0 0.0
    %3629 = vmatprep.subr.mxu0 0.0
    %3630 = vmatpush2.msra.mxu0 0.0
    %3631 = vmatprep.subr.mxu0 0.0
    %3632 = vmatpush2.msra.mxu0 0.0
    %3633 = vmatprep.subr.mxu0 0.0
    %3634 = vmatpush2.msra.mxu0 0.0
    %3635 = vmatprep.subr.mxu0 0.0
    %3636 = vmatpush2.msra.mxu0 0.0
    %3637 = vmatprep.subr.mxu0 0.0
    %3638 = vmatpush2.msra.mxu0 0.0
    %3639 = vmatprep.subr.mxu0 0.0
    %3640 = vmatpush2.msra.mxu0 0.0
    %3641 = vmatprep.subr.mxu0 0.0
    %3642 = vmatpush2.msra.mxu0 0.0
    %3643 = vmatprep.subr.mxu0 0.0
    %3644 = vmatpush2.msra.mxu0 0.0
    %3645 = vmatprep.subr.mxu0 0.0
    %3646 = vmatpush2.msra.mxu0 0.0
    %3647 = vmatprep.subr.mxu0 0.0
    %3648 = vmatpush2.msra.mxu0 0.0
    %3649 = vmatprep.subr.mxu0 0.0
    %3650 = vmatpush2.msra.mxu0 0.0
    %3651 = vmatprep.subr.mxu0 0.0
    %3652 = vmatpush2.msra.mxu0 0.0
    %3653 = vmatprep.mubr.f32.mxu0 0.0
    %3654 = vmatmul.mubr.f32.gmra.mxu0 %v3272
    %v3655 = vpop.f32.mrf.mxu0
    %v3656 = vadd.f32 %v3255, %v3655
    %v3657 = vpop.f32.mrf.mxu0
    %v3658 = vadd.f32 %v3259, %v3657
    %3659 = vdwg.mxu0
    %v3670 = vcombine.low %v3372, %v3374
    %v3671 = vcombine.low %v3443, %v3445
    %v3673 = vunpack.c.l.s4 1983009808
    %v3674 = vunpack.c.0.s8 %v3673
    %v3675 = vlaneseq
    %v3676 = vshrl.u32 %v3675, 7
    %v3677 = vsub.s32 %v3674, %v3676
    %v3678 = vrot.slane %v3670, %v3677
    %v3680 = vunpack.c.l.s4 1983009808
    %v3681 = vunpack.c.0.s8 %v3680
    %v3682 = vlaneseq
    %v3683 = vshrl.u32 %v3682, 7
    %v3684 = vsub.s32 %v3681, %v3683
    %v3685 = vrot.slane %v3671, %v3684
    %v3686 = vcombine.low %v3678, %v3685
    %v3687 = vcombine.low %v3514, %v3516
    %v3688 = vcombine.low %v3585, %v3587
    %v3690 = vunpack.c.l.s4 1983009808
    %v3691 = vunpack.c.0.s8 %v3690
    %v3692 = vlaneseq
    %v3693 = vshrl.u32 %v3692, 7
    %v3694 = vsub.s32 %v3691, %v3693
    %v3695 = vrot.slane %v3687, %v3694
    %v3697 = vunpack.c.l.s4 1983009808
    %v3698 = vunpack.c.0.s8 %v3697
    %v3699 = vlaneseq
    %v3700 = vshrl.u32 %v3699, 7
    %v3701 = vsub.s32 %v3698, %v3700
    %v3702 = vrot.slane %v3688, %v3701
    %v3703 = vcombine.low %v3695, %v3702
    %v3704 = vcombine.low %v3656, %v3658
    %v3706 = vunpack.c.l.s4 1983009808
    %v3707 = vunpack.c.0.s8 %v3706
    %v3708 = vlaneseq
    %v3709 = vshrl.u32 %v3708, 7
    %v3710 = vsub.s32 %v3707, %v3709
    %v3711 = vrot.slane %v3704, %v3710
    %3715 = vst [vmem:[%s8] sm:$0xff] %v3686
    %3716 = vst [vmem:[%s8 + $0x8] sm:$0xff] %v3703
    %vm3717 = vcmask 388098
    %vm3718 = vmor %vm3717, %vm207
    %3719 = vst.msk [vmem:[%s8 + $0x10] sm:$0xf] %vm3718, %v3711
    // Predicated region
    $region34: #{vae2_forward.1} parent=1 // pred_check
      _
    $region35: #{vae2_forward.1} parent=1 // pred_check_branch
      %3721 = sbr.rel (0) target = $region37
    $region36: #{vae2_forward.1} parent=1 // pred_region
      _
    $region37: #{vae2_forward.1} parent=1 // pred_fallthru
      _
    // Predicated region
    $region38: #{vae2_forward.1} parent=1 // pred_check
      _
    $region39: #{vae2_forward.1} parent=1 // pred_check_branch
      %3723 = sbr.rel (0) target = $region41
    $region40: #{vae2_forward.1} parent=1 // pred_region
      %s3725 = ssub.s32 32, 32
      %3726 = vsyncadd [#allocation3], %s3725
      %s3728 = sshll.u32 [#allocation2], 4
      %s3729 = int_to_ptr.vmem [resolvable:$true] %s3728
      %3731 = dma.vmem_to_hbm [thread:$0]  %s3729, 32, %s9, [#allocation3]
    $region41: #{vae2_forward.1} parent=1 // pred_fallthru
      _
    // Predicated region
    $region42: #{vae2_forward.1} parent=1 // pred_check
      _
    $region43: #{vae2_forward.1} parent=1 // pred_check_branch
      %3733 = sbr.rel (0) target = $region45
    $region44: #{vae2_forward.1} parent=1 // pred_region
      %s3735 = ssub.s32 32, 32
      %3736 = vsyncadd [#allocation5], %s3735
      %s3738 = sshll.u32 [#allocation4], 4
      %s3739 = int_to_ptr.vmem [resolvable:$true] %s3738
      %3741 = dma.vmem_to_hbm [thread:$0]  %s3739, 32, %s10, [#allocation5]
    $region45: #{vae2_forward.1} parent=1 // pred_fallthru
      _
    // Predicated region
    $region46: #{vae2_forward.1} parent=1 // pred_check
      _
    $region47: #{vae2_forward.1} parent=1 // pred_check_branch
      %3743 = sbr.rel (0) target = $region49
    $region48: #{vae2_forward.1} parent=1 // pred_region
      _
    $region49: #{vae2_forward.1} parent=1 // pred_fallthru
      _
    // Predicated region
    $region50: #{vae2_forward.1} parent=1 // pred_check
      _
    $region51: #{vae2_forward.1} parent=1 // pred_check_branch
      %3745 = sbr.rel (0) target = $region53
    $region52: #{vae2_forward.1} parent=1 // pred_region
      %3746 = dma.done [#allocation3], 32
    $region53: #{vae2_forward.1} parent=1 // pred_fallthru
      _
    // Predicated region
    $region54: #{vae2_forward.1} parent=1 // pred_check
      _
    $region55: #{vae2_forward.1} parent=1 // pred_check_branch
      %3748 = sbr.rel (0) target = $region57
    $region56: #{vae2_forward.1} parent=1 // pred_region
      %3749 = dma.done [#allocation5], 32
    $region57: #{vae2_forward.1} parent=1 // pred_fallthru
      _
    %3750 = vsyncpa [#allocation3], 1
    %3751 = vsyncpa [#allocation5], 1

</llo_original>
